<compile_context>
chip_gen: v7x
topology: tpu7x:2x2x1
jax: 0.10.0
libtpu: 0.0.40
codegen_flags: <defaults>
</compile_context>

<pallas_src>
import functools
import math

import jax
import jax.numpy as jnp
from jax.experimental import pallas as pl
from jax.experimental.pallas import tpu as pltpu

NEG_MAX = float(jnp.finfo(jnp.float32).max)


def _layernorm(v, g, b, eps=1e-5):
    mu = jnp.mean(v, axis=-1, keepdims=True)
    var = jnp.mean(jnp.square(v - mu), axis=-1, keepdims=True)
    return (v - mu) * jax.lax.rsqrt(var + eps) * g + b


def _leaky_relu(v, slope=0.01):
    return jnp.where(v >= 0, v, slope * v)


def _mm(a, b):
    """bf16-operand matmul with f32 accumulation (mirrors the in-kernel MXU path)."""
    return jnp.dot(a.astype(jnp.bfloat16), b.astype(jnp.bfloat16),
                   preferred_element_type=jnp.float32)


# -----------------------------------------------------------------------------
# Kernel: one grid step = one batch element x one query-row tile of TI rows.
# -----------------------------------------------------------------------------
def _gt_kernel(H, D, TI,
               x_ref, edge_ref, mask_ref,
               ln_n_g, ln_n_b, ln_e_g, ln_e_b,
               w_q, w_k, w_e, w_v, b_v, w_no, b_no, w_eo, b_eo,
               ffx_g, ffx_b, ffx_w1, ffx_b1, ffx_w2, ffx_b2,
               ffe_g, ffe_b, ffe_w1, ffe_b1, ffe_w2, ffe_b2,
               x_out_ref, edge_out_ref):
    f32 = jnp.float32
    bf16 = jnp.bfloat16

    x_full = x_ref[0]                              # (N, nh)  all rows (keys / values)
    e_tile = edge_ref[0]                           # (TI, N, eh) query-row slab of edges
    mask_j = mask_ref[0] > 0                       # (1, N)   mask over j (keys)

    N, nh = x_full.shape
    eh = e_tile.shape[-1]
    row0 = pl.multiple_of(pl.program_id(1) * TI, TI)

    # residual node rows for this tile
    x_tile = x_ref[0, pl.ds(row0, TI), :]          # (TI, nh)

    # ---- pre-norms (norm_node / norm_edge), f32 ----
    xn_full = _layernorm(x_full, ln_n_g[...], ln_n_b[...])
    xn_tile = _layernorm(x_tile, ln_n_g[...], ln_n_b[...])
    en = _layernorm(e_tile, ln_e_g[...], ln_e_b[...])

    xn_full_bf = xn_full.astype(bf16)
    xn_tile_bf = xn_tile.astype(bf16)
    en_flat_bf = en.reshape(TI * N, eh).astype(bf16)

    # ---- projections (MXU, bf16 operands, f32 accumulation) ----
    q = jnp.dot(xn_tile_bf, w_q[...], preferred_element_type=f32)            # (TI, HD)
    k = jnp.dot(xn_full_bf, w_k[...], preferred_element_type=f32)            # (N, HD)
    v = jnp.dot(xn_full_bf, w_v[...], preferred_element_type=f32) + b_v[...]  # (N, HD)
    v_bf = v.astype(bf16)

    w_e_v = w_e[...]       # (eh, HD) bf16
    w_no_v = w_no[...]     # (HD, nh) bf16
    w_eo_v = w_eo[...]     # (HD, eh) bf16

    inv_sqrt_d = jnp.float32(1.0 / math.sqrt(D))

    # output accumulators (biases folded in up front)
    node_acc = jnp.zeros((TI, nh), f32) + b_no[...]          # (TI, nh)
    edge_acc = jnp.zeros((TI * N, eh), f32) + b_eo[...]      # (TI*N, eh)

    # static head loop: only one (TI, N, D) tensor is alive per iteration and the
    # per-head results are accumulated directly through w_no / w_eo row blocks
    # (no (h d) concatenation, no (N^2, H*D) raw_cat).
    for h in range(H):
        lo = h * D
        q_h = q[:, lo:lo + D]                      # (TI, D) f32
        k_h = k[:, lo:lo + D]                      # (N, D)  f32
        v_h = v_bf[:, lo:lo + D]                   # (N, D)  bf16

        # raw_att = q*k + e for this head
        e_h = jnp.dot(en_flat_bf, w_e_v[:, lo:lo + D],
                      preferred_element_type=f32)                       # (TI*N, D)
        raw_h = q_h[:, None, :] * k_h[None, :, :] + e_h.reshape(TI, N, D)

        # attention over j (softmax along torch dim=-2), f32 throughout
        att = jnp.sum(raw_h, axis=-1) * inv_sqrt_d                      # (TI, N)
        att = jnp.where(mask_j, att, -NEG_MAX)
        att = att - jnp.max(att, axis=-1, keepdims=True)
        p = jnp.exp(att)
        att = p * pl.reciprocal(jnp.sum(p, axis=-1, keepdims=True), approx=True)

        # node path: (att @ v_h) @ w_no[h*D:(h+1)*D]
        ctx = jnp.dot(att.astype(bf16), v_h, preferred_element_type=f32)    # (TI, D)
        node_acc = node_acc + jnp.dot(ctx.astype(bf16), w_no_v[lo:lo + D, :],
                                      preferred_element_type=f32)

        # edge path: raw_h @ w_eo[h*D:(h+1)*D]
        edge_acc = edge_acc + jnp.dot(raw_h.reshape(TI * N, D).astype(bf16),
                                      w_eo_v[lo:lo + D, :],
                                      preferred_element_type=f32)

    # ---- residuals (GateResidue, gate=False) ----
    x1 = node_acc + x_tile                                   # (TI, nh)
    e1 = edge_acc + e_tile.reshape(TI * N, eh)                # (TI*N, eh)

    # ---- node GateNormFeedForward ----
    xn2 = _layernorm(x1, ffx_g[...], ffx_b[...])
    h1 = _leaky_relu(jnp.dot(xn2.astype(bf16), ffx_w1[...],
                             preferred_element_type=f32) + ffx_b1[...])
    h2 = _leaky_relu(jnp.dot(h1.astype(bf16), ffx_w2[...],
                             preferred_element_type=f32) + ffx_b2[...])
    x_out_ref[0] = (h2 + x1).astype(x_out_ref.dtype)

    # ---- edge GateNormFeedForward ----
    en2 = _layernorm(e1, ffe_g[...], ffe_b[...])
    g1 = _leaky_relu(jnp.dot(en2.astype(bf16), ffe_w1[...],
                             preferred_element_type=f32) + ffe_b1[...])
    g2 = _leaky_relu(jnp.dot(g1.astype(bf16), ffe_w2[...],
                             preferred_element_type=f32) + ffe_b2[...])
    edge_out_ref[0] = (g2 + e1).reshape(TI, N, eh).astype(edge_out_ref.dtype)


# -----------------------------------------------------------------------------
# Wrapper
# -----------------------------------------------------------------------------
def gnn_block_pallas(params, x, edge, mask, n_head, *, tile_rows=None,
                     vmem_limit_mb=48):
    B, N, nh = x.shape
    eh = edge.shape[-1]
    HD = params["w_qk"].shape[1] // 2
    D = HD // n_head
    assert n_head * D == HD

    # pick a query-row tile size: largest divisor of N whose per-step edge slab
    # (plus ~10x f32-sized intermediates) fits comfortably in scoped VMEM.
    if tile_rows is None:
        tile_rows = N
        budget = (vmem_limit_mb * 1024 * 1024) // 3
        est = lambda ti: ti * N * max(eh, HD) * 4 * 10
        while tile_rows > 8 and N % (tile_rows // 2) == 0 and est(tile_rows) > budget:
            tile_rows //= 2
    TI = tile_rows
    assert N % TI == 0, "N must be divisible by tile_rows"

    f32, bf = jnp.float32, jnp.bfloat16
    w_qk = params["w_qk"]
    weights = (
        params["ln_n_g"].astype(f32), params["ln_n_b"].astype(f32),
        params["ln_e_g"].astype(f32), params["ln_e_b"].astype(f32),
        w_qk[:, :HD].astype(bf), w_qk[:, HD:].astype(bf),       # w_q, w_k
        params["w_e"].astype(bf),
        params["w_v"].astype(bf), params["b_v"].astype(f32),
        params["w_no"].astype(bf), params["b_no"].astype(f32),
        params["w_eo"].astype(bf), params["b_eo"].astype(f32),
        params["ffx_g"].astype(f32), params["ffx_b"].astype(f32),
        params["ffx_w1"].astype(bf), params["ffx_b1"].astype(f32),
        params["ffx_w2"].astype(bf), params["ffx_b2"].astype(f32),
        params["ffe_g"].astype(f32), params["ffe_b"].astype(f32),
        params["ffe_w1"].astype(bf), params["ffe_b1"].astype(f32),
        params["ffe_w2"].astype(bf), params["ffe_b2"].astype(f32),
    )
    mask3 = mask.reshape(B, 1, N).astype(f32)

    def wspec(w):
        nd = w.ndim
        return pl.BlockSpec(w.shape, lambda b, i, _nd=nd: (0,) * _nd)

    in_specs = [
        pl.BlockSpec((1, N, nh), lambda b, i: (b, 0, 0)),           # x (all rows: K/V)
        pl.BlockSpec((1, TI, N, eh), lambda b, i: (b, i, 0, 0)),    # edge row tile
        pl.BlockSpec((1, 1, N), lambda b, i: (b, 0, 0)),            # mask
    ] + [wspec(w) for w in weights]

    out_specs = [
        pl.BlockSpec((1, TI, nh), lambda b, i: (b, i, 0)),
        pl.BlockSpec((1, TI, N, eh), lambda b, i: (b, i, 0, 0)),
    ]
    out_shape = (jax.ShapeDtypeStruct((B, N, nh), f32),
                 jax.ShapeDtypeStruct((B, N, N, eh), f32))

    fn = pl.pallas_call(
        functools.partial(_gt_kernel, n_head, D, TI),
        out_shape=out_shape,
        grid_spec=pltpu.PrefetchScalarGridSpec(
            num_scalar_prefetch=0,
            grid=(B, N // TI),
            in_specs=in_specs,
            out_specs=out_specs,
        ),
        compiler_params=pltpu.CompilerParams(
            dimension_semantics=("parallel", "parallel"),
            vmem_limit_bytes=vmem_limit_mb * 1024 * 1024,
        ),
    )
    return fn(x.astype(f32), edge.astype(f32), mask3, *weights)


# -----------------------------------------------------------------------------
# Pure-JAX reference (mirror of the PyTorch eval-mode forward)
# -----------------------------------------------------------------------------
def reference_forward(p, x, edge, mask, H, *, bf16_matmuls=True):
    mm = _mm if bf16_matmuls else (
        lambda a, b: jnp.dot(a, b, preferred_element_type=jnp.float32))
    cast = (lambda t: t.astype(jnp.bfloat16)) if bf16_matmuls else (lambda t: t)

    B, N, nh = x.shape
    eh = edge.shape[-1]
    HD = p["w_qk"].shape[1] // 2
    D = HD // H

    xn = _layernorm(x, p["ln_n_g"], p["ln_n_b"])
    en = _layernorm(edge, p["ln_e_g"], p["ln_e_b"])
    qk = mm(xn, p["w_qk"])
    q, k = qk[..., :HD], qk[..., HD:]
    q = q.reshape(B, N, H, D)[:, :, None]               # (B, N, 1, H, D)
    k = k.reshape(B, N, H, D)[:, None]                  # (B, 1, N, H, D)
    e = mm(en, p["w_e"]).reshape(B, N, N, H, D)
    raw = q * k + e
    att = raw.sum(-1) / jnp.sqrt(jnp.float32(D))        # (B, N, N, H)
    att = jnp.where(mask[:, None, :, None] > 0, att, -NEG_MAX)
    att = jax.nn.softmax(att, axis=-2)
    v = (mm(xn, p["w_v"]) + p["b_v"]).reshape(B, N, H, D)
    node = jnp.einsum("bijh,bjhd->bihd", cast(att), cast(v),
                      preferred_element_type=jnp.float32).reshape(B, N, HD)
    node = mm(node, p["w_no"]) + p["b_no"]
    edge_o = mm(raw.reshape(B, N, N, HD), p["w_eo"]) + p["b_eo"]
    x1 = node + x
    e1 = edge_o + edge
    xn2 = _layernorm(x1, p["ffx_g"], p["ffx_b"])
    h1 = _leaky_relu(mm(xn2, p["ffx_w1"]) + p["ffx_b1"])
    h2 = _leaky_relu(mm(h1, p["ffx_w2"]) + p["ffx_b2"])
    x_out = h2 + x1
    en2 = _layernorm(e1, p["ffe_g"], p["ffe_b"])
    g1 = _leaky_relu(mm(en2, p["ffe_w1"]) + p["ffe_b1"])
    g2 = _leaky_relu(mm(g1, p["ffe_w2"]) + p["ffe_b2"])
    return x_out, g2 + e1


def init_params(key, nh, eh, H):
    D = nh // H
    HD = H * D
    ki = iter(jax.random.split(key, 24))

    def w(fi, fo):
        return jax.random.normal(next(ki), (fi, fo), jnp.float32) / jnp.sqrt(jnp.float32(fi))

    def b(n, scale=0.1):
        return scale * jax.random.normal(next(ki), (1, n), jnp.float32)

    p = {}
    p["ln_n_g"] = 1.0 + b(nh); p["ln_n_b"] = b(nh)
    p["ln_e_g"] = 1.0 + b(eh); p["ln_e_b"] = b(eh)
    p["w_qk"] = w(nh, 2 * HD)                 # lin_qk (bias=False, mix_type='add')
    p["w_e"] = w(eh, HD)                      # lin_edge (bias=False)
    p["w_v"] = w(nh, HD); p["b_v"] = b(HD)    # lin_v
    p["w_no"] = w(HD, nh); p["b_no"] = b(nh)  # lin_node_out
    p["w_eo"] = w(HD, eh); p["b_eo"] = b(eh)  # lin_edge_out
    p["ffx_g"] = 1.0 + b(nh); p["ffx_b"] = b(nh)
    p["ffx_w1"] = w(nh, nh); p["ffx_b1"] = b(nh)
    p["ffx_w2"] = w(nh, nh); p["ffx_b2"] = b(nh)
    p["ffe_g"] = 1.0 + b(eh); p["ffe_b"] = b(eh)
    p["ffe_w1"] = w(eh, eh); p["ffe_b1"] = b(eh)
    p["ffe_w2"] = w(eh, eh); p["ffe_b2"] = b(eh)
    return p


if __name__ == "__main__":
    B, N = 2, 16
    node_hidden, edge_hidden, n_head = 32, 16, 4

    key = jax.random.PRNGKey(0)
    k1, k2, k3 = jax.random.split(key, 3)
    x = jax.random.normal(k1, (B, N, node_hidden), jnp.float32)
    edge = jax.random.normal(k2, (B, N, N, edge_hidden), jnp.float32)
    mask = jnp.ones((B, N), jnp.float32).at[1, -3:].set(0.0)   # a few padded nodes
    params = init_params(k3, node_hidden, edge_hidden, n_head)

    # grid = (B, N // TI) = (2, 2): row-tiled edge path, both axes parallel
    x_out, e_out = gnn_block_pallas(params, x, edge, mask, n_head, tile_rows=8)
    jax.block_until_ready((x_out, e_out))

    assert x_out.shape == (B, N, node_hidden)
    assert e_out.shape == (B, N, N, edge_hidden)

    # structural check: reference with the same bf16 matmul-operand precision
    x_rb, e_rb = reference_forward(params, x, edge, mask, n_head, bf16_matmuls=True)
    assert jnp.allclose(x_out, x_rb, atol=3e-2, rtol=3e-2), "node output mismatch"
    assert jnp.allclose(e_out, e_rb, atol=3e-2, rtol=3e-2), "edge output mismatch"

    # semantic sanity check against the full-f32 module math (looser: bf16 MXU path)
    x_rf, e_rf = reference_forward(params, x, edge, mask, n_head, bf16_matmuls=False)
    assert jnp.allclose(x_out, x_rf, atol=1.5e-1, rtol=1.5e-1), "node output far from f32 ref"
    assert jnp.allclose(e_out, e_rf, atol=1.5e-1, rtol=1.5e-1), "edge output far from f32 ref"

    print("KERNEL_OK")
</pallas_src>

<mosaic_0001>
module attributes {stable_mosaic.version = 11 : i64} {
  func.func @_gt_kernel(%arg0: i32, %arg1: i32, %arg2: memref<1x16x32xf32, #tpu.memory_space<vmem>>, %arg3: memref<1x8x16x16xf32, #tpu.memory_space<vmem>>, %arg4: memref<1x1x16xf32, #tpu.memory_space<vmem>>, %arg5: memref<1x32xf32, #tpu.memory_space<vmem>>, %arg6: memref<1x32xf32, #tpu.memory_space<vmem>>, %arg7: memref<1x16xf32, #tpu.memory_space<vmem>>, %arg8: memref<1x16xf32, #tpu.memory_space<vmem>>, %arg9: memref<32x32xbf16, #tpu.memory_space<vmem>>, %arg10: memref<32x32xbf16, #tpu.memory_space<vmem>>, %arg11: memref<16x32xbf16, #tpu.memory_space<vmem>>, %arg12: memref<32x32xbf16, #tpu.memory_space<vmem>>, %arg13: memref<1x32xf32, #tpu.memory_space<vmem>>, %arg14: memref<32x32xbf16, #tpu.memory_space<vmem>>, %arg15: memref<1x32xf32, #tpu.memory_space<vmem>>, %arg16: memref<32x16xbf16, #tpu.memory_space<vmem>>, %arg17: memref<1x16xf32, #tpu.memory_space<vmem>>, %arg18: memref<1x32xf32, #tpu.memory_space<vmem>>, %arg19: memref<1x32xf32, #tpu.memory_space<vmem>>, %arg20: memref<32x32xbf16, #tpu.memory_space<vmem>>, %arg21: memref<1x32xf32, #tpu.memory_space<vmem>>, %arg22: memref<32x32xbf16, #tpu.memory_space<vmem>>, %arg23: memref<1x32xf32, #tpu.memory_space<vmem>>, %arg24: memref<1x16xf32, #tpu.memory_space<vmem>>, %arg25: memref<1x16xf32, #tpu.memory_space<vmem>>, %arg26: memref<16x16xbf16, #tpu.memory_space<vmem>>, %arg27: memref<1x16xf32, #tpu.memory_space<vmem>>, %arg28: memref<16x16xbf16, #tpu.memory_space<vmem>>, %arg29: memref<1x16xf32, #tpu.memory_space<vmem>>, %arg30: memref<1x8x32xf32, #tpu.memory_space<vmem>>, %arg31: memref<1x8x16x16xf32, #tpu.memory_space<vmem>>) attributes {dimension_semantics = [#tpu.dimension_semantics<parallel>, #tpu.dimension_semantics<parallel>], iteration_bounds = array<i64: 2, 2>, scalar_prefetch = 0 : i64, scratch_operands = 0 : i64, tpu.core_type = #tpu.core_type<tc>, window_params = [{transform_indices = @transform_0, window_bounds = array<i64: 1, 16, 32>}, {transform_indices = @transform_1, window_bounds = array<i64: 1, 8, 16, 16>}, {transform_indices = @transform_2, window_bounds = array<i64: 1, 1, 16>}, {pipeline_mode = #tpu.pipeline_mode<synchronous>, transform_indices = @transform_3, window_bounds = array<i64: 1, 32>}, {pipeline_mode = #tpu.pipeline_mode<synchronous>, transform_indices = @transform_4, window_bounds = array<i64: 1, 32>}, {pipeline_mode = #tpu.pipeline_mode<synchronous>, transform_indices = @transform_5, window_bounds = array<i64: 1, 16>}, {pipeline_mode = #tpu.pipeline_mode<synchronous>, transform_indices = @transform_6, window_bounds = array<i64: 1, 16>}, {pipeline_mode = #tpu.pipeline_mode<synchronous>, transform_indices = @transform_7, window_bounds = array<i64: 32, 32>}, {pipeline_mode = #tpu.pipeline_mode<synchronous>, transform_indices = @transform_8, window_bounds = array<i64: 32, 32>}, {pipeline_mode = #tpu.pipeline_mode<synchronous>, transform_indices = @transform_9, window_bounds = array<i64: 16, 32>}, {pipeline_mode = #tpu.pipeline_mode<synchronous>, transform_indices = @transform_10, window_bounds = array<i64: 32, 32>}, {pipeline_mode = #tpu.pipeline_mode<synchronous>, transform_indices = @transform_11, window_bounds = array<i64: 1, 32>}, {pipeline_mode = #tpu.pipeline_mode<synchronous>, transform_indices = @transform_12, window_bounds = array<i64: 32, 32>}, {pipeline_mode = #tpu.pipeline_mode<synchronous>, transform_indices = @transform_13, window_bounds = array<i64: 1, 32>}, {pipeline_mode = #tpu.pipeline_mode<synchronous>, transform_indices = @transform_14, window_bounds = array<i64: 32, 16>}, {pipeline_mode = #tpu.pipeline_mode<synchronous>, transform_indices = @transform_15, window_bounds = array<i64: 1, 16>}, {pipeline_mode = #tpu.pipeline_mode<synchronous>, transform_indices = @transform_16, window_bounds = array<i64: 1, 32>}, {pipeline_mode = #tpu.pipeline_mode<synchronous>, transform_indices = @transform_17, window_bounds = array<i64: 1, 32>}, {pipeline_mode = #tpu.pipeline_mode<synchronous>, transform_indices = @transform_18, window_bounds = array<i64: 32, 32>}, {pipeline_mode = #tpu.pipeline_mode<synchronous>, transform_indices = @transform_19, window_bounds = array<i64: 1, 32>}, {pipeline_mode = #tpu.pipeline_mode<synchronous>, transform_indices = @transform_20, window_bounds = array<i64: 32, 32>}, {pipeline_mode = #tpu.pipeline_mode<synchronous>, transform_indices = @transform_21, window_bounds = array<i64: 1, 32>}, {pipeline_mode = #tpu.pipeline_mode<synchronous>, transform_indices = @transform_22, window_bounds = array<i64: 1, 16>}, {pipeline_mode = #tpu.pipeline_mode<synchronous>, transform_indices = @transform_23, window_bounds = array<i64: 1, 16>}, {pipeline_mode = #tpu.pipeline_mode<synchronous>, transform_indices = @transform_24, window_bounds = array<i64: 16, 16>}, {pipeline_mode = #tpu.pipeline_mode<synchronous>, transform_indices = @transform_25, window_bounds = array<i64: 1, 16>}, {pipeline_mode = #tpu.pipeline_mode<synchronous>, transform_indices = @transform_26, window_bounds = array<i64: 16, 16>}, {pipeline_mode = #tpu.pipeline_mode<synchronous>, transform_indices = @transform_27, window_bounds = array<i64: 1, 16>}, {transform_indices = @transform_28, window_bounds = array<i64: 1, 8, 32>}, {transform_indices = @transform_29, window_bounds = array<i64: 1, 8, 16, 16>}]} {
    %c0 = arith.constant 0 : index
    %c0_0 = arith.constant 0 : index
    %c0_1 = arith.constant 0 : index
    %0 = vector.load %arg2[%c0, %c0_0, %c0_1] : memref<1x16x32xf32, #tpu.memory_space<vmem>>, vector<1x16x32xf32>
    %1 = vector.shape_cast %0 : vector<1x16x32xf32> to vector<16x32xf32>
    %c0_2 = arith.constant 0 : index
    %c0_3 = arith.constant 0 : index
    %c0_4 = arith.constant 0 : index
    %c0_5 = arith.constant 0 : index
    %2 = vector.load %arg3[%c0_2, %c0_3, %c0_4, %c0_5] : memref<1x8x16x16xf32, #tpu.memory_space<vmem>>, vector<1x8x16x16xf32>
    %3 = vector.shape_cast %2 : vector<1x8x16x16xf32> to vector<8x16x16xf32>
    %c0_6 = arith.constant 0 : index
    %c0_7 = arith.constant 0 : index
    %c0_8 = arith.constant 0 : index
    %4 = vector.load %arg4[%c0_6, %c0_7, %c0_8] : memref<1x1x16xf32, #tpu.memory_space<vmem>>, vector<1x1x16xf32>
    %5 = vector.shape_cast %4 : vector<1x1x16xf32> to vector<1x16xf32>
    %cst = arith.constant 0.000000e+00 : f32
    %6 = vector.broadcast %cst : f32 to vector<1x16xf32>
    %7 = arith.cmpf ogt, %5, %6 : vector<1x16xf32>
    %c8_i32 = arith.constant 8 : i32
    %8 = arith.muli %arg1, %c8_i32 : i32
    %9 = tpu.assume_multiple %8, 8 : i32
    %c0_9 = arith.constant 0 : index
    %10 = arith.index_cast %9 : i32 to index
    %c0_10 = arith.constant 0 : index
    %11 = vector.load %arg2[%c0_9, %10, %c0_10] : memref<1x16x32xf32, #tpu.memory_space<vmem>>, vector<1x8x32xf32>
    %12 = vector.shape_cast %11 : vector<1x8x32xf32> to vector<8x32xf32>
    %c0_11 = arith.constant 0 : index
    %c0_12 = arith.constant 0 : index
    %13 = vector.load %arg5[%c0_11, %c0_12] : memref<1x32xf32, #tpu.memory_space<vmem>>, vector<1x32xf32>
    %c0_13 = arith.constant 0 : index
    %c0_14 = arith.constant 0 : index
    %14 = vector.load %arg6[%c0_13, %c0_14] : memref<1x32xf32, #tpu.memory_space<vmem>>, vector<1x32xf32>
    %cst_15 = arith.constant dense<0.000000e+00> : vector<16xf32>
    %15 = vector.multi_reduction <add>, %1, %cst_15 [1] : vector<16x32xf32> to vector<16xf32>
    %16 = vector.shape_cast %15 : vector<16xf32> to vector<16x1xf32>
    %cst_16 = arith.constant 3.200000e+01 : f32
    %17 = vector.broadcast %cst_16 : f32 to vector<16x1xf32>
    %18 = arith.divf %16, %17 : vector<16x1xf32>
    %19 = vector.broadcast %18 : vector<16x1xf32> to vector<16x32xf32>
    %20 = arith.subf %1, %19 : vector<16x32xf32>
    %21 = arith.mulf %20, %20 : vector<16x32xf32>
    %cst_17 = arith.constant dense<0.000000e+00> : vector<16xf32>
    %22 = vector.multi_reduction <add>, %21, %cst_17 [1] : vector<16x32xf32> to vector<16xf32>
    %23 = vector.shape_cast %22 : vector<16xf32> to vector<16x1xf32>
    %cst_18 = arith.constant 3.200000e+01 : f32
    %24 = vector.broadcast %cst_18 : f32 to vector<16x1xf32>
    %25 = arith.divf %23, %24 : vector<16x1xf32>
    %26 = vector.broadcast %18 : vector<16x1xf32> to vector<16x32xf32>
    %27 = arith.subf %1, %26 : vector<16x32xf32>
    %cst_19 = arith.constant 9.99999974E-6 : f32
    %28 = vector.broadcast %cst_19 : f32 to vector<16x1xf32>
    %29 = arith.addf %25, %28 : vector<16x1xf32>
    %30 = math.rsqrt %29 : vector<16x1xf32>
    %31 = vector.broadcast %30 : vector<16x1xf32> to vector<16x32xf32>
    %32 = arith.mulf %27, %31 : vector<16x32xf32>
    %33 = vector.broadcast %13 : vector<1x32xf32> to vector<16x32xf32>
    %34 = arith.mulf %32, %33 : vector<16x32xf32>
    %35 = vector.broadcast %14 : vector<1x32xf32> to vector<16x32xf32>
    %36 = arith.addf %34, %35 : vector<16x32xf32>
    %c0_20 = arith.constant 0 : index
    %c0_21 = arith.constant 0 : index
    %37 = vector.load %arg5[%c0_20, %c0_21] : memref<1x32xf32, #tpu.memory_space<vmem>>, vector<1x32xf32>
    %c0_22 = arith.constant 0 : index
    %c0_23 = arith.constant 0 : index
    %38 = vector.load %arg6[%c0_22, %c0_23] : memref<1x32xf32, #tpu.memory_space<vmem>>, vector<1x32xf32>
    %cst_24 = arith.constant dense<0.000000e+00> : vector<8xf32>
    %39 = vector.multi_reduction <add>, %12, %cst_24 [1] : vector<8x32xf32> to vector<8xf32>
    %40 = vector.shape_cast %39 : vector<8xf32> to vector<8x1xf32>
    %cst_25 = arith.constant 3.200000e+01 : f32
    %41 = vector.broadcast %cst_25 : f32 to vector<8x1xf32>
    %42 = arith.divf %40, %41 : vector<8x1xf32>
    %43 = vector.broadcast %42 : vector<8x1xf32> to vector<8x32xf32>
    %44 = arith.subf %12, %43 : vector<8x32xf32>
    %45 = arith.mulf %44, %44 : vector<8x32xf32>
    %cst_26 = arith.constant dense<0.000000e+00> : vector<8xf32>
    %46 = vector.multi_reduction <add>, %45, %cst_26 [1] : vector<8x32xf32> to vector<8xf32>
    %47 = vector.shape_cast %46 : vector<8xf32> to vector<8x1xf32>
    %cst_27 = arith.constant 3.200000e+01 : f32
    %48 = vector.broadcast %cst_27 : f32 to vector<8x1xf32>
    %49 = arith.divf %47, %48 : vector<8x1xf32>
    %50 = vector.broadcast %42 : vector<8x1xf32> to vector<8x32xf32>
    %51 = arith.subf %12, %50 : vector<8x32xf32>
    %cst_28 = arith.constant 9.99999974E-6 : f32
    %52 = vector.broadcast %cst_28 : f32 to vector<8x1xf32>
    %53 = arith.addf %49, %52 : vector<8x1xf32>
    %54 = math.rsqrt %53 : vector<8x1xf32>
    %55 = vector.broadcast %54 : vector<8x1xf32> to vector<8x32xf32>
    %56 = arith.mulf %51, %55 : vector<8x32xf32>
    %57 = vector.broadcast %37 : vector<1x32xf32> to vector<8x32xf32>
    %58 = arith.mulf %56, %57 : vector<8x32xf32>
    %59 = vector.broadcast %38 : vector<1x32xf32> to vector<8x32xf32>
    %60 = arith.addf %58, %59 : vector<8x32xf32>
    %c0_29 = arith.constant 0 : index
    %c0_30 = arith.constant 0 : index
    %61 = vector.load %arg7[%c0_29, %c0_30] : memref<1x16xf32, #tpu.memory_space<vmem>>, vector<1x16xf32>
    %c0_31 = arith.constant 0 : index
    %c0_32 = arith.constant 0 : index
    %62 = vector.load %arg8[%c0_31, %c0_32] : memref<1x16xf32, #tpu.memory_space<vmem>>, vector<1x16xf32>
    %cst_33 = arith.constant dense<0.000000e+00> : vector<8x16xf32>
    %63 = vector.multi_reduction <add>, %3, %cst_33 [2] : vector<8x16x16xf32> to vector<8x16xf32>
    %64 = vector.shape_cast %63 : vector<8x16xf32> to vector<8x16x1xf32>
    %cst_34 = arith.constant 1.600000e+01 : f32
    %65 = vector.broadcast %cst_34 : f32 to vector<8x16x1xf32>
    %66 = arith.divf %64, %65 : vector<8x16x1xf32>
    %67 = vector.broadcast %66 : vector<8x16x1xf32> to vector<8x16x16xf32>
    %68 = arith.subf %3, %67 : vector<8x16x16xf32>
    %69 = arith.mulf %68, %68 : vector<8x16x16xf32>
    %cst_35 = arith.constant dense<0.000000e+00> : vector<8x16xf32>
    %70 = vector.multi_reduction <add>, %69, %cst_35 [2] : vector<8x16x16xf32> to vector<8x16xf32>
    %71 = vector.shape_cast %70 : vector<8x16xf32> to vector<8x16x1xf32>
    %cst_36 = arith.constant 1.600000e+01 : f32
    %72 = vector.broadcast %cst_36 : f32 to vector<8x16x1xf32>
    %73 = arith.divf %71, %72 : vector<8x16x1xf32>
    %74 = vector.broadcast %66 : vector<8x16x1xf32> to vector<8x16x16xf32>
    %75 = arith.subf %3, %74 : vector<8x16x16xf32>
    %cst_37 = arith.constant 9.99999974E-6 : f32
    %76 = vector.broadcast %cst_37 : f32 to vector<8x16x1xf32>
    %77 = arith.addf %73, %76 : vector<8x16x1xf32>
    %78 = math.rsqrt %77 : vector<8x16x1xf32>
    %79 = vector.broadcast %78 : vector<8x16x1xf32> to vector<8x16x16xf32>
    %80 = arith.mulf %75, %79 : vector<8x16x16xf32>
    %81 = vector.shape_cast %61 : vector<1x16xf32> to vector<1x1x16xf32>
    %82 = vector.broadcast %81 : vector<1x1x16xf32> to vector<8x16x16xf32>
    %83 = arith.mulf %80, %82 : vector<8x16x16xf32>
    %84 = vector.shape_cast %62 : vector<1x16xf32> to vector<1x1x16xf32>
    %85 = vector.broadcast %84 : vector<1x1x16xf32> to vector<8x16x16xf32>
    %86 = arith.addf %83, %85 : vector<8x16x16xf32>
    %87 = arith.truncf %36 : vector<16x32xf32> to vector<16x32xbf16>
    %88 = arith.truncf %60 : vector<8x32xf32> to vector<8x32xbf16>
    %89 = vector.shape_cast %86 : vector<8x16x16xf32> to vector<128x16xf32>
    %90 = arith.truncf %89 : vector<128x16xf32> to vector<128x16xbf16>
    %c0_38 = arith.constant 0 : index
    %c0_39 = arith.constant 0 : index
    %91 = vector.load %arg9[%c0_38, %c0_39] : memref<32x32xbf16, #tpu.memory_space<vmem>>, vector<32x32xbf16>
    %cst_40 = arith.constant dense<0.000000e+00> : vector<8x32xf32>
    %92 = tpu.matmul %88, %91, %cst_40 {dimension_numbers = #tpu.dot_dimension_numbers<[1], [0], [0], [1], [0, 0, 1, 1], [], []>} : vector<8x32xbf16>, vector<32x32xbf16>, vector<8x32xf32> -> vector<8x32xf32>
    %c0_41 = arith.constant 0 : index
    %c0_42 = arith.constant 0 : index
    %93 = vector.load %arg10[%c0_41, %c0_42] : memref<32x32xbf16, #tpu.memory_space<vmem>>, vector<32x32xbf16>
    %cst_43 = arith.constant dense<0.000000e+00> : vector<16x32xf32>
    %94 = tpu.matmul %87, %93, %cst_43 {dimension_numbers = #tpu.dot_dimension_numbers<[1], [0], [0], [1], [0, 0, 1, 1], [], []>} : vector<16x32xbf16>, vector<32x32xbf16>, vector<16x32xf32> -> vector<16x32xf32>
    %c0_44 = arith.constant 0 : index
    %c0_45 = arith.constant 0 : index
    %95 = vector.load %arg12[%c0_44, %c0_45] : memref<32x32xbf16, #tpu.memory_space<vmem>>, vector<32x32xbf16>
    %cst_46 = arith.constant dense<0.000000e+00> : vector<16x32xf32>
    %96 = tpu.matmul %87, %95, %cst_46 {dimension_numbers = #tpu.dot_dimension_numbers<[1], [0], [0], [1], [0, 0, 1, 1], [], []>} : vector<16x32xbf16>, vector<32x32xbf16>, vector<16x32xf32> -> vector<16x32xf32>
    %c0_47 = arith.constant 0 : index
    %c0_48 = arith.constant 0 : index
    %97 = vector.load %arg13[%c0_47, %c0_48] : memref<1x32xf32, #tpu.memory_space<vmem>>, vector<1x32xf32>
    %98 = vector.broadcast %97 : vector<1x32xf32> to vector<16x32xf32>
    %99 = arith.addf %96, %98 : vector<16x32xf32>
    %100 = arith.truncf %99 : vector<16x32xf32> to vector<16x32xbf16>
    %c0_49 = arith.constant 0 : index
    %c0_50 = arith.constant 0 : index
    %101 = vector.load %arg11[%c0_49, %c0_50] : memref<16x32xbf16, #tpu.memory_space<vmem>>, vector<16x32xbf16>
    %c0_51 = arith.constant 0 : index
    %c0_52 = arith.constant 0 : index
    %102 = vector.load %arg14[%c0_51, %c0_52] : memref<32x32xbf16, #tpu.memory_space<vmem>>, vector<32x32xbf16>
    %c0_53 = arith.constant 0 : index
    %c0_54 = arith.constant 0 : index
    %103 = vector.load %arg16[%c0_53, %c0_54] : memref<32x16xbf16, #tpu.memory_space<vmem>>, vector<32x16xbf16>
    %cst_55 = arith.constant 0.000000e+00 : f32
    %104 = vector.broadcast %cst_55 : f32 to vector<8x32xf32>
    %c0_56 = arith.constant 0 : index
    %c0_57 = arith.constant 0 : index
    %105 = vector.load %arg15[%c0_56, %c0_57] : memref<1x32xf32, #tpu.memory_space<vmem>>, vector<1x32xf32>
    %106 = vector.broadcast %105 : vector<1x32xf32> to vector<8x32xf32>
    %107 = arith.addf %104, %106 : vector<8x32xf32>
    %cst_58 = arith.constant 0.000000e+00 : f32
    %108 = vector.broadcast %cst_58 : f32 to vector<128x16xf32>
    %c0_59 = arith.constant 0 : index
    %c0_60 = arith.constant 0 : index
    %109 = vector.load %arg17[%c0_59, %c0_60] : memref<1x16xf32, #tpu.memory_space<vmem>>, vector<1x16xf32>
    %110 = vector.broadcast %109 : vector<1x16xf32> to vector<128x16xf32>
    %111 = arith.addf %108, %110 : vector<128x16xf32>
    %112 = vector.extract_strided_slice %92 {offsets = [0, 0], sizes = [8, 8], strides = [1, 1]} : vector<8x32xf32> to vector<8x8xf32>
    %113 = vector.extract_strided_slice %94 {offsets = [0, 0], sizes = [16, 8], strides = [1, 1]} : vector<16x32xf32> to vector<16x8xf32>
    %114 = vector.extract_strided_slice %100 {offsets = [0, 0], sizes = [16, 8], strides = [1, 1]} : vector<16x32xbf16> to vector<16x8xbf16>
    %115 = vector.extract_strided_slice %101 {offsets = [0, 0], sizes = [16, 8], strides = [1, 1]} : vector<16x32xbf16> to vector<16x8xbf16>
    %cst_61 = arith.constant dense<0.000000e+00> : vector<128x8xf32>
    %116 = tpu.matmul %90, %115, %cst_61 {dimension_numbers = #tpu.dot_dimension_numbers<[1], [0], [0], [1], [0, 0, 1, 1], [], []>} : vector<128x16xbf16>, vector<16x8xbf16>, vector<128x8xf32> -> vector<128x8xf32>
    %117 = vector.shape_cast %112 : vector<8x8xf32> to vector<8x1x8xf32>
    %118 = vector.shape_cast %113 : vector<16x8xf32> to vector<1x16x8xf32>
    %119 = vector.broadcast %117 : vector<8x1x8xf32> to vector<8x16x8xf32>
    %120 = vector.broadcast %118 : vector<1x16x8xf32> to vector<8x16x8xf32>
    %121 = arith.mulf %119, %120 : vector<8x16x8xf32>
    %122 = vector.shape_cast %116 : vector<128x8xf32> to vector<8x16x8xf32>
    %123 = arith.addf %121, %122 : vector<8x16x8xf32>
    %cst_62 = arith.constant dense<0.000000e+00> : vector<8x16xf32>
    %124 = vector.multi_reduction <add>, %123, %cst_62 [2] : vector<8x16x8xf32> to vector<8x16xf32>
    %cst_63 = arith.constant 0.353553385 : f32
    %125 = vector.broadcast %cst_63 : f32 to vector<8x16xf32>
    %126 = arith.mulf %124, %125 : vector<8x16xf32>
    %cst_64 = arith.constant -3.40282347E+38 : f32
    %127 = vector.shape_cast %7 : vector<1x16xi1> to vector<1x16xi1>
    %128 = vector.broadcast %127 : vector<1x16xi1> to vector<8x16xi1>
    %129 = vector.broadcast %cst_64 : f32 to vector<8x16xf32>
    %130 = arith.select %128, %126, %129 : vector<8x16xi1>, vector<8x16xf32>
    %cst_65 = arith.constant dense<0xFF800000> : vector<8xf32>
    %131 = vector.multi_reduction <maximumf>, %130, %cst_65 [1] : vector<8x16xf32> to vector<8xf32>
    %132 = vector.shape_cast %131 : vector<8xf32> to vector<8x1xf32>
    %133 = vector.broadcast %132 : vector<8x1xf32> to vector<8x16xf32>
    %134 = arith.subf %130, %133 : vector<8x16xf32>
    %135 = math.exp %134 : vector<8x16xf32>
    %cst_66 = arith.constant dense<0.000000e+00> : vector<8xf32>
    %136 = vector.multi_reduction <add>, %135, %cst_66 [1] : vector<8x16xf32> to vector<8xf32>
    %137 = vector.shape_cast %136 : vector<8xf32> to vector<8x1xf32>
    %138 = tpu.reciprocal %137 {approx = true} : vector<8x1xf32> -> vector<8x1xf32>
    %139 = vector.broadcast %138 : vector<8x1xf32> to vector<8x16xf32>
    %140 = arith.mulf %135, %139 : vector<8x16xf32>
    %141 = arith.truncf %140 : vector<8x16xf32> to vector<8x16xbf16>
    %cst_67 = arith.constant dense<0.000000e+00> : vector<8x8xf32>
    %142 = tpu.matmul %141, %114, %cst_67 {dimension_numbers = #tpu.dot_dimension_numbers<[1], [0], [0], [1], [0, 0, 1, 1], [], []>} : vector<8x16xbf16>, vector<16x8xbf16>, vector<8x8xf32> -> vector<8x8xf32>
    %143 = arith.truncf %142 : vector<8x8xf32> to vector<8x8xbf16>
    %144 = vector.extract_strided_slice %102 {offsets = [0, 0], sizes = [8, 32], strides = [1, 1]} : vector<32x32xbf16> to vector<8x32xbf16>
    %cst_68 = arith.constant dense<0.000000e+00> : vector<8x32xf32>
    %145 = tpu.matmul %143, %144, %cst_68 {dimension_numbers = #tpu.dot_dimension_numbers<[1], [0], [0], [1], [0, 0, 1, 1], [], []>} : vector<8x8xbf16>, vector<8x32xbf16>, vector<8x32xf32> -> vector<8x32xf32>
    %146 = arith.addf %107, %145 : vector<8x32xf32>
    %147 = vector.shape_cast %123 : vector<8x16x8xf32> to vector<128x8xf32>
    %148 = arith.truncf %147 : vector<128x8xf32> to vector<128x8xbf16>
    %149 = vector.extract_strided_slice %103 {offsets = [0, 0], sizes = [8, 16], strides = [1, 1]} : vector<32x16xbf16> to vector<8x16xbf16>
    %cst_69 = arith.constant dense<0.000000e+00> : vector<128x16xf32>
    %150 = tpu.matmul %148, %149, %cst_69 {dimension_numbers = #tpu.dot_dimension_numbers<[1], [0], [0], [1], [0, 0, 1, 1], [], []>} : vector<128x8xbf16>, vector<8x16xbf16>, vector<128x16xf32> -> vector<128x16xf32>
    %151 = arith.addf %111, %150 : vector<128x16xf32>
    %152 = vector.extract_strided_slice %92 {offsets = [0, 8], sizes = [8, 8], strides = [1, 1]} : vector<8x32xf32> to vector<8x8xf32>
    %153 = vector.extract_strided_slice %94 {offsets = [0, 8], sizes = [16, 8], strides = [1, 1]} : vector<16x32xf32> to vector<16x8xf32>
    %154 = vector.extract_strided_slice %100 {offsets = [0, 8], sizes = [16, 8], strides = [1, 1]} : vector<16x32xbf16> to vector<16x8xbf16>
    %155 = vector.extract_strided_slice %101 {offsets = [0, 8], sizes = [16, 8], strides = [1, 1]} : vector<16x32xbf16> to vector<16x8xbf16>
    %cst_70 = arith.constant dense<0.000000e+00> : vector<128x8xf32>
    %156 = tpu.matmul %90, %155, %cst_70 {dimension_numbers = #tpu.dot_dimension_numbers<[1], [0], [0], [1], [0, 0, 1, 1], [], []>} : vector<128x16xbf16>, vector<16x8xbf16>, vector<128x8xf32> -> vector<128x8xf32>
    %157 = vector.shape_cast %152 : vector<8x8xf32> to vector<8x1x8xf32>
    %158 = vector.shape_cast %153 : vector<16x8xf32> to vector<1x16x8xf32>
    %159 = vector.broadcast %157 : vector<8x1x8xf32> to vector<8x16x8xf32>
    %160 = vector.broadcast %158 : vector<1x16x8xf32> to vector<8x16x8xf32>
    %161 = arith.mulf %159, %160 : vector<8x16x8xf32>
    %162 = vector.shape_cast %156 : vector<128x8xf32> to vector<8x16x8xf32>
    %163 = arith.addf %161, %162 : vector<8x16x8xf32>
    %cst_71 = arith.constant dense<0.000000e+00> : vector<8x16xf32>
    %164 = vector.multi_reduction <add>, %163, %cst_71 [2] : vector<8x16x8xf32> to vector<8x16xf32>
    %cst_72 = arith.constant 0.353553385 : f32
    %165 = vector.broadcast %cst_72 : f32 to vector<8x16xf32>
    %166 = arith.mulf %164, %165 : vector<8x16xf32>
    %cst_73 = arith.constant -3.40282347E+38 : f32
    %167 = vector.shape_cast %7 : vector<1x16xi1> to vector<1x16xi1>
    %168 = vector.broadcast %167 : vector<1x16xi1> to vector<8x16xi1>
    %169 = vector.broadcast %cst_73 : f32 to vector<8x16xf32>
    %170 = arith.select %168, %166, %169 : vector<8x16xi1>, vector<8x16xf32>
    %cst_74 = arith.constant dense<0xFF800000> : vector<8xf32>
    %171 = vector.multi_reduction <maximumf>, %170, %cst_74 [1] : vector<8x16xf32> to vector<8xf32>
    %172 = vector.shape_cast %171 : vector<8xf32> to vector<8x1xf32>
    %173 = vector.broadcast %172 : vector<8x1xf32> to vector<8x16xf32>
    %174 = arith.subf %170, %173 : vector<8x16xf32>
    %175 = math.exp %174 : vector<8x16xf32>
    %cst_75 = arith.constant dense<0.000000e+00> : vector<8xf32>
    %176 = vector.multi_reduction <add>, %175, %cst_75 [1] : vector<8x16xf32> to vector<8xf32>
    %177 = vector.shape_cast %176 : vector<8xf32> to vector<8x1xf32>
    %178 = tpu.reciprocal %177 {approx = true} : vector<8x1xf32> -> vector<8x1xf32>
    %179 = vector.broadcast %178 : vector<8x1xf32> to vector<8x16xf32>
    %180 = arith.mulf %175, %179 : vector<8x16xf32>
    %181 = arith.truncf %180 : vector<8x16xf32> to vector<8x16xbf16>
    %cst_76 = arith.constant dense<0.000000e+00> : vector<8x8xf32>
    %182 = tpu.matmul %181, %154, %cst_76 {dimension_numbers = #tpu.dot_dimension_numbers<[1], [0], [0], [1], [0, 0, 1, 1], [], []>} : vector<8x16xbf16>, vector<16x8xbf16>, vector<8x8xf32> -> vector<8x8xf32>
    %183 = arith.truncf %182 : vector<8x8xf32> to vector<8x8xbf16>
    %184 = vector.extract_strided_slice %102 {offsets = [8, 0], sizes = [8, 32], strides = [1, 1]} : vector<32x32xbf16> to vector<8x32xbf16>
    %cst_77 = arith.constant dense<0.000000e+00> : vector<8x32xf32>
    %185 = tpu.matmul %183, %184, %cst_77 {dimension_numbers = #tpu.dot_dimension_numbers<[1], [0], [0], [1], [0, 0, 1, 1], [], []>} : vector<8x8xbf16>, vector<8x32xbf16>, vector<8x32xf32> -> vector<8x32xf32>
    %186 = arith.addf %146, %185 : vector<8x32xf32>
    %187 = vector.shape_cast %163 : vector<8x16x8xf32> to vector<128x8xf32>
    %188 = arith.truncf %187 : vector<128x8xf32> to vector<128x8xbf16>
    %189 = vector.extract_strided_slice %103 {offsets = [8, 0], sizes = [8, 16], strides = [1, 1]} : vector<32x16xbf16> to vector<8x16xbf16>
    %cst_78 = arith.constant dense<0.000000e+00> : vector<128x16xf32>
    %190 = tpu.matmul %188, %189, %cst_78 {dimension_numbers = #tpu.dot_dimension_numbers<[1], [0], [0], [1], [0, 0, 1, 1], [], []>} : vector<128x8xbf16>, vector<8x16xbf16>, vector<128x16xf32> -> vector<128x16xf32>
    %191 = arith.addf %151, %190 : vector<128x16xf32>
    %192 = vector.extract_strided_slice %92 {offsets = [0, 16], sizes = [8, 8], strides = [1, 1]} : vector<8x32xf32> to vector<8x8xf32>
    %193 = vector.extract_strided_slice %94 {offsets = [0, 16], sizes = [16, 8], strides = [1, 1]} : vector<16x32xf32> to vector<16x8xf32>
    %194 = vector.extract_strided_slice %100 {offsets = [0, 16], sizes = [16, 8], strides = [1, 1]} : vector<16x32xbf16> to vector<16x8xbf16>
    %195 = vector.extract_strided_slice %101 {offsets = [0, 16], sizes = [16, 8], strides = [1, 1]} : vector<16x32xbf16> to vector<16x8xbf16>
    %cst_79 = arith.constant dense<0.000000e+00> : vector<128x8xf32>
    %196 = tpu.matmul %90, %195, %cst_79 {dimension_numbers = #tpu.dot_dimension_numbers<[1], [0], [0], [1], [0, 0, 1, 1], [], []>} : vector<128x16xbf16>, vector<16x8xbf16>, vector<128x8xf32> -> vector<128x8xf32>
    %197 = vector.shape_cast %192 : vector<8x8xf32> to vector<8x1x8xf32>
    %198 = vector.shape_cast %193 : vector<16x8xf32> to vector<1x16x8xf32>
    %199 = vector.broadcast %197 : vector<8x1x8xf32> to vector<8x16x8xf32>
    %200 = vector.broadcast %198 : vector<1x16x8xf32> to vector<8x16x8xf32>
    %201 = arith.mulf %199, %200 : vector<8x16x8xf32>
    %202 = vector.shape_cast %196 : vector<128x8xf32> to vector<8x16x8xf32>
    %203 = arith.addf %201, %202 : vector<8x16x8xf32>
    %cst_80 = arith.constant dense<0.000000e+00> : vector<8x16xf32>
    %204 = vector.multi_reduction <add>, %203, %cst_80 [2] : vector<8x16x8xf32> to vector<8x16xf32>
    %cst_81 = arith.constant 0.353553385 : f32
    %205 = vector.broadcast %cst_81 : f32 to vector<8x16xf32>
    %206 = arith.mulf %204, %205 : vector<8x16xf32>
    %cst_82 = arith.constant -3.40282347E+38 : f32
    %207 = vector.shape_cast %7 : vector<1x16xi1> to vector<1x16xi1>
    %208 = vector.broadcast %207 : vector<1x16xi1> to vector<8x16xi1>
    %209 = vector.broadcast %cst_82 : f32 to vector<8x16xf32>
    %210 = arith.select %208, %206, %209 : vector<8x16xi1>, vector<8x16xf32>
    %cst_83 = arith.constant dense<0xFF800000> : vector<8xf32>
    %211 = vector.multi_reduction <maximumf>, %210, %cst_83 [1] : vector<8x16xf32> to vector<8xf32>
    %212 = vector.shape_cast %211 : vector<8xf32> to vector<8x1xf32>
    %213 = vector.broadcast %212 : vector<8x1xf32> to vector<8x16xf32>
    %214 = arith.subf %210, %213 : vector<8x16xf32>
    %215 = math.exp %214 : vector<8x16xf32>
    %cst_84 = arith.constant dense<0.000000e+00> : vector<8xf32>
    %216 = vector.multi_reduction <add>, %215, %cst_84 [1] : vector<8x16xf32> to vector<8xf32>
    %217 = vector.shape_cast %216 : vector<8xf32> to vector<8x1xf32>
    %218 = tpu.reciprocal %217 {approx = true} : vector<8x1xf32> -> vector<8x1xf32>
    %219 = vector.broadcast %218 : vector<8x1xf32> to vector<8x16xf32>
    %220 = arith.mulf %215, %219 : vector<8x16xf32>
    %221 = arith.truncf %220 : vector<8x16xf32> to vector<8x16xbf16>
    %cst_85 = arith.constant dense<0.000000e+00> : vector<8x8xf32>
    %222 = tpu.matmul %221, %194, %cst_85 {dimension_numbers = #tpu.dot_dimension_numbers<[1], [0], [0], [1], [0, 0, 1, 1], [], []>} : vector<8x16xbf16>, vector<16x8xbf16>, vector<8x8xf32> -> vector<8x8xf32>
    %223 = arith.truncf %222 : vector<8x8xf32> to vector<8x8xbf16>
    %224 = vector.extract_strided_slice %102 {offsets = [16, 0], sizes = [8, 32], strides = [1, 1]} : vector<32x32xbf16> to vector<8x32xbf16>
    %cst_86 = arith.constant dense<0.000000e+00> : vector<8x32xf32>
    %225 = tpu.matmul %223, %224, %cst_86 {dimension_numbers = #tpu.dot_dimension_numbers<[1], [0], [0], [1], [0, 0, 1, 1], [], []>} : vector<8x8xbf16>, vector<8x32xbf16>, vector<8x32xf32> -> vector<8x32xf32>
    %226 = arith.addf %186, %225 : vector<8x32xf32>
    %227 = vector.shape_cast %203 : vector<8x16x8xf32> to vector<128x8xf32>
    %228 = arith.truncf %227 : vector<128x8xf32> to vector<128x8xbf16>
    %229 = vector.extract_strided_slice %103 {offsets = [16, 0], sizes = [8, 16], strides = [1, 1]} : vector<32x16xbf16> to vector<8x16xbf16>
    %cst_87 = arith.constant dense<0.000000e+00> : vector<128x16xf32>
    %230 = tpu.matmul %228, %229, %cst_87 {dimension_numbers = #tpu.dot_dimension_numbers<[1], [0], [0], [1], [0, 0, 1, 1], [], []>} : vector<128x8xbf16>, vector<8x16xbf16>, vector<128x16xf32> -> vector<128x16xf32>
    %231 = arith.addf %191, %230 : vector<128x16xf32>
    %232 = vector.extract_strided_slice %92 {offsets = [0, 24], sizes = [8, 8], strides = [1, 1]} : vector<8x32xf32> to vector<8x8xf32>
    %233 = vector.extract_strided_slice %94 {offsets = [0, 24], sizes = [16, 8], strides = [1, 1]} : vector<16x32xf32> to vector<16x8xf32>
    %234 = vector.extract_strided_slice %100 {offsets = [0, 24], sizes = [16, 8], strides = [1, 1]} : vector<16x32xbf16> to vector<16x8xbf16>
    %235 = vector.extract_strided_slice %101 {offsets = [0, 24], sizes = [16, 8], strides = [1, 1]} : vector<16x32xbf16> to vector<16x8xbf16>
    %cst_88 = arith.constant dense<0.000000e+00> : vector<128x8xf32>
    %236 = tpu.matmul %90, %235, %cst_88 {dimension_numbers = #tpu.dot_dimension_numbers<[1], [0], [0], [1], [0, 0, 1, 1], [], []>} : vector<128x16xbf16>, vector<16x8xbf16>, vector<128x8xf32> -> vector<128x8xf32>
    %237 = vector.shape_cast %232 : vector<8x8xf32> to vector<8x1x8xf32>
    %238 = vector.shape_cast %233 : vector<16x8xf32> to vector<1x16x8xf32>
    %239 = vector.broadcast %237 : vector<8x1x8xf32> to vector<8x16x8xf32>
    %240 = vector.broadcast %238 : vector<1x16x8xf32> to vector<8x16x8xf32>
    %241 = arith.mulf %239, %240 : vector<8x16x8xf32>
    %242 = vector.shape_cast %236 : vector<128x8xf32> to vector<8x16x8xf32>
    %243 = arith.addf %241, %242 : vector<8x16x8xf32>
    %cst_89 = arith.constant dense<0.000000e+00> : vector<8x16xf32>
    %244 = vector.multi_reduction <add>, %243, %cst_89 [2] : vector<8x16x8xf32> to vector<8x16xf32>
    %cst_90 = arith.constant 0.353553385 : f32
    %245 = vector.broadcast %cst_90 : f32 to vector<8x16xf32>
    %246 = arith.mulf %244, %245 : vector<8x16xf32>
    %cst_91 = arith.constant -3.40282347E+38 : f32
    %247 = vector.shape_cast %7 : vector<1x16xi1> to vector<1x16xi1>
    %248 = vector.broadcast %247 : vector<1x16xi1> to vector<8x16xi1>
    %249 = vector.broadcast %cst_91 : f32 to vector<8x16xf32>
    %250 = arith.select %248, %246, %249 : vector<8x16xi1>, vector<8x16xf32>
    %cst_92 = arith.constant dense<0xFF800000> : vector<8xf32>
    %251 = vector.multi_reduction <maximumf>, %250, %cst_92 [1] : vector<8x16xf32> to vector<8xf32>
    %252 = vector.shape_cast %251 : vector<8xf32> to vector<8x1xf32>
    %253 = vector.broadcast %252 : vector<8x1xf32> to vector<8x16xf32>
    %254 = arith.subf %250, %253 : vector<8x16xf32>
    %255 = math.exp %254 : vector<8x16xf32>
    %cst_93 = arith.constant dense<0.000000e+00> : vector<8xf32>
    %256 = vector.multi_reduction <add>, %255, %cst_93 [1] : vector<8x16xf32> to vector<8xf32>
    %257 = vector.shape_cast %256 : vector<8xf32> to vector<8x1xf32>
    %258 = tpu.reciprocal %257 {approx = true} : vector<8x1xf32> -> vector<8x1xf32>
    %259 = vector.broadcast %258 : vector<8x1xf32> to vector<8x16xf32>
    %260 = arith.mulf %255, %259 : vector<8x16xf32>
    %261 = arith.truncf %260 : vector<8x16xf32> to vector<8x16xbf16>
    %cst_94 = arith.constant dense<0.000000e+00> : vector<8x8xf32>
    %262 = tpu.matmul %261, %234, %cst_94 {dimension_numbers = #tpu.dot_dimension_numbers<[1], [0], [0], [1], [0, 0, 1, 1], [], []>} : vector<8x16xbf16>, vector<16x8xbf16>, vector<8x8xf32> -> vector<8x8xf32>
    %263 = arith.truncf %262 : vector<8x8xf32> to vector<8x8xbf16>
    %264 = vector.extract_strided_slice %102 {offsets = [24, 0], sizes = [8, 32], strides = [1, 1]} : vector<32x32xbf16> to vector<8x32xbf16>
    %cst_95 = arith.constant dense<0.000000e+00> : vector<8x32xf32>
    %265 = tpu.matmul %263, %264, %cst_95 {dimension_numbers = #tpu.dot_dimension_numbers<[1], [0], [0], [1], [0, 0, 1, 1], [], []>} : vector<8x8xbf16>, vector<8x32xbf16>, vector<8x32xf32> -> vector<8x32xf32>
    %266 = arith.addf %226, %265 : vector<8x32xf32>
    %267 = vector.shape_cast %243 : vector<8x16x8xf32> to vector<128x8xf32>
    %268 = arith.truncf %267 : vector<128x8xf32> to vector<128x8xbf16>
    %269 = vector.extract_strided_slice %103 {offsets = [24, 0], sizes = [8, 16], strides = [1, 1]} : vector<32x16xbf16> to vector<8x16xbf16>
    %cst_96 = arith.constant dense<0.000000e+00> : vector<128x16xf32>
    %270 = tpu.matmul %268, %269, %cst_96 {dimension_numbers = #tpu.dot_dimension_numbers<[1], [0], [0], [1], [0, 0, 1, 1], [], []>} : vector<128x8xbf16>, vector<8x16xbf16>, vector<128x16xf32> -> vector<128x16xf32>
    %271 = arith.addf %231, %270 : vector<128x16xf32>
    %272 = arith.addf %266, %12 : vector<8x32xf32>
    %273 = vector.shape_cast %3 : vector<8x16x16xf32> to vector<128x16xf32>
    %274 = arith.addf %271, %273 : vector<128x16xf32>
    %c0_97 = arith.constant 0 : index
    %c0_98 = arith.constant 0 : index
    %275 = vector.load %arg18[%c0_97, %c0_98] : memref<1x32xf32, #tpu.memory_space<vmem>>, vector<1x32xf32>
    %c0_99 = arith.constant 0 : index
    %c0_100 = arith.constant 0 : index
    %276 = vector.load %arg19[%c0_99, %c0_100] : memref<1x32xf32, #tpu.memory_space<vmem>>, vector<1x32xf32>
    %cst_101 = arith.constant dense<0.000000e+00> : vector<8xf32>
    %277 = vector.multi_reduction <add>, %272, %cst_101 [1] : vector<8x32xf32> to vector<8xf32>
    %278 = vector.shape_cast %277 : vector<8xf32> to vector<8x1xf32>
    %cst_102 = arith.constant 3.200000e+01 : f32
    %279 = vector.broadcast %cst_102 : f32 to vector<8x1xf32>
    %280 = arith.divf %278, %279 : vector<8x1xf32>
    %281 = vector.broadcast %280 : vector<8x1xf32> to vector<8x32xf32>
    %282 = arith.subf %272, %281 : vector<8x32xf32>
    %283 = arith.mulf %282, %282 : vector<8x32xf32>
    %cst_103 = arith.constant dense<0.000000e+00> : vector<8xf32>
    %284 = vector.multi_reduction <add>, %283, %cst_103 [1] : vector<8x32xf32> to vector<8xf32>
    %285 = vector.shape_cast %284 : vector<8xf32> to vector<8x1xf32>
    %cst_104 = arith.constant 3.200000e+01 : f32
    %286 = vector.broadcast %cst_104 : f32 to vector<8x1xf32>
    %287 = arith.divf %285, %286 : vector<8x1xf32>
    %288 = vector.broadcast %280 : vector<8x1xf32> to vector<8x32xf32>
    %289 = arith.subf %272, %288 : vector<8x32xf32>
    %cst_105 = arith.constant 9.99999974E-6 : f32
    %290 = vector.broadcast %cst_105 : f32 to vector<8x1xf32>
    %291 = arith.addf %287, %290 : vector<8x1xf32>
    %292 = math.rsqrt %291 : vector<8x1xf32>
    %293 = vector.broadcast %292 : vector<8x1xf32> to vector<8x32xf32>
    %294 = arith.mulf %289, %293 : vector<8x32xf32>
    %295 = vector.broadcast %275 : vector<1x32xf32> to vector<8x32xf32>
    %296 = arith.mulf %294, %295 : vector<8x32xf32>
    %297 = vector.broadcast %276 : vector<1x32xf32> to vector<8x32xf32>
    %298 = arith.addf %296, %297 : vector<8x32xf32>
    %299 = arith.truncf %298 : vector<8x32xf32> to vector<8x32xbf16>
    %c0_106 = arith.constant 0 : index
    %c0_107 = arith.constant 0 : index
    %300 = vector.load %arg20[%c0_106, %c0_107] : memref<32x32xbf16, #tpu.memory_space<vmem>>, vector<32x32xbf16>
    %cst_108 = arith.constant dense<0.000000e+00> : vector<8x32xf32>
    %301 = tpu.matmul %299, %300, %cst_108 {dimension_numbers = #tpu.dot_dimension_numbers<[1], [0], [0], [1], [0, 0, 1, 1], [], []>} : vector<8x32xbf16>, vector<32x32xbf16>, vector<8x32xf32> -> vector<8x32xf32>
    %c0_109 = arith.constant 0 : index
    %c0_110 = arith.constant 0 : index
    %302 = vector.load %arg21[%c0_109, %c0_110] : memref<1x32xf32, #tpu.memory_space<vmem>>, vector<1x32xf32>
    %303 = vector.broadcast %302 : vector<1x32xf32> to vector<8x32xf32>
    %304 = arith.addf %301, %303 : vector<8x32xf32>
    %cst_111 = arith.constant 0.000000e+00 : f32
    %305 = vector.broadcast %cst_111 : f32 to vector<8x32xf32>
    %306 = arith.cmpf oge, %304, %305 : vector<8x32xf32>
    %cst_112 = arith.constant 0.00999999977 : f32
    %307 = vector.broadcast %cst_112 : f32 to vector<8x32xf32>
    %308 = arith.mulf %307, %304 : vector<8x32xf32>
    %309 = arith.select %306, %304, %308 : vector<8x32xi1>, vector<8x32xf32>
    %310 = arith.truncf %309 : vector<8x32xf32> to vector<8x32xbf16>
    %c0_113 = arith.constant 0 : index
    %c0_114 = arith.constant 0 : index
    %311 = vector.load %arg22[%c0_113, %c0_114] : memref<32x32xbf16, #tpu.memory_space<vmem>>, vector<32x32xbf16>
    %cst_115 = arith.constant dense<0.000000e+00> : vector<8x32xf32>
    %312 = tpu.matmul %310, %311, %cst_115 {dimension_numbers = #tpu.dot_dimension_numbers<[1], [0], [0], [1], [0, 0, 1, 1], [], []>} : vector<8x32xbf16>, vector<32x32xbf16>, vector<8x32xf32> -> vector<8x32xf32>
    %c0_116 = arith.constant 0 : index
    %c0_117 = arith.constant 0 : index
    %313 = vector.load %arg23[%c0_116, %c0_117] : memref<1x32xf32, #tpu.memory_space<vmem>>, vector<1x32xf32>
    %314 = vector.broadcast %313 : vector<1x32xf32> to vector<8x32xf32>
    %315 = arith.addf %312, %314 : vector<8x32xf32>
    %cst_118 = arith.constant 0.000000e+00 : f32
    %316 = vector.broadcast %cst_118 : f32 to vector<8x32xf32>
    %317 = arith.cmpf oge, %315, %316 : vector<8x32xf32>
    %cst_119 = arith.constant 0.00999999977 : f32
    %318 = vector.broadcast %cst_119 : f32 to vector<8x32xf32>
    %319 = arith.mulf %318, %315 : vector<8x32xf32>
    %320 = arith.select %317, %315, %319 : vector<8x32xi1>, vector<8x32xf32>
    %321 = arith.addf %320, %272 : vector<8x32xf32>
    %c0_120 = arith.constant 0 : index
    %c0_121 = arith.constant 0 : index
    %c0_122 = arith.constant 0 : index
    %322 = vector.load %arg30[%c0_120, %c0_121, %c0_122] : memref<1x8x32xf32, #tpu.memory_space<vmem>>, vector<1x8x32xf32>
    %323 = vector.shape_cast %322 : vector<1x8x32xf32> to vector<8x32xf32>
    %324 = vector.shape_cast %321 : vector<8x32xf32> to vector<1x8x32xf32>
    tpu.vector_store %arg30[%c0_120, %c0_121, %c0_122], %324 {strides = array<i32>} : memref<1x8x32xf32, #tpu.memory_space<vmem>>, vector<1x8x32xf32>,
    %c0_123 = arith.constant 0 : index
    %c0_124 = arith.constant 0 : index
    %325 = vector.load %arg24[%c0_123, %c0_124] : memref<1x16xf32, #tpu.memory_space<vmem>>, vector<1x16xf32>
    %c0_125 = arith.constant 0 : index
    %c0_126 = arith.constant 0 : index
    %326 = vector.load %arg25[%c0_125, %c0_126] : memref<1x16xf32, #tpu.memory_space<vmem>>, vector<1x16xf32>
    %cst_127 = arith.constant dense<0.000000e+00> : vector<128xf32>
    %327 = vector.multi_reduction <add>, %274, %cst_127 [1] : vector<128x16xf32> to vector<128xf32>
    %328 = vector.shape_cast %327 : vector<128xf32> to vector<128x1xf32>
    %cst_128 = arith.constant 1.600000e+01 : f32
    %329 = vector.broadcast %cst_128 : f32 to vector<128x1xf32>
    %330 = arith.divf %328, %329 : vector<128x1xf32>
    %331 = vector.broadcast %330 : vector<128x1xf32> to vector<128x16xf32>
    %332 = arith.subf %274, %331 : vector<128x16xf32>
    %333 = arith.mulf %332, %332 : vector<128x16xf32>
    %cst_129 = arith.constant dense<0.000000e+00> : vector<128xf32>
    %334 = vector.multi_reduction <add>, %333, %cst_129 [1] : vector<128x16xf32> to vector<128xf32>
    %335 = vector.shape_cast %334 : vector<128xf32> to vector<128x1xf32>
    %cst_130 = arith.constant 1.600000e+01 : f32
    %336 = vector.broadcast %cst_130 : f32 to vector<128x1xf32>
    %337 = arith.divf %335, %336 : vector<128x1xf32>
    %338 = vector.broadcast %330 : vector<128x1xf32> to vector<128x16xf32>
    %339 = arith.subf %274, %338 : vector<128x16xf32>
    %cst_131 = arith.constant 9.99999974E-6 : f32
    %340 = vector.broadcast %cst_131 : f32 to vector<128x1xf32>
    %341 = arith.addf %337, %340 : vector<128x1xf32>
    %342 = math.rsqrt %341 : vector<128x1xf32>
    %343 = vector.broadcast %342 : vector<128x1xf32> to vector<128x16xf32>
    %344 = arith.mulf %339, %343 : vector<128x16xf32>
    %345 = vector.broadcast %325 : vector<1x16xf32> to vector<128x16xf32>
    %346 = arith.mulf %344, %345 : vector<128x16xf32>
    %347 = vector.broadcast %326 : vector<1x16xf32> to vector<128x16xf32>
    %348 = arith.addf %346, %347 : vector<128x16xf32>
    %349 = arith.truncf %348 : vector<128x16xf32> to vector<128x16xbf16>
    %c0_132 = arith.constant 0 : index
    %c0_133 = arith.constant 0 : index
    %350 = vector.load %arg26[%c0_132, %c0_133] : memref<16x16xbf16, #tpu.memory_space<vmem>>, vector<16x16xbf16>
    %cst_134 = arith.constant dense<0.000000e+00> : vector<128x16xf32>
    %351 = tpu.matmul %349, %350, %cst_134 {dimension_numbers = #tpu.dot_dimension_numbers<[1], [0], [0], [1], [0, 0, 1, 1], [], []>} : vector<128x16xbf16>, vector<16x16xbf16>, vector<128x16xf32> -> vector<128x16xf32>
    %c0_135 = arith.constant 0 : index
    %c0_136 = arith.constant 0 : index
    %352 = vector.load %arg27[%c0_135, %c0_136] : memref<1x16xf32, #tpu.memory_space<vmem>>, vector<1x16xf32>
    %353 = vector.broadcast %352 : vector<1x16xf32> to vector<128x16xf32>
    %354 = arith.addf %351, %353 : vector<128x16xf32>
    %cst_137 = arith.constant 0.000000e+00 : f32
    %355 = vector.broadcast %cst_137 : f32 to vector<128x16xf32>
    %356 = arith.cmpf oge, %354, %355 : vector<128x16xf32>
    %cst_138 = arith.constant 0.00999999977 : f32
    %357 = vector.broadcast %cst_138 : f32 to vector<128x16xf32>
    %358 = arith.mulf %357, %354 : vector<128x16xf32>
    %359 = arith.select %356, %354, %358 : vector<128x16xi1>, vector<128x16xf32>
    %360 = arith.truncf %359 : vector<128x16xf32> to vector<128x16xbf16>
    %c0_139 = arith.constant 0 : index
    %c0_140 = arith.constant 0 : index
    %361 = vector.load %arg28[%c0_139, %c0_140] : memref<16x16xbf16, #tpu.memory_space<vmem>>, vector<16x16xbf16>
    %cst_141 = arith.constant dense<0.000000e+00> : vector<128x16xf32>
    %362 = tpu.matmul %360, %361, %cst_141 {dimension_numbers = #tpu.dot_dimension_numbers<[1], [0], [0], [1], [0, 0, 1, 1], [], []>} : vector<128x16xbf16>, vector<16x16xbf16>, vector<128x16xf32> -> vector<128x16xf32>
    %c0_142 = arith.constant 0 : index
    %c0_143 = arith.constant 0 : index
    %363 = vector.load %arg29[%c0_142, %c0_143] : memref<1x16xf32, #tpu.memory_space<vmem>>, vector<1x16xf32>
    %364 = vector.broadcast %363 : vector<1x16xf32> to vector<128x16xf32>
    %365 = arith.addf %362, %364 : vector<128x16xf32>
    %cst_144 = arith.constant 0.000000e+00 : f32
    %366 = vector.broadcast %cst_144 : f32 to vector<128x16xf32>
    %367 = arith.cmpf oge, %365, %366 : vector<128x16xf32>
    %cst_145 = arith.constant 0.00999999977 : f32
    %368 = vector.broadcast %cst_145 : f32 to vector<128x16xf32>
    %369 = arith.mulf %368, %365 : vector<128x16xf32>
    %370 = arith.select %367, %365, %369 : vector<128x16xi1>, vector<128x16xf32>
    %371 = arith.addf %370, %274 : vector<128x16xf32>
    %372 = vector.shape_cast %371 : vector<128x16xf32> to vector<8x16x16xf32>
    %c0_146 = arith.constant 0 : index
    %c0_147 = arith.constant 0 : index
    %c0_148 = arith.constant 0 : index
    %c0_149 = arith.constant 0 : index
    %373 = vector.load %arg31[%c0_146, %c0_147, %c0_148, %c0_149] : memref<1x8x16x16xf32, #tpu.memory_space<vmem>>, vector<1x8x16x16xf32>
    %374 = vector.shape_cast %373 : vector<1x8x16x16xf32> to vector<8x16x16xf32>
    %375 = vector.shape_cast %372 : vector<8x16x16xf32> to vector<1x8x16x16xf32>
    tpu.vector_store %arg31[%c0_146, %c0_147, %c0_148, %c0_149], %375 {strides = array<i32>} : memref<1x8x16x16xf32, #tpu.memory_space<vmem>>, vector<1x8x16x16xf32>,
    return
  }
  func.func @transform_0(%arg0: i32, %arg1: i32) -> (i32, i32, i32) {
    %c0_i32 = arith.constant 0 : i32
    %c0_i32_0 = arith.constant 0 : i32
    %c0_i32_1 = arith.constant 0 : i32
    return %arg0, %c0_i32, %c0_i32_0 : i32, i32, i32
  }
  func.func @transform_1(%arg0: i32, %arg1: i32) -> (i32, i32, i32, i32) {
    %c0_i32 = arith.constant 0 : i32
    %c0_i32_0 = arith.constant 0 : i32
    %c0_i32_1 = arith.constant 0 : i32
    return %arg0, %arg1, %c0_i32, %c0_i32_0 : i32, i32, i32, i32
  }
  func.func @transform_2(%arg0: i32, %arg1: i32) -> (i32, i32, i32) {
    %c0_i32 = arith.constant 0 : i32
    %c0_i32_0 = arith.constant 0 : i32
    %c0_i32_1 = arith.constant 0 : i32
    return %arg0, %c0_i32, %c0_i32_0 : i32, i32, i32
  }
  func.func @transform_3(%arg0: i32, %arg1: i32) -> (i32, i32) {
    %c0_i32 = arith.constant 0 : i32
    %c0_i32_0 = arith.constant 0 : i32
    %c0_i32_1 = arith.constant 0 : i32
    return %c0_i32, %c0_i32_0 : i32, i32
  }
  func.func @transform_4(%arg0: i32, %arg1: i32) -> (i32, i32) {
    %c0_i32 = arith.constant 0 : i32
    %c0_i32_0 = arith.constant 0 : i32
    %c0_i32_1 = arith.constant 0 : i32
    return %c0_i32, %c0_i32_0 : i32, i32
  }
  func.func @transform_5(%arg0: i32, %arg1: i32) -> (i32, i32) {
    %c0_i32 = arith.constant 0 : i32
    %c0_i32_0 = arith.constant 0 : i32
    %c0_i32_1 = arith.constant 0 : i32
    return %c0_i32, %c0_i32_0 : i32, i32
  }
  func.func @transform_6(%arg0: i32, %arg1: i32) -> (i32, i32) {
    %c0_i32 = arith.constant 0 : i32
    %c0_i32_0 = arith.constant 0 : i32
    %c0_i32_1 = arith.constant 0 : i32
    return %c0_i32, %c0_i32_0 : i32, i32
  }
  func.func @transform_7(%arg0: i32, %arg1: i32) -> (i32, i32) {
    %c0_i32 = arith.constant 0 : i32
    %c0_i32_0 = arith.constant 0 : i32
    %c0_i32_1 = arith.constant 0 : i32
    return %c0_i32, %c0_i32_0 : i32, i32
  }
  func.func @transform_8(%arg0: i32, %arg1: i32) -> (i32, i32) {
    %c0_i32 = arith.constant 0 : i32
    %c0_i32_0 = arith.constant 0 : i32
    %c0_i32_1 = arith.constant 0 : i32
    return %c0_i32, %c0_i32_0 : i32, i32
  }
  func.func @transform_9(%arg0: i32, %arg1: i32) -> (i32, i32) {
    %c0_i32 = arith.constant 0 : i32
    %c0_i32_0 = arith.constant 0 : i32
    %c0_i32_1 = arith.constant 0 : i32
    return %c0_i32, %c0_i32_0 : i32, i32
  }
  func.func @transform_10(%arg0: i32, %arg1: i32) -> (i32, i32) {
    %c0_i32 = arith.constant 0 : i32
    %c0_i32_0 = arith.constant 0 : i32
    %c0_i32_1 = arith.constant 0 : i32
    return %c0_i32, %c0_i32_0 : i32, i32
  }
  func.func @transform_11(%arg0: i32, %arg1: i32) -> (i32, i32) {
    %c0_i32 = arith.constant 0 : i32
    %c0_i32_0 = arith.constant 0 : i32
    %c0_i32_1 = arith.constant 0 : i32
    return %c0_i32, %c0_i32_0 : i32, i32
  }
  func.func @transform_12(%arg0: i32, %arg1: i32) -> (i32, i32) {
    %c0_i32 = arith.constant 0 : i32
    %c0_i32_0 = arith.constant 0 : i32
    %c0_i32_1 = arith.constant 0 : i32
    return %c0_i32, %c0_i32_0 : i32, i32
  }
  func.func @transform_13(%arg0: i32, %arg1: i32) -> (i32, i32) {
    %c0_i32 = arith.constant 0 : i32
    %c0_i32_0 = arith.constant 0 : i32
    %c0_i32_1 = arith.constant 0 : i32
    return %c0_i32, %c0_i32_0 : i32, i32
  }
  func.func @transform_14(%arg0: i32, %arg1: i32) -> (i32, i32) {
    %c0_i32 = arith.constant 0 : i32
    %c0_i32_0 = arith.constant 0 : i32
    %c0_i32_1 = arith.constant 0 : i32
    return %c0_i32, %c0_i32_0 : i32, i32
  }
  func.func @transform_15(%arg0: i32, %arg1: i32) -> (i32, i32) {
    %c0_i32 = arith.constant 0 : i32
    %c0_i32_0 = arith.constant 0 : i32
    %c0_i32_1 = arith.constant 0 : i32
    return %c0_i32, %c0_i32_0 : i32, i32
  }
  func.func @transform_16(%arg0: i32, %arg1: i32) -> (i32, i32) {
    %c0_i32 = arith.constant 0 : i32
    %c0_i32_0 = arith.constant 0 : i32
    %c0_i32_1 = arith.constant 0 : i32
    return %c0_i32, %c0_i32_0 : i32, i32
  }
  func.func @transform_17(%arg0: i32, %arg1: i32) -> (i32, i32) {
    %c0_i32 = arith.constant 0 : i32
    %c0_i32_0 = arith.constant 0 : i32
    %c0_i32_1 = arith.constant 0 : i32
    return %c0_i32, %c0_i32_0 : i32, i32
  }
  func.func @transform_18(%arg0: i32, %arg1: i32) -> (i32, i32) {
    %c0_i32 = arith.constant 0 : i32
    %c0_i32_0 = arith.constant 0 : i32
    %c0_i32_1 = arith.constant 0 : i32
    return %c0_i32, %c0_i32_0 : i32, i32
  }
  func.func @transform_19(%arg0: i32, %arg1: i32) -> (i32, i32) {
    %c0_i32 = arith.constant 0 : i32
    %c0_i32_0 = arith.constant 0 : i32
    %c0_i32_1 = arith.constant 0 : i32
    return %c0_i32, %c0_i32_0 : i32, i32
  }
  func.func @transform_20(%arg0: i32, %arg1: i32) -> (i32, i32) {
    %c0_i32 = arith.constant 0 : i32
    %c0_i32_0 = arith.constant 0 : i32
    %c0_i32_1 = arith.constant 0 : i32
    return %c0_i32, %c0_i32_0 : i32, i32
  }
  func.func @transform_21(%arg0: i32, %arg1: i32) -> (i32, i32) {
    %c0_i32 = arith.constant 0 : i32
    %c0_i32_0 = arith.constant 0 : i32
    %c0_i32_1 = arith.constant 0 : i32
    return %c0_i32, %c0_i32_0 : i32, i32
  }
  func.func @transform_22(%arg0: i32, %arg1: i32) -> (i32, i32) {
    %c0_i32 = arith.constant 0 : i32
    %c0_i32_0 = arith.constant 0 : i32
    %c0_i32_1 = arith.constant 0 : i32
    return %c0_i32, %c0_i32_0 : i32, i32
  }
  func.func @transform_23(%arg0: i32, %arg1: i32) -> (i32, i32) {
    %c0_i32 = arith.constant 0 : i32
    %c0_i32_0 = arith.constant 0 : i32
    %c0_i32_1 = arith.constant 0 : i32
    return %c0_i32, %c0_i32_0 : i32, i32
  }
  func.func @transform_24(%arg0: i32, %arg1: i32) -> (i32, i32) {
    %c0_i32 = arith.constant 0 : i32
    %c0_i32_0 = arith.constant 0 : i32
    %c0_i32_1 = arith.constant 0 : i32
    return %c0_i32, %c0_i32_0 : i32, i32
  }
  func.func @transform_25(%arg0: i32, %arg1: i32) -> (i32, i32) {
    %c0_i32 = arith.constant 0 : i32
    %c0_i32_0 = arith.constant 0 : i32
    %c0_i32_1 = arith.constant 0 : i32
    return %c0_i32, %c0_i32_0 : i32, i32
  }
  func.func @transform_26(%arg0: i32, %arg1: i32) -> (i32, i32) {
    %c0_i32 = arith.constant 0 : i32
    %c0_i32_0 = arith.constant 0 : i32
    %c0_i32_1 = arith.constant 0 : i32
    return %c0_i32, %c0_i32_0 : i32, i32
  }
  func.func @transform_27(%arg0: i32, %arg1: i32) -> (i32, i32) {
    %c0_i32 = arith.constant 0 : i32
    %c0_i32_0 = arith.constant 0 : i32
    %c0_i32_1 = arith.constant 0 : i32
    return %c0_i32, %c0_i32_0 : i32, i32
  }
  func.func @transform_28(%arg0: i32, %arg1: i32) -> (i32, i32, i32) {
    %c0_i32 = arith.constant 0 : i32
    %c0_i32_0 = arith.constant 0 : i32
    return %arg0, %arg1, %c0_i32 : i32, i32, i32
  }
  func.func @transform_29(%arg0: i32, %arg1: i32) -> (i32, i32, i32, i32) {
    %c0_i32 = arith.constant 0 : i32
    %c0_i32_0 = arith.constant 0 : i32
    %c0_i32_1 = arith.constant 0 : i32
    return %arg0, %arg1, %c0_i32, %c0_i32_0 : i32, i32, i32, i32
  }
}

</mosaic_0001>

<llo_original>
// kernel: tpu_custom_call.1
$region0: #{tpu_custom_call.1}
  #allocation0 [shape = 'u32[]', space=smem, size = 0x4, offset = 0x4, fixed_abs, tag = 'smem constant byte address 0x4 - core index']
  #allocation1 [shape = 'u32[144,128]{1,0:T(1,128)}', space=vmem, size = 0x12000, scoped, tag = 'internal scratch']
  %s0 = inlined_call_operand.smem [shape: u32[30], index: -1, kind: input, shape index: {}]
  %s1 = sld [smem:[%s0]]
  %s2 = scalar_lea.smem %s0, 1
  %s3 = sld [smem:[%s2]]
  %s4 = scalar_lea.smem %s0, 2
  %s5 = sld [smem:[%s4]]
  %s6 = scalar_lea.smem %s0, 3
  %s7 = sld [smem:[%s6]]
  %s8 = scalar_lea.smem %s0, 4
  %s9 = sld [smem:[%s8]]
  %s10 = scalar_lea.smem %s0, 5
  %s11 = sld [smem:[%s10]]
  %s12 = scalar_lea.smem %s0, 6
  %s13 = sld [smem:[%s12]]
  %s14 = scalar_lea.smem %s0, 7
  %s15 = sld [smem:[%s14]]
  %s16 = scalar_lea.smem %s0, 8
  %s17 = sld [smem:[%s16]]
  %s18 = scalar_lea.smem %s0, 9
  %s19 = sld [smem:[%s18]]
  %s20 = scalar_lea.smem %s0, 10
  %s21 = sld [smem:[%s20]]
  %s22 = scalar_lea.smem %s0, 11
  %s23 = sld [smem:[%s22]]
  %s24 = scalar_lea.smem %s0, 12
  %s25 = sld [smem:[%s24]]
  %s26 = scalar_lea.smem %s0, 13
  %s27 = sld [smem:[%s26]]
  %s28 = scalar_lea.smem %s0, 14
  %s29 = sld [smem:[%s28]]
  %s30 = scalar_lea.smem %s0, 15
  %s31 = sld [smem:[%s30]]
  %s32 = scalar_lea.smem %s0, 16
  %s33 = sld [smem:[%s32]]
  %s34 = scalar_lea.smem %s0, 17
  %s35 = sld [smem:[%s34]]
  %s36 = scalar_lea.smem %s0, 18
  %s37 = sld [smem:[%s36]]
  %s38 = scalar_lea.smem %s0, 19
  %s39 = sld [smem:[%s38]]
  %s40 = scalar_lea.smem %s0, 20
  %s41 = sld [smem:[%s40]]
  %s42 = scalar_lea.smem %s0, 21
  %s43 = sld [smem:[%s42]]
  %s44 = scalar_lea.smem %s0, 22
  %s45 = sld [smem:[%s44]]
  %s46 = scalar_lea.smem %s0, 23
  %s47 = sld [smem:[%s46]]
  %s48 = scalar_lea.smem %s0, 24
  %s49 = sld [smem:[%s48]]
  %s50 = scalar_lea.smem %s0, 25
  %s51 = sld [smem:[%s50]]
  %s52 = scalar_lea.smem %s0, 26
  %s53 = sld [smem:[%s52]]
  %s54 = scalar_lea.smem %s0, 27
  %s55 = sld [smem:[%s54]]
  %s56 = scalar_lea.smem %s0, 28
  %s57 = sld [smem:[%s56]]
  %s58 = scalar_lea.smem %s0, 29
  %s59 = sld [smem:[%s58]]
  %60 = xla_tuple %s57, %s59
  %s61 = sld [smem:[#allocation0]]
  $region213: #{tpu_custom_call.1} parent=0
    _
  %s63 = ssub.s32 1, %s61
  %s64 = scalar_select 0, %s63, %s61
  $region1: #{tpu_custom_call.1} parent=0
    #allocation2 [shape = 'u8[16384]{0}', space=vmem, size = 0x4000, scoped, tag = 'input window, operand 0']
    #allocation3 [shape = 's32[2]{0}', space=sflag, size = 0x8, scoped, tag = 'scoped memory for tpu_custom_call.1']
    #allocation4 [shape = 's32[2]{0}', space=sflag, size = 0x8, scoped, tag = 'scoped memory for tpu_custom_call.1']
    #allocation5 [shape = 'u8[131072]{0}', space=vmem, size = 0x20000, scoped, tag = 'input window, operand 1']
    #allocation6 [shape = 's32[2]{0}', space=sflag, size = 0x8, scoped, tag = 'scoped memory for tpu_custom_call.1']
    #allocation7 [shape = 'u8[1024]{0}', space=vmem, size = 0x400, scoped, tag = 'input window, operand 2']
    #allocation8 [shape = 'u8[512]{0}', space=vmem, size = 0x400, scoped, tag = 'input window, operand 3, single buffered']
    #allocation9 [shape = 's32[1]{0}', space=sflag, size = 0x4, scoped, tag = 'scoped memory for tpu_custom_call.1']
    #allocation10 [shape = 'u8[512]{0}', space=vmem, size = 0x400, scoped, tag = 'input window, operand 4, single buffered']
    #allocation11 [shape = 'u8[512]{0}', space=vmem, size = 0x400, scoped, tag = 'input window, operand 5, single buffered']
    #allocation12 [shape = 's32[1]{0}', space=sflag, size = 0x4, scoped, tag = 'scoped memory for tpu_custom_call.1']
    #allocation13 [shape = 'u8[512]{0}', space=vmem, size = 0x400, scoped, tag = 'input window, operand 6, single buffered']
    #allocation14 [shape = 'u8[4096]{0}', space=vmem, size = 0x1000, scoped, tag = 'input window, operand 9, single buffered']
    #allocation15 [shape = 's32[1]{0}', space=sflag, size = 0x4, scoped, tag = 'scoped memory for tpu_custom_call.1']
    #allocation16 [shape = 'u8[512]{0}', space=vmem, size = 0x400, scoped, tag = 'input window, operand 11, single buffered']
    #allocation17 [shape = 'u8[512]{0}', space=vmem, size = 0x400, scoped, tag = 'input window, operand 13, single buffered']
    #allocation18 [shape = 's32[1]{0}', space=sflag, size = 0x4, scoped, tag = 'scoped memory for tpu_custom_call.1']
    #allocation19 [shape = 'u8[512]{0}', space=vmem, size = 0x400, scoped, tag = 'input window, operand 15, single buffered']
    #allocation20 [shape = 'u8[512]{0}', space=vmem, size = 0x400, scoped, tag = 'input window, operand 19, single buffered']
    #allocation21 [shape = 's32[1]{0}', space=sflag, size = 0x4, scoped, tag = 'scoped memory for tpu_custom_call.1']
    #allocation22 [shape = 'u8[512]{0}', space=vmem, size = 0x400, scoped, tag = 'input window, operand 21, single buffered']
    #allocation23 [shape = 'u8[512]{0}', space=vmem, size = 0x400, scoped, tag = 'input window, operand 22, single buffered']
    #allocation24 [shape = 's32[1]{0}', space=sflag, size = 0x4, scoped, tag = 'scoped memory for tpu_custom_call.1']
    #allocation25 [shape = 'u8[512]{0}', space=vmem, size = 0x400, scoped, tag = 'input window, operand 23, single buffered']
    #allocation26 [shape = 'u8[8192]{0}', space=vmem, size = 0x2000, scoped, tag = 'output window, operand 0']
    #allocation27 [shape = 'u8[131072]{0}', space=vmem, size = 0x20000, scoped, tag = 'output window, operand 1']
    #allocation28 [shape = 's32[2]{0}', space=sflag, size = 0x8, scoped, tag = 'scoped memory for tpu_custom_call.1']
    %65 = vsyncpa [#allocation3], 0
    %s66 = scalar_lea.sflag [#allocation3], 1
    %67 = vsyncpa %s66, 0
    %68 = vsyncpa [#allocation6], 0
    %s69 = scalar_lea.sflag [#allocation6], 1
    %70 = vsyncpa %s69, 0
    %71 = vsyncpa [#allocation9], 0
    %72 = vsyncpa [#allocation12], 0
    %73 = vsyncpa [#allocation15], 0
    %74 = vsyncpa [#allocation18], 0
    %75 = vsyncpa [#allocation21], 0
    %76 = vsyncpa [#allocation24], 0
    %77 = vsyncpa [#allocation4], 0
    %s78 = scalar_lea.sflag [#allocation4], 1
    %79 = vsyncpa %s78, 0
    %80 = vsyncpa [#allocation28], 0
    %s81 = scalar_lea.sflag [#allocation28], 1
    %82 = vsyncpa %s81, 0
    loop: start=0, step=1, limit=6
    $region2: #{tpu_custom_call.1} parent=1 // loop_pre_header
      _
    $region3: #{tpu_custom_call.1} parent=1 // loop_header
      %s84 = sphi 0, %s88
      %p85 = scmp.ge.s32.totalorder %s84, 6
      %s91 = sphi 0, %s103
      %s92 = sphi 0, %s99
      %s93 = sphi 0, %s91
      %s94 = sphi 0, %s92
      %s95 = sphi 0, %s93
      %s96 = sphi 0, %s94
      %s106 = sphi 0, %s108
      %s109 = sphi 0, %s106
      %s110 = sphi 0, %s109
      %s126 = sphi 0, %s110
      %s134 = sphi 0, %s136
      %s137 = sphi 0, %s134
      %s138 = sphi 0, %s137
      %s154 = sphi 0, %s138
      %s160 = sphi 0, %s162
      %s163 = sphi 0, %s160
      %s164 = sphi 0, %s163
      %s180 = sphi 0, %s164
      %s184 = sphi 0, %s184
      %s186 = sphi 0, %s184
      %s187 = sphi 0, %s186
      %s201 = sphi 0, %s187
      %s205 = sphi 0, %s205
      %s207 = sphi 0, %s205
      %s208 = sphi 0, %s207
      %s222 = sphi 0, %s208
      %s226 = sphi 0, %s226
      %s228 = sphi 0, %s226
      %s229 = sphi 0, %s228
      %s243 = sphi 0, %s229
      %s247 = sphi 0, %s247
      %s249 = sphi 0, %s247
      %s250 = sphi 0, %s249
      %s264 = sphi 0, %s250
      %s268 = sphi 0, %s268
      %s270 = sphi 0, %s268
      %s271 = sphi 0, %s270
      %s285 = sphi 0, %s271
      %s289 = sphi 0, %s289
      %s291 = sphi 0, %s289
      %s292 = sphi 0, %s291
      %s306 = sphi 0, %s292
      %s310 = sphi 0, %s310
      %s312 = sphi 0, %s310
      %s313 = sphi 0, %s312
      %s327 = sphi 0, %s313
      %s331 = sphi 0, %s331
      %s333 = sphi 0, %s331
      %s334 = sphi 0, %s333
      %s348 = sphi 0, %s334
      %s352 = sphi 0, %s352
      %s354 = sphi 0, %s352
      %s355 = sphi 0, %s354
      %s369 = sphi 0, %s355
      %s373 = sphi 0, %s373
      %s375 = sphi 0, %s373
      %s376 = sphi 0, %s375
      %s390 = sphi 0, %s376
      %s394 = sphi 0, %s394
      %s396 = sphi 0, %s394
      %s397 = sphi 0, %s396
      %s411 = sphi 0, %s397
      %s415 = sphi 0, %s415
      %s417 = sphi 0, %s415
      %s418 = sphi 0, %s417
      %s432 = sphi 0, %s418
      %s436 = sphi 0, %s436
      %s438 = sphi 0, %s436
      %s439 = sphi 0, %s438
      %s453 = sphi 0, %s439
      %s457 = sphi 0, %s457
      %s459 = sphi 0, %s457
      %s460 = sphi 0, %s459
      %s474 = sphi 0, %s460
      %s478 = sphi 0, %s478
      %s480 = sphi 0, %s478
      %s481 = sphi 0, %s480
      %s495 = sphi 0, %s481
      %s499 = sphi 0, %s499
      %s501 = sphi 0, %s499
      %s502 = sphi 0, %s501
      %s516 = sphi 0, %s502
      %s520 = sphi 0, %s520
      %s522 = sphi 0, %s520
      %s523 = sphi 0, %s522
      %s537 = sphi 0, %s523
      %s541 = sphi 0, %s541
      %s543 = sphi 0, %s541
      %s544 = sphi 0, %s543
      %s558 = sphi 0, %s544
      %s562 = sphi 0, %s562
      %s564 = sphi 0, %s562
      %s565 = sphi 0, %s564
      %s579 = sphi 0, %s565
      %s583 = sphi 0, %s583
      %s585 = sphi 0, %s583
      %s586 = sphi 0, %s585
      %s600 = sphi 0, %s586
      %s604 = sphi 0, %s604
      %s606 = sphi 0, %s604
      %s607 = sphi 0, %s606
      %s621 = sphi 0, %s607
      %s625 = sphi 0, %s625
      %s627 = sphi 0, %s625
      %s628 = sphi 0, %s627
      %s642 = sphi 0, %s628
      %s646 = sphi 0, %s646
      %s648 = sphi 0, %s646
      %s649 = sphi 0, %s648
      %s663 = sphi 0, %s649
      %s667 = sphi 0, %s667
      %s669 = sphi 0, %s667
      %s670 = sphi 0, %s669
      %s684 = sphi 0, %s670
      %s688 = sphi 0, %s688
      %s690 = sphi 0, %s688
      %s691 = sphi 0, %s690
      %s705 = sphi 0, %s691
      %s713 = sphi 0, %s715
      %s716 = sphi 0, %s713
      %s717 = sphi 0, %s716
      %s733 = sphi 0, %s717
      %s741 = sphi 0, %s743
      %s744 = sphi 0, %s741
      %s745 = sphi 0, %s744
      %s761 = sphi 0, %s745
    $region4: #{tpu_custom_call.1} parent=1 // loop_header_branch
      %87 = sbr.rel (%p85) target = $region8
    $region5: #{tpu_custom_call.1} parent=1 // loop_body
      %s89 = ssub.s32 %s84, 1
      %s90 = ssub.s32 %s84, 2
      %s97 = sadd.s32 1, %s92
      %p98 = scmp.ge.s32.totalorder %s97, 2
      %s99 = scalar_select %p98, 0, %s97
      %s100 = sadd.s32 1, %s91
      %s101 = scalar_select %p98, %s100, %s91
      %p102 = scmp.ge.s32.totalorder %s101, 2
      %s103 = scalar_select %p102, 0, %s101
      %s104 = ssub.s32 %s91, %s103
      %p105 = scmp.eq.s32.totalorder %s104, 0
      %s107 = sadd.s32 %s106, 1
      %s108 = scalar_select %p105, %s106, %s107
      %p111 = pneg %p105
      %p112 = scmp.eq.s32.totalorder %s84, 3
      %p113 = por %p111, %p112
      %p114 = scmp.ne.s32.totalorder %s106, %s109
      %p115 = scmp.eq.s32.totalorder %s84, 0
      %p116 = por %p114, %p115
      %p117 = scmp.ne.s32.totalorder %s106, %s109
      %p118 = scmp.eq.s32.totalorder %s89, 3
      %p119 = por %p117, %p118
      %p120 = scmp.ne.s32.totalorder %s109, %s110
      %p121 = scmp.eq.s32.totalorder %s89, 0
      %p122 = por %p120, %p121
      %p123 = scmp.ne.s32.totalorder %s109, %s110
      %p124 = scmp.eq.s32.totalorder %s90, 3
      %p125 = por %p123, %p124
      %p127 = scmp.ne.s32.totalorder %s110, %s126
      %p128 = scmp.eq.s32.totalorder %s90, 0
      %p129 = por %p127, %p128
      %s130 = ssub.s32 %s91, %s103
      %s131 = ssub.s32 %s92, %s99
      %s132 = sor.u32 %s130, %s131
      %p133 = scmp.eq.s32.totalorder %s132, 0
      %s135 = sadd.s32 %s134, 1
      %s136 = scalar_select %p133, %s134, %s135
      %p139 = pneg %p133
      %p140 = scmp.eq.s32.totalorder %s84, 3
      %p141 = por %p139, %p140
      %p142 = scmp.ne.s32.totalorder %s134, %s137
      %p143 = scmp.eq.s32.totalorder %s84, 0
      %p144 = por %p142, %p143
      %p145 = scmp.ne.s32.totalorder %s134, %s137
      %p146 = scmp.eq.s32.totalorder %s89, 3
      %p147 = por %p145, %p146
      %p148 = scmp.ne.s32.totalorder %s137, %s138
      %p149 = scmp.eq.s32.totalorder %s89, 0
      %p150 = por %p148, %p149
      %p151 = scmp.ne.s32.totalorder %s137, %s138
      %p152 = scmp.eq.s32.totalorder %s90, 3
      %p153 = por %p151, %p152
      %p155 = scmp.ne.s32.totalorder %s138, %s154
      %p156 = scmp.eq.s32.totalorder %s90, 0
      %p157 = por %p155, %p156
      %s158 = ssub.s32 %s91, %s103
      %p159 = scmp.eq.s32.totalorder %s158, 0
      %s161 = sadd.s32 %s160, 1
      %s162 = scalar_select %p159, %s160, %s161
      %p165 = pneg %p159
      %p166 = scmp.eq.s32.totalorder %s84, 3
      %p167 = por %p165, %p166
      %p168 = scmp.ne.s32.totalorder %s160, %s163
      %p169 = scmp.eq.s32.totalorder %s84, 0
      %p170 = por %p168, %p169
      %p171 = scmp.ne.s32.totalorder %s160, %s163
      %p172 = scmp.eq.s32.totalorder %s89, 3
      %p173 = por %p171, %p172
      %p174 = scmp.ne.s32.totalorder %s163, %s164
      %p175 = scmp.eq.s32.totalorder %s89, 0
      %p176 = por %p174, %p175
      %p177 = scmp.ne.s32.totalorder %s163, %s164
      %p178 = scmp.eq.s32.totalorder %s90, 3
      %p179 = por %p177, %p178
      %p181 = scmp.ne.s32.totalorder %s164, %s180
      %p182 = scmp.eq.s32.totalorder %s90, 0
      %p183 = por %p181, %p182
      %s185 = sadd.s32 %s184, 1
      %p188 = scmp.eq.s32.totalorder %s84, 3
      %p189 = scmp.ne.s32.totalorder %s184, %s186
      %p190 = scmp.eq.s32.totalorder %s84, 0
      %p191 = por %p189, %p190
      %p192 = scmp.ne.s32.totalorder %s184, %s186
      %p193 = scmp.eq.s32.totalorder %s89, 3
      %p194 = por %p192, %p193
      %p195 = scmp.ne.s32.totalorder %s186, %s187
      %p196 = scmp.eq.s32.totalorder %s89, 0
      %p197 = por %p195, %p196
      %p198 = scmp.ne.s32.totalorder %s186, %s187
      %p199 = scmp.eq.s32.totalorder %s90, 3
      %p200 = por %p198, %p199
      %p202 = scmp.ne.s32.totalorder %s187, %s201
      %p203 = scmp.eq.s32.totalorder %s90, 0
      %p204 = por %p202, %p203
      %s206 = sadd.s32 %s205, 1
      %p209 = scmp.eq.s32.totalorder %s84, 3
      %p210 = scmp.ne.s32.totalorder %s205, %s207
      %p211 = scmp.eq.s32.totalorder %s84, 0
      %p212 = por %p210, %p211
      %p213 = scmp.ne.s32.totalorder %s205, %s207
      %p214 = scmp.eq.s32.totalorder %s89, 3
      %p215 = por %p213, %p214
      %p216 = scmp.ne.s32.totalorder %s207, %s208
      %p217 = scmp.eq.s32.totalorder %s89, 0
      %p218 = por %p216, %p217
      %p219 = scmp.ne.s32.totalorder %s207, %s208
      %p220 = scmp.eq.s32.totalorder %s90, 3
      %p221 = por %p219, %p220
      %p223 = scmp.ne.s32.totalorder %s208, %s222
      %p224 = scmp.eq.s32.totalorder %s90, 0
      %p225 = por %p223, %p224
      %s227 = sadd.s32 %s226, 1
      %p230 = scmp.eq.s32.totalorder %s84, 3
      %p231 = scmp.ne.s32.totalorder %s226, %s228
      %p232 = scmp.eq.s32.totalorder %s84, 0
      %p233 = por %p231, %p232
      %p234 = scmp.ne.s32.totalorder %s226, %s228
      %p235 = scmp.eq.s32.totalorder %s89, 3
      %p236 = por %p234, %p235
      %p237 = scmp.ne.s32.totalorder %s228, %s229
      %p238 = scmp.eq.s32.totalorder %s89, 0
      %p239 = por %p237, %p238
      %p240 = scmp.ne.s32.totalorder %s228, %s229
      %p241 = scmp.eq.s32.totalorder %s90, 3
      %p242 = por %p240, %p241
      %p244 = scmp.ne.s32.totalorder %s229, %s243
      %p245 = scmp.eq.s32.totalorder %s90, 0
      %p246 = por %p244, %p245
      %s248 = sadd.s32 %s247, 1
      %p251 = scmp.eq.s32.totalorder %s84, 3
      %p252 = scmp.ne.s32.totalorder %s247, %s249
      %p253 = scmp.eq.s32.totalorder %s84, 0
      %p254 = por %p252, %p253
      %p255 = scmp.ne.s32.totalorder %s247, %s249
      %p256 = scmp.eq.s32.totalorder %s89, 3
      %p257 = por %p255, %p256
      %p258 = scmp.ne.s32.totalorder %s249, %s250
      %p259 = scmp.eq.s32.totalorder %s89, 0
      %p260 = por %p258, %p259
      %p261 = scmp.ne.s32.totalorder %s249, %s250
      %p262 = scmp.eq.s32.totalorder %s90, 3
      %p263 = por %p261, %p262
      %p265 = scmp.ne.s32.totalorder %s250, %s264
      %p266 = scmp.eq.s32.totalorder %s90, 0
      %p267 = por %p265, %p266
      %s269 = sadd.s32 %s268, 1
      %p272 = scmp.eq.s32.totalorder %s84, 3
      %p273 = scmp.ne.s32.totalorder %s268, %s270
      %p274 = scmp.eq.s32.totalorder %s84, 0
      %p275 = por %p273, %p274
      %p276 = scmp.ne.s32.totalorder %s268, %s270
      %p277 = scmp.eq.s32.totalorder %s89, 3
      %p278 = por %p276, %p277
      %p279 = scmp.ne.s32.totalorder %s270, %s271
      %p280 = scmp.eq.s32.totalorder %s89, 0
      %p281 = por %p279, %p280
      %p282 = scmp.ne.s32.totalorder %s270, %s271
      %p283 = scmp.eq.s32.totalorder %s90, 3
      %p284 = por %p282, %p283
      %p286 = scmp.ne.s32.totalorder %s271, %s285
      %p287 = scmp.eq.s32.totalorder %s90, 0
      %p288 = por %p286, %p287
      %s290 = sadd.s32 %s289, 1
      %p293 = scmp.eq.s32.totalorder %s84, 3
      %p294 = scmp.ne.s32.totalorder %s289, %s291
      %p295 = scmp.eq.s32.totalorder %s84, 0
      %p296 = por %p294, %p295
      %p297 = scmp.ne.s32.totalorder %s289, %s291
      %p298 = scmp.eq.s32.totalorder %s89, 3
      %p299 = por %p297, %p298
      %p300 = scmp.ne.s32.totalorder %s291, %s292
      %p301 = scmp.eq.s32.totalorder %s89, 0
      %p302 = por %p300, %p301
      %p303 = scmp.ne.s32.totalorder %s291, %s292
      %p304 = scmp.eq.s32.totalorder %s90, 3
      %p305 = por %p303, %p304
      %p307 = scmp.ne.s32.totalorder %s292, %s306
      %p308 = scmp.eq.s32.totalorder %s90, 0
      %p309 = por %p307, %p308
      %s311 = sadd.s32 %s310, 1
      %p314 = scmp.eq.s32.totalorder %s84, 3
      %p315 = scmp.ne.s32.totalorder %s310, %s312
      %p316 = scmp.eq.s32.totalorder %s84, 0
      %p317 = por %p315, %p316
      %p318 = scmp.ne.s32.totalorder %s310, %s312
      %p319 = scmp.eq.s32.totalorder %s89, 3
      %p320 = por %p318, %p319
      %p321 = scmp.ne.s32.totalorder %s312, %s313
      %p322 = scmp.eq.s32.totalorder %s89, 0
      %p323 = por %p321, %p322
      %p324 = scmp.ne.s32.totalorder %s312, %s313
      %p325 = scmp.eq.s32.totalorder %s90, 3
      %p326 = por %p324, %p325
      %p328 = scmp.ne.s32.totalorder %s313, %s327
      %p329 = scmp.eq.s32.totalorder %s90, 0
      %p330 = por %p328, %p329
      %s332 = sadd.s32 %s331, 1
      %p335 = scmp.eq.s32.totalorder %s84, 3
      %p336 = scmp.ne.s32.totalorder %s331, %s333
      %p337 = scmp.eq.s32.totalorder %s84, 0
      %p338 = por %p336, %p337
      %p339 = scmp.ne.s32.totalorder %s331, %s333
      %p340 = scmp.eq.s32.totalorder %s89, 3
      %p341 = por %p339, %p340
      %p342 = scmp.ne.s32.totalorder %s333, %s334
      %p343 = scmp.eq.s32.totalorder %s89, 0
      %p344 = por %p342, %p343
      %p345 = scmp.ne.s32.totalorder %s333, %s334
      %p346 = scmp.eq.s32.totalorder %s90, 3
      %p347 = por %p345, %p346
      %p349 = scmp.ne.s32.totalorder %s334, %s348
      %p350 = scmp.eq.s32.totalorder %s90, 0
      %p351 = por %p349, %p350
      %s353 = sadd.s32 %s352, 1
      %p356 = scmp.eq.s32.totalorder %s84, 3
      %p357 = scmp.ne.s32.totalorder %s352, %s354
      %p358 = scmp.eq.s32.totalorder %s84, 0
      %p359 = por %p357, %p358
      %p360 = scmp.ne.s32.totalorder %s352, %s354
      %p361 = scmp.eq.s32.totalorder %s89, 3
      %p362 = por %p360, %p361
      %p363 = scmp.ne.s32.totalorder %s354, %s355
      %p364 = scmp.eq.s32.totalorder %s89, 0
      %p365 = por %p363, %p364
      %p366 = scmp.ne.s32.totalorder %s354, %s355
      %p367 = scmp.eq.s32.totalorder %s90, 3
      %p368 = por %p366, %p367
      %p370 = scmp.ne.s32.totalorder %s355, %s369
      %p371 = scmp.eq.s32.totalorder %s90, 0
      %p372 = por %p370, %p371
      %s374 = sadd.s32 %s373, 1
      %p377 = scmp.eq.s32.totalorder %s84, 3
      %p378 = scmp.ne.s32.totalorder %s373, %s375
      %p379 = scmp.eq.s32.totalorder %s84, 0
      %p380 = por %p378, %p379
      %p381 = scmp.ne.s32.totalorder %s373, %s375
      %p382 = scmp.eq.s32.totalorder %s89, 3
      %p383 = por %p381, %p382
      %p384 = scmp.ne.s32.totalorder %s375, %s376
      %p385 = scmp.eq.s32.totalorder %s89, 0
      %p386 = por %p384, %p385
      %p387 = scmp.ne.s32.totalorder %s375, %s376
      %p388 = scmp.eq.s32.totalorder %s90, 3
      %p389 = por %p387, %p388
      %p391 = scmp.ne.s32.totalorder %s376, %s390
      %p392 = scmp.eq.s32.totalorder %s90, 0
      %p393 = por %p391, %p392
      %s395 = sadd.s32 %s394, 1
      %p398 = scmp.eq.s32.totalorder %s84, 3
      %p399 = scmp.ne.s32.totalorder %s394, %s396
      %p400 = scmp.eq.s32.totalorder %s84, 0
      %p401 = por %p399, %p400
      %p402 = scmp.ne.s32.totalorder %s394, %s396
      %p403 = scmp.eq.s32.totalorder %s89, 3
      %p404 = por %p402, %p403
      %p405 = scmp.ne.s32.totalorder %s396, %s397
      %p406 = scmp.eq.s32.totalorder %s89, 0
      %p407 = por %p405, %p406
      %p408 = scmp.ne.s32.totalorder %s396, %s397
      %p409 = scmp.eq.s32.totalorder %s90, 3
      %p410 = por %p408, %p409
      %p412 = scmp.ne.s32.totalorder %s397, %s411
      %p413 = scmp.eq.s32.totalorder %s90, 0
      %p414 = por %p412, %p413
      %s416 = sadd.s32 %s415, 1
      %p419 = scmp.eq.s32.totalorder %s84, 3
      %p420 = scmp.ne.s32.totalorder %s415, %s417
      %p421 = scmp.eq.s32.totalorder %s84, 0
      %p422 = por %p420, %p421
      %p423 = scmp.ne.s32.totalorder %s415, %s417
      %p424 = scmp.eq.s32.totalorder %s89, 3
      %p425 = por %p423, %p424
      %p426 = scmp.ne.s32.totalorder %s417, %s418
      %p427 = scmp.eq.s32.totalorder %s89, 0
      %p428 = por %p426, %p427
      %p429 = scmp.ne.s32.totalorder %s417, %s418
      %p430 = scmp.eq.s32.totalorder %s90, 3
      %p431 = por %p429, %p430
      %p433 = scmp.ne.s32.totalorder %s418, %s432
      %p434 = scmp.eq.s32.totalorder %s90, 0
      %p435 = por %p433, %p434
      %s437 = sadd.s32 %s436, 1
      %p440 = scmp.eq.s32.totalorder %s84, 3
      %p441 = scmp.ne.s32.totalorder %s436, %s438
      %p442 = scmp.eq.s32.totalorder %s84, 0
      %p443 = por %p441, %p442
      %p444 = scmp.ne.s32.totalorder %s436, %s438
      %p445 = scmp.eq.s32.totalorder %s89, 3
      %p446 = por %p444, %p445
      %p447 = scmp.ne.s32.totalorder %s438, %s439
      %p448 = scmp.eq.s32.totalorder %s89, 0
      %p449 = por %p447, %p448
      %p450 = scmp.ne.s32.totalorder %s438, %s439
      %p451 = scmp.eq.s32.totalorder %s90, 3
      %p452 = por %p450, %p451
      %p454 = scmp.ne.s32.totalorder %s439, %s453
      %p455 = scmp.eq.s32.totalorder %s90, 0
      %p456 = por %p454, %p455
      %s458 = sadd.s32 %s457, 1
      %p461 = scmp.eq.s32.totalorder %s84, 3
      %p462 = scmp.ne.s32.totalorder %s457, %s459
      %p463 = scmp.eq.s32.totalorder %s84, 0
      %p464 = por %p462, %p463
      %p465 = scmp.ne.s32.totalorder %s457, %s459
      %p466 = scmp.eq.s32.totalorder %s89, 3
      %p467 = por %p465, %p466
      %p468 = scmp.ne.s32.totalorder %s459, %s460
      %p469 = scmp.eq.s32.totalorder %s89, 0
      %p470 = por %p468, %p469
      %p471 = scmp.ne.s32.totalorder %s459, %s460
      %p472 = scmp.eq.s32.totalorder %s90, 3
      %p473 = por %p471, %p472
      %p475 = scmp.ne.s32.totalorder %s460, %s474
      %p476 = scmp.eq.s32.totalorder %s90, 0
      %p477 = por %p475, %p476
      %s479 = sadd.s32 %s478, 1
      %p482 = scmp.eq.s32.totalorder %s84, 3
      %p483 = scmp.ne.s32.totalorder %s478, %s480
      %p484 = scmp.eq.s32.totalorder %s84, 0
      %p485 = por %p483, %p484
      %p486 = scmp.ne.s32.totalorder %s478, %s480
      %p487 = scmp.eq.s32.totalorder %s89, 3
      %p488 = por %p486, %p487
      %p489 = scmp.ne.s32.totalorder %s480, %s481
      %p490 = scmp.eq.s32.totalorder %s89, 0
      %p491 = por %p489, %p490
      %p492 = scmp.ne.s32.totalorder %s480, %s481
      %p493 = scmp.eq.s32.totalorder %s90, 3
      %p494 = por %p492, %p493
      %p496 = scmp.ne.s32.totalorder %s481, %s495
      %p497 = scmp.eq.s32.totalorder %s90, 0
      %p498 = por %p496, %p497
      %s500 = sadd.s32 %s499, 1
      %p503 = scmp.eq.s32.totalorder %s84, 3
      %p504 = scmp.ne.s32.totalorder %s499, %s501
      %p505 = scmp.eq.s32.totalorder %s84, 0
      %p506 = por %p504, %p505
      %p507 = scmp.ne.s32.totalorder %s499, %s501
      %p508 = scmp.eq.s32.totalorder %s89, 3
      %p509 = por %p507, %p508
      %p510 = scmp.ne.s32.totalorder %s501, %s502
      %p511 = scmp.eq.s32.totalorder %s89, 0
      %p512 = por %p510, %p511
      %p513 = scmp.ne.s32.totalorder %s501, %s502
      %p514 = scmp.eq.s32.totalorder %s90, 3
      %p515 = por %p513, %p514
      %p517 = scmp.ne.s32.totalorder %s502, %s516
      %p518 = scmp.eq.s32.totalorder %s90, 0
      %p519 = por %p517, %p518
      %s521 = sadd.s32 %s520, 1
      %p524 = scmp.eq.s32.totalorder %s84, 3
      %p525 = scmp.ne.s32.totalorder %s520, %s522
      %p526 = scmp.eq.s32.totalorder %s84, 0
      %p527 = por %p525, %p526
      %p528 = scmp.ne.s32.totalorder %s520, %s522
      %p529 = scmp.eq.s32.totalorder %s89, 3
      %p530 = por %p528, %p529
      %p531 = scmp.ne.s32.totalorder %s522, %s523
      %p532 = scmp.eq.s32.totalorder %s89, 0
      %p533 = por %p531, %p532
      %p534 = scmp.ne.s32.totalorder %s522, %s523
      %p535 = scmp.eq.s32.totalorder %s90, 3
      %p536 = por %p534, %p535
      %p538 = scmp.ne.s32.totalorder %s523, %s537
      %p539 = scmp.eq.s32.totalorder %s90, 0
      %p540 = por %p538, %p539
      %s542 = sadd.s32 %s541, 1
      %p545 = scmp.eq.s32.totalorder %s84, 3
      %p546 = scmp.ne.s32.totalorder %s541, %s543
      %p547 = scmp.eq.s32.totalorder %s84, 0
      %p548 = por %p546, %p547
      %p549 = scmp.ne.s32.totalorder %s541, %s543
      %p550 = scmp.eq.s32.totalorder %s89, 3
      %p551 = por %p549, %p550
      %p552 = scmp.ne.s32.totalorder %s543, %s544
      %p553 = scmp.eq.s32.totalorder %s89, 0
      %p554 = por %p552, %p553
      %p555 = scmp.ne.s32.totalorder %s543, %s544
      %p556 = scmp.eq.s32.totalorder %s90, 3
      %p557 = por %p555, %p556
      %p559 = scmp.ne.s32.totalorder %s544, %s558
      %p560 = scmp.eq.s32.totalorder %s90, 0
      %p561 = por %p559, %p560
      %s563 = sadd.s32 %s562, 1
      %p566 = scmp.eq.s32.totalorder %s84, 3
      %p567 = scmp.ne.s32.totalorder %s562, %s564
      %p568 = scmp.eq.s32.totalorder %s84, 0
      %p569 = por %p567, %p568
      %p570 = scmp.ne.s32.totalorder %s562, %s564
      %p571 = scmp.eq.s32.totalorder %s89, 3
      %p572 = por %p570, %p571
      %p573 = scmp.ne.s32.totalorder %s564, %s565
      %p574 = scmp.eq.s32.totalorder %s89, 0
      %p575 = por %p573, %p574
      %p576 = scmp.ne.s32.totalorder %s564, %s565
      %p577 = scmp.eq.s32.totalorder %s90, 3
      %p578 = por %p576, %p577
      %p580 = scmp.ne.s32.totalorder %s565, %s579
      %p581 = scmp.eq.s32.totalorder %s90, 0
      %p582 = por %p580, %p581
      %s584 = sadd.s32 %s583, 1
      %p587 = scmp.eq.s32.totalorder %s84, 3
      %p588 = scmp.ne.s32.totalorder %s583, %s585
      %p589 = scmp.eq.s32.totalorder %s84, 0
      %p590 = por %p588, %p589
      %p591 = scmp.ne.s32.totalorder %s583, %s585
      %p592 = scmp.eq.s32.totalorder %s89, 3
      %p593 = por %p591, %p592
      %p594 = scmp.ne.s32.totalorder %s585, %s586
      %p595 = scmp.eq.s32.totalorder %s89, 0
      %p596 = por %p594, %p595
      %p597 = scmp.ne.s32.totalorder %s585, %s586
      %p598 = scmp.eq.s32.totalorder %s90, 3
      %p599 = por %p597, %p598
      %p601 = scmp.ne.s32.totalorder %s586, %s600
      %p602 = scmp.eq.s32.totalorder %s90, 0
      %p603 = por %p601, %p602
      %s605 = sadd.s32 %s604, 1
      %p608 = scmp.eq.s32.totalorder %s84, 3
      %p609 = scmp.ne.s32.totalorder %s604, %s606
      %p610 = scmp.eq.s32.totalorder %s84, 0
      %p611 = por %p609, %p610
      %p612 = scmp.ne.s32.totalorder %s604, %s606
      %p613 = scmp.eq.s32.totalorder %s89, 3
      %p614 = por %p612, %p613
      %p615 = scmp.ne.s32.totalorder %s606, %s607
      %p616 = scmp.eq.s32.totalorder %s89, 0
      %p617 = por %p615, %p616
      %p618 = scmp.ne.s32.totalorder %s606, %s607
      %p619 = scmp.eq.s32.totalorder %s90, 3
      %p620 = por %p618, %p619
      %p622 = scmp.ne.s32.totalorder %s607, %s621
      %p623 = scmp.eq.s32.totalorder %s90, 0
      %p624 = por %p622, %p623
      %s626 = sadd.s32 %s625, 1
      %p629 = scmp.eq.s32.totalorder %s84, 3
      %p630 = scmp.ne.s32.totalorder %s625, %s627
      %p631 = scmp.eq.s32.totalorder %s84, 0
      %p632 = por %p630, %p631
      %p633 = scmp.ne.s32.totalorder %s625, %s627
      %p634 = scmp.eq.s32.totalorder %s89, 3
      %p635 = por %p633, %p634
      %p636 = scmp.ne.s32.totalorder %s627, %s628
      %p637 = scmp.eq.s32.totalorder %s89, 0
      %p638 = por %p636, %p637
      %p639 = scmp.ne.s32.totalorder %s627, %s628
      %p640 = scmp.eq.s32.totalorder %s90, 3
      %p641 = por %p639, %p640
      %p643 = scmp.ne.s32.totalorder %s628, %s642
      %p644 = scmp.eq.s32.totalorder %s90, 0
      %p645 = por %p643, %p644
      %s647 = sadd.s32 %s646, 1
      %p650 = scmp.eq.s32.totalorder %s84, 3
      %p651 = scmp.ne.s32.totalorder %s646, %s648
      %p652 = scmp.eq.s32.totalorder %s84, 0
      %p653 = por %p651, %p652
      %p654 = scmp.ne.s32.totalorder %s646, %s648
      %p655 = scmp.eq.s32.totalorder %s89, 3
      %p656 = por %p654, %p655
      %p657 = scmp.ne.s32.totalorder %s648, %s649
      %p658 = scmp.eq.s32.totalorder %s89, 0
      %p659 = por %p657, %p658
      %p660 = scmp.ne.s32.totalorder %s648, %s649
      %p661 = scmp.eq.s32.totalorder %s90, 3
      %p662 = por %p660, %p661
      %p664 = scmp.ne.s32.totalorder %s649, %s663
      %p665 = scmp.eq.s32.totalorder %s90, 0
      %p666 = por %p664, %p665
      %s668 = sadd.s32 %s667, 1
      %p671 = scmp.eq.s32.totalorder %s84, 3
      %p672 = scmp.ne.s32.totalorder %s667, %s669
      %p673 = scmp.eq.s32.totalorder %s84, 0
      %p674 = por %p672, %p673
      %p675 = scmp.ne.s32.totalorder %s667, %s669
      %p676 = scmp.eq.s32.totalorder %s89, 3
      %p677 = por %p675, %p676
      %p678 = scmp.ne.s32.totalorder %s669, %s670
      %p679 = scmp.eq.s32.totalorder %s89, 0
      %p680 = por %p678, %p679
      %p681 = scmp.ne.s32.totalorder %s669, %s670
      %p682 = scmp.eq.s32.totalorder %s90, 3
      %p683 = por %p681, %p682
      %p685 = scmp.ne.s32.totalorder %s670, %s684
      %p686 = scmp.eq.s32.totalorder %s90, 0
      %p687 = por %p685, %p686
      %s689 = sadd.s32 %s688, 1
      %p692 = scmp.eq.s32.totalorder %s84, 3
      %p693 = scmp.ne.s32.totalorder %s688, %s690
      %p694 = scmp.eq.s32.totalorder %s84, 0
      %p695 = por %p693, %p694
      %p696 = scmp.ne.s32.totalorder %s688, %s690
      %p697 = scmp.eq.s32.totalorder %s89, 3
      %p698 = por %p696, %p697
      %p699 = scmp.ne.s32.totalorder %s690, %s691
      %p700 = scmp.eq.s32.totalorder %s89, 0
      %p701 = por %p699, %p700
      %p702 = scmp.ne.s32.totalorder %s690, %s691
      %p703 = scmp.eq.s32.totalorder %s90, 3
      %p704 = por %p702, %p703
      %p706 = scmp.ne.s32.totalorder %s691, %s705
      %p707 = scmp.eq.s32.totalorder %s90, 0
      %p708 = por %p706, %p707
      %s709 = ssub.s32 %s91, %s103
      %s710 = ssub.s32 %s92, %s99
      %s711 = sor.u32 %s709, %s710
      %p712 = scmp.eq.s32.totalorder %s711, 0
      %s714 = sadd.s32 %s713, 1
      %s715 = scalar_select %p712, %s713, %s714
      %p718 = pneg %p712
      %p719 = scmp.eq.s32.totalorder %s84, 3
      %p720 = por %p718, %p719
      %p721 = scmp.ne.s32.totalorder %s713, %s716
      %p722 = scmp.eq.s32.totalorder %s84, 0
      %p723 = por %p721, %p722
      %p724 = scmp.ne.s32.totalorder %s713, %s716
      %p725 = scmp.eq.s32.totalorder %s89, 3
      %p726 = por %p724, %p725
      %p727 = scmp.ne.s32.totalorder %s716, %s717
      %p728 = scmp.eq.s32.totalorder %s89, 0
      %p729 = por %p727, %p728
      %p730 = scmp.ne.s32.totalorder %s716, %s717
      %p731 = scmp.eq.s32.totalorder %s90, 3
      %p732 = por %p730, %p731
      %p734 = scmp.ne.s32.totalorder %s717, %s733
      %p735 = scmp.eq.s32.totalorder %s90, 0
      %p736 = por %p734, %p735
      %s737 = ssub.s32 %s91, %s103
      %s738 = ssub.s32 %s92, %s99
      %s739 = sor.u32 %s737, %s738
      %p740 = scmp.eq.s32.totalorder %s739, 0
      %s742 = sadd.s32 %s741, 1
      %s743 = scalar_select %p740, %s741, %s742
      %p746 = pneg %p740
      %p747 = scmp.eq.s32.totalorder %s84, 3
      %p748 = por %p746, %p747
      %p749 = scmp.ne.s32.totalorder %s741, %s744
      %p750 = scmp.eq.s32.totalorder %s84, 0
      %p751 = por %p749, %p750
      %p752 = scmp.ne.s32.totalorder %s741, %s744
      %p753 = scmp.eq.s32.totalorder %s89, 3
      %p754 = por %p752, %p753
      %p755 = scmp.ne.s32.totalorder %s744, %s745
      %p756 = scmp.eq.s32.totalorder %s89, 0
      %p757 = por %p755, %p756
      %p758 = scmp.ne.s32.totalorder %s744, %s745
      %p759 = scmp.eq.s32.totalorder %s90, 3
      %p760 = por %p758, %p759
      %p762 = scmp.ne.s32.totalorder %s745, %s761
      %p763 = scmp.eq.s32.totalorder %s90, 0
      %p764 = por %p762, %p763
      %p765 = scmp.le.s32.totalorder 1, %s84
      %p766 = scmp.lt.s32.totalorder %s84, 5
      %p767 = pnand %p765, %p766
      %p768 = pneg %p767
      // Predicated region
      $region9: #{tpu_custom_call.1} parent=5 // pred_check
        _
      $region10: #{tpu_custom_call.1} parent=5 // pred_check_branch
        %770 = sbr.rel (%p767) target = $region12
      $region11: #{tpu_custom_call.1} parent=5 // pred_region
        %s771 = ssub.s32 %s84, 1
        // Predicated region
        $region13: #{tpu_custom_call.1} parent=11 // pred_check
          %p772 = pneg %p197
        $region14: #{tpu_custom_call.1} parent=11 // pred_check_branch
          %774 = sbr.rel (%p772) target = $region16
        $region15: #{tpu_custom_call.1} parent=11 // pred_region
          %s776 = ssub.s32 16, 16
          %777 = vsyncadd [#allocation9], %s776
          %s779 = sshll.u32 [#allocation8], 4
          %s780 = int_to_ptr.vmem [resolvable:$true] %s779
          %782 = dma.hbm_to_vmem [thread:$0]  %s7, 16, %s780, [#allocation9]
        $region16: #{tpu_custom_call.1} parent=11 // pred_fallthru
          _
        // Predicated region
        $region17: #{tpu_custom_call.1} parent=11 // pred_check
          %p783 = pneg %p218
        $region18: #{tpu_custom_call.1} parent=11 // pred_check_branch
          %785 = sbr.rel (%p783) target = $region20
        $region19: #{tpu_custom_call.1} parent=11 // pred_region
          %s787 = ssub.s32 16, 16
          %788 = vsyncadd [#allocation9], %s787
          %s790 = sshll.u32 [#allocation10], 4
          %s791 = int_to_ptr.vmem [resolvable:$true] %s790
          %793 = dma.hbm_to_vmem [thread:$0]  %s9, 16, %s791, [#allocation9]
        $region20: #{tpu_custom_call.1} parent=11 // pred_fallthru
          _
        // Predicated region
        $region21: #{tpu_custom_call.1} parent=11 // pred_check
          %p794 = pneg %p239
        $region22: #{tpu_custom_call.1} parent=11 // pred_check_branch
          %796 = sbr.rel (%p794) target = $region24
        $region23: #{tpu_custom_call.1} parent=11 // pred_region
          %s798 = ssub.s32 16, 16
          %799 = vsyncadd [#allocation12], %s798
          %s801 = sshll.u32 [#allocation11], 4
          %s802 = int_to_ptr.vmem [resolvable:$true] %s801
          %804 = dma.hbm_to_vmem [thread:$0]  %s11, 16, %s802, [#allocation12]
        $region24: #{tpu_custom_call.1} parent=11 // pred_fallthru
          _
        // Predicated region
        $region25: #{tpu_custom_call.1} parent=11 // pred_check
          %p805 = pneg %p260
        $region26: #{tpu_custom_call.1} parent=11 // pred_check_branch
          %807 = sbr.rel (%p805) target = $region28
        $region27: #{tpu_custom_call.1} parent=11 // pred_region
          %s809 = ssub.s32 16, 16
          %810 = vsyncadd [#allocation12], %s809
          %s812 = sshll.u32 [#allocation13], 4
          %s813 = int_to_ptr.vmem [resolvable:$true] %s812
          %815 = dma.hbm_to_vmem [thread:$0]  %s13, 16, %s813, [#allocation12]
        $region28: #{tpu_custom_call.1} parent=11 // pred_fallthru
          _
        // Predicated region
        $region29: #{tpu_custom_call.1} parent=11 // pred_check
          %p816 = pneg %p281
        $region30: #{tpu_custom_call.1} parent=11 // pred_check_branch
          %818 = sbr.rel (%p816) target = $region32
        $region31: #{tpu_custom_call.1} parent=11 // pred_region
          _
        $region32: #{tpu_custom_call.1} parent=11 // pred_fallthru
          _
        // Predicated region
        $region33: #{tpu_custom_call.1} parent=11 // pred_check
          %p819 = pneg %p302
        $region34: #{tpu_custom_call.1} parent=11 // pred_check_branch
          %821 = sbr.rel (%p819) target = $region36
        $region35: #{tpu_custom_call.1} parent=11 // pred_region
          _
        $region36: #{tpu_custom_call.1} parent=11 // pred_fallthru
          _
        // Predicated region
        $region37: #{tpu_custom_call.1} parent=11 // pred_check
          %p822 = pneg %p323
        $region38: #{tpu_custom_call.1} parent=11 // pred_check_branch
          %824 = sbr.rel (%p822) target = $region40
        $region39: #{tpu_custom_call.1} parent=11 // pred_region
          %s826 = ssub.s32 128, 128
          %827 = vsyncadd [#allocation15], %s826
          %s828 = sshll.u32 [#allocation14], 4
          %s829 = int_to_ptr.vmem [resolvable:$true] %s828
          %834 = dma.hbm_to_vmem [thread:$0]  %s19, 128, %s829, [#allocation15], 64, 64, 4
        $region40: #{tpu_custom_call.1} parent=11 // pred_fallthru
          _
        // Predicated region
        $region41: #{tpu_custom_call.1} parent=11 // pred_check
          %p835 = pneg %p344
        $region42: #{tpu_custom_call.1} parent=11 // pred_check_branch
          %837 = sbr.rel (%p835) target = $region44
        $region43: #{tpu_custom_call.1} parent=11 // pred_region
          _
        $region44: #{tpu_custom_call.1} parent=11 // pred_fallthru
          _
        // Predicated region
        $region45: #{tpu_custom_call.1} parent=11 // pred_check
          %p838 = pneg %p365
        $region46: #{tpu_custom_call.1} parent=11 // pred_check_branch
          %840 = sbr.rel (%p838) target = $region48
        $region47: #{tpu_custom_call.1} parent=11 // pred_region
          %s842 = ssub.s32 16, 16
          %843 = vsyncadd [#allocation15], %s842
          %s845 = sshll.u32 [#allocation16], 4
          %s846 = int_to_ptr.vmem [resolvable:$true] %s845
          %848 = dma.hbm_to_vmem [thread:$0]  %s23, 16, %s846, [#allocation15]
        $region48: #{tpu_custom_call.1} parent=11 // pred_fallthru
          _
        // Predicated region
        $region49: #{tpu_custom_call.1} parent=11 // pred_check
          %p849 = pneg %p386
        $region50: #{tpu_custom_call.1} parent=11 // pred_check_branch
          %851 = sbr.rel (%p849) target = $region52
        $region51: #{tpu_custom_call.1} parent=11 // pred_region
          _
        $region52: #{tpu_custom_call.1} parent=11 // pred_fallthru
          _
        // Predicated region
        $region53: #{tpu_custom_call.1} parent=11 // pred_check
          %p852 = pneg %p407
        $region54: #{tpu_custom_call.1} parent=11 // pred_check_branch
          %854 = sbr.rel (%p852) target = $region56
        $region55: #{tpu_custom_call.1} parent=11 // pred_region
          %s856 = ssub.s32 16, 16
          %857 = vsyncadd [#allocation18], %s856
          %s859 = sshll.u32 [#allocation17], 4
          %s860 = int_to_ptr.vmem [resolvable:$true] %s859
          %862 = dma.hbm_to_vmem [thread:$0]  %s27, 16, %s860, [#allocation18]
        $region56: #{tpu_custom_call.1} parent=11 // pred_fallthru
          _
        // Predicated region
        $region57: #{tpu_custom_call.1} parent=11 // pred_check
          %p863 = pneg %p428
        $region58: #{tpu_custom_call.1} parent=11 // pred_check_branch
          %865 = sbr.rel (%p863) target = $region60
        $region59: #{tpu_custom_call.1} parent=11 // pred_region
          _
        $region60: #{tpu_custom_call.1} parent=11 // pred_fallthru
          _
        // Predicated region
        $region61: #{tpu_custom_call.1} parent=11 // pred_check
          %p866 = pneg %p449
        $region62: #{tpu_custom_call.1} parent=11 // pred_check_branch
          %868 = sbr.rel (%p866) target = $region64
        $region63: #{tpu_custom_call.1} parent=11 // pred_region
          %s870 = ssub.s32 16, 16
          %871 = vsyncadd [#allocation18], %s870
          %s873 = sshll.u32 [#allocation19], 4
          %s874 = int_to_ptr.vmem [resolvable:$true] %s873
          %876 = dma.hbm_to_vmem [thread:$0]  %s31, 16, %s874, [#allocation18]
        $region64: #{tpu_custom_call.1} parent=11 // pred_fallthru
          _
        // Predicated region
        $region65: #{tpu_custom_call.1} parent=11 // pred_check
          %p877 = pneg %p470
        $region66: #{tpu_custom_call.1} parent=11 // pred_check_branch
          %879 = sbr.rel (%p877) target = $region68
        $region67: #{tpu_custom_call.1} parent=11 // pred_region
          _
        $region68: #{tpu_custom_call.1} parent=11 // pred_fallthru
          _
        // Predicated region
        $region69: #{tpu_custom_call.1} parent=11 // pred_check
          %p880 = pneg %p491
        $region70: #{tpu_custom_call.1} parent=11 // pred_check_branch
          %882 = sbr.rel (%p880) target = $region72
        $region71: #{tpu_custom_call.1} parent=11 // pred_region
          _
        $region72: #{tpu_custom_call.1} parent=11 // pred_fallthru
          _
        // Predicated region
        $region73: #{tpu_custom_call.1} parent=11 // pred_check
          %p883 = pneg %p512
        $region74: #{tpu_custom_call.1} parent=11 // pred_check_branch
          %885 = sbr.rel (%p883) target = $region76
        $region75: #{tpu_custom_call.1} parent=11 // pred_region
          _
        $region76: #{tpu_custom_call.1} parent=11 // pred_fallthru
          _
        // Predicated region
        $region77: #{tpu_custom_call.1} parent=11 // pred_check
          %p886 = pneg %p533
        $region78: #{tpu_custom_call.1} parent=11 // pred_check_branch
          %888 = sbr.rel (%p886) target = $region80
        $region79: #{tpu_custom_call.1} parent=11 // pred_region
          %s890 = ssub.s32 16, 16
          %891 = vsyncadd [#allocation21], %s890
          %s893 = sshll.u32 [#allocation20], 4
          %s894 = int_to_ptr.vmem [resolvable:$true] %s893
          %896 = dma.hbm_to_vmem [thread:$0]  %s39, 16, %s894, [#allocation21]
        $region80: #{tpu_custom_call.1} parent=11 // pred_fallthru
          _
        // Predicated region
        $region81: #{tpu_custom_call.1} parent=11 // pred_check
          %p897 = pneg %p554
        $region82: #{tpu_custom_call.1} parent=11 // pred_check_branch
          %899 = sbr.rel (%p897) target = $region84
        $region83: #{tpu_custom_call.1} parent=11 // pred_region
          _
        $region84: #{tpu_custom_call.1} parent=11 // pred_fallthru
          _
        // Predicated region
        $region85: #{tpu_custom_call.1} parent=11 // pred_check
          %p900 = pneg %p575
        $region86: #{tpu_custom_call.1} parent=11 // pred_check_branch
          %902 = sbr.rel (%p900) target = $region88
        $region87: #{tpu_custom_call.1} parent=11 // pred_region
          %s904 = ssub.s32 16, 16
          %905 = vsyncadd [#allocation21], %s904
          %s907 = sshll.u32 [#allocation22], 4
          %s908 = int_to_ptr.vmem [resolvable:$true] %s907
          %910 = dma.hbm_to_vmem [thread:$0]  %s43, 16, %s908, [#allocation21]
        $region88: #{tpu_custom_call.1} parent=11 // pred_fallthru
          _
        // Predicated region
        $region89: #{tpu_custom_call.1} parent=11 // pred_check
          %p911 = pneg %p596
        $region90: #{tpu_custom_call.1} parent=11 // pred_check_branch
          %913 = sbr.rel (%p911) target = $region92
        $region91: #{tpu_custom_call.1} parent=11 // pred_region
          %s915 = ssub.s32 16, 16
          %916 = vsyncadd [#allocation24], %s915
          %s918 = sshll.u32 [#allocation23], 4
          %s919 = int_to_ptr.vmem [resolvable:$true] %s918
          %921 = dma.hbm_to_vmem [thread:$0]  %s45, 16, %s919, [#allocation24]
        $region92: #{tpu_custom_call.1} parent=11 // pred_fallthru
          _
        // Predicated region
        $region93: #{tpu_custom_call.1} parent=11 // pred_check
          %p922 = pneg %p617
        $region94: #{tpu_custom_call.1} parent=11 // pred_check_branch
          %924 = sbr.rel (%p922) target = $region96
        $region95: #{tpu_custom_call.1} parent=11 // pred_region
          %s926 = ssub.s32 16, 16
          %927 = vsyncadd [#allocation24], %s926
          %s929 = sshll.u32 [#allocation25], 4
          %s930 = int_to_ptr.vmem [resolvable:$true] %s929
          %932 = dma.hbm_to_vmem [thread:$0]  %s47, 16, %s930, [#allocation24]
        $region96: #{tpu_custom_call.1} parent=11 // pred_fallthru
          _
        // Predicated region
        $region97: #{tpu_custom_call.1} parent=11 // pred_check
          %p933 = pneg %p638
        $region98: #{tpu_custom_call.1} parent=11 // pred_check_branch
          %935 = sbr.rel (%p933) target = $region100
        $region99: #{tpu_custom_call.1} parent=11 // pred_region
          _
        $region100: #{tpu_custom_call.1} parent=11 // pred_fallthru
          _
        // Predicated region
        $region101: #{tpu_custom_call.1} parent=11 // pred_check
          %p936 = pneg %p659
        $region102: #{tpu_custom_call.1} parent=11 // pred_check_branch
          %938 = sbr.rel (%p936) target = $region104
        $region103: #{tpu_custom_call.1} parent=11 // pred_region
          _
        $region104: #{tpu_custom_call.1} parent=11 // pred_fallthru
          _
        // Predicated region
        $region105: #{tpu_custom_call.1} parent=11 // pred_check
          %p939 = pneg %p680
        $region106: #{tpu_custom_call.1} parent=11 // pred_check_branch
          %941 = sbr.rel (%p939) target = $region108
        $region107: #{tpu_custom_call.1} parent=11 // pred_region
          _
        $region108: #{tpu_custom_call.1} parent=11 // pred_fallthru
          _
        // Predicated region
        $region109: #{tpu_custom_call.1} parent=11 // pred_check
          %p942 = pneg %p701
        $region110: #{tpu_custom_call.1} parent=11 // pred_check_branch
          %944 = sbr.rel (%p942) target = $region112
        $region111: #{tpu_custom_call.1} parent=11 // pred_region
          _
        $region112: #{tpu_custom_call.1} parent=11 // pred_fallthru
          _
      $region12: #{tpu_custom_call.1} parent=5 // pred_fallthru
        _
      %p945 = scmp.lt.s32.totalorder %s84, 4
      // Predicated region
      $region113: #{tpu_custom_call.1} parent=5 // pred_check
        %p946 = pneg %p945
      $region114: #{tpu_custom_call.1} parent=5 // pred_check_branch
        %948 = sbr.rel (%p946) target = $region116
      $region115: #{tpu_custom_call.1} parent=5 // pred_region
        // Predicated region
        $region117: #{tpu_custom_call.1} parent=115 // pred_check
          %p949 = pneg %p116
        $region118: #{tpu_custom_call.1} parent=115 // pred_check_branch
          %951 = sbr.rel (%p949) target = $region120
        $region119: #{tpu_custom_call.1} parent=115 // pred_region
          %s952 = sand.u32 %s106, 1
          %s953 = scalar_lea.sflag [#allocation3], %s952
          %s954 = sand.u32 %s106, 1
          %s955 = smul.addr %s954, 16
          %s956 = scalar_lea.vmem [#allocation2], %s955
          %s958 = ssub.s32 256, 256
          %959 = vsyncadd %s953, %s958
          %s960 = smul.addr %s91, 2
          %s961 = smul.addr %s960, 128
          %s962 = scalar_lea.hbm %s1, %s961
          %s963 = sshll.u32 %s956, 4
          %s964 = int_to_ptr.vmem [resolvable:$true] %s963
          %969 = dma.hbm_to_vmem [thread:$0]  %s962, 256, %s964, %s953, 128, 128, 8
        $region120: #{tpu_custom_call.1} parent=115 // pred_fallthru
          _
        // Predicated region
        $region121: #{tpu_custom_call.1} parent=115 // pred_check
          %p970 = pneg %p144
        $region122: #{tpu_custom_call.1} parent=115 // pred_check_branch
          %972 = sbr.rel (%p970) target = $region124
        $region123: #{tpu_custom_call.1} parent=115 // pred_region
          %s973 = sand.u32 %s84, 1
          %s974 = scalar_lea.sflag [#allocation6], %s973
          %s975 = sand.u32 %s134, 1
          %s976 = smul.addr %s975, 128
          %s977 = scalar_lea.vmem [#allocation5], %s976
          %s978 = smul.u32 8, %s92
          %s980 = ssub.s32 2048, 2048
          %981 = vsyncadd %s974, %s980
          %s982 = smul.addr %s978, 2
          %s983 = smul.addr %s91, 32
          %s984 = sadd.s32 %s982, %s983
          %s985 = smul.addr %s984, 128
          %s986 = scalar_lea.hbm %s3, %s985
          %s987 = sshll.u32 %s977, 4
          %s988 = int_to_ptr.vmem [resolvable:$true] %s987
          %993 = dma.hbm_to_vmem [thread:$0]  %s986, 2048, %s988, %s974, 128, 128, 8
        $region124: #{tpu_custom_call.1} parent=115 // pred_fallthru
          _
        // Predicated region
        $region125: #{tpu_custom_call.1} parent=115 // pred_check
          %p994 = pneg %p170
        $region126: #{tpu_custom_call.1} parent=115 // pred_check_branch
          %996 = sbr.rel (%p994) target = $region128
        $region127: #{tpu_custom_call.1} parent=115 // pred_region
          %s997 = sand.u32 %s84, 1
          %s998 = scalar_lea.sflag [#allocation6], %s997
          %s999 = sand.u32 %s160, 1
          %s1000 = scalar_lea.vmem [#allocation7], %s999
          %s1002 = ssub.s32 16, 16
          %1003 = vsyncadd %s998, %s1002
          %s1004 = smul.addr %s91, 16
          %s1005 = scalar_lea.hbm %s5, %s1004
          %s1007 = sshll.u32 %s1000, 4
          %s1008 = int_to_ptr.vmem [resolvable:$true] %s1007
          %1010 = dma.hbm_to_vmem [thread:$0]  %s1005, 16, %s1008, %s998
        $region128: #{tpu_custom_call.1} parent=115 // pred_fallthru
          _
      $region116: #{tpu_custom_call.1} parent=5 // pred_fallthru
        _
      %p1011 = scmp.le.s32.totalorder 1, %s84
      %p1012 = scmp.lt.s32.totalorder %s84, 5
      %p1013 = pnand %p1011, %p1012
      %p1014 = pneg %p1013
      // Predicated region
      $region129: #{tpu_custom_call.1} parent=5 // pred_check
        _
      $region130: #{tpu_custom_call.1} parent=5 // pred_check_branch
        %1016 = sbr.rel (%p1013) target = $region132
      $region131: #{tpu_custom_call.1} parent=5 // pred_region
        %s1017 = ssub.s32 %s84, 1
        %s1018 = sand.u32 %s109, 1
        %s1019 = scalar_lea.sflag [#allocation3], %s1018
        %s1020 = sand.u32 %s109, 1
        %s1021 = smul.addr %s1020, 16
        %s1022 = scalar_lea.vmem [#allocation2], %s1021
        // Predicated region
        $region133: #{tpu_custom_call.1} parent=131 // pred_check
          %p1023 = pneg %p122
        $region134: #{tpu_custom_call.1} parent=131 // pred_check_branch
          %1025 = sbr.rel (%p1023) target = $region136
        $region135: #{tpu_custom_call.1} parent=131 // pred_region
          %1026 = dma.done %s1019, 256
        $region136: #{tpu_custom_call.1} parent=131 // pred_fallthru
          _
        %s1027 = sand.u32 %s89, 1
        %s1028 = scalar_lea.sflag [#allocation6], %s1027
        %s1029 = sand.u32 %s137, 1
        %s1030 = smul.addr %s1029, 128
        %s1031 = scalar_lea.vmem [#allocation5], %s1030
        // Predicated region
        $region137: #{tpu_custom_call.1} parent=131 // pred_check
          %p1032 = pneg %p150
        $region138: #{tpu_custom_call.1} parent=131 // pred_check_branch
          %1034 = sbr.rel (%p1032) target = $region140
        $region139: #{tpu_custom_call.1} parent=131 // pred_region
          %1035 = dma.done %s1028, 2048
        $region140: #{tpu_custom_call.1} parent=131 // pred_fallthru
          _
        %s1036 = sand.u32 %s89, 1
        %s1037 = scalar_lea.sflag [#allocation6], %s1036
        %s1038 = sand.u32 %s163, 1
        %s1039 = scalar_lea.vmem [#allocation7], %s1038
        // Predicated region
        $region141: #{tpu_custom_call.1} parent=131 // pred_check
          %p1040 = pneg %p176
        $region142: #{tpu_custom_call.1} parent=131 // pred_check_branch
          %1042 = sbr.rel (%p1040) target = $region144
        $region143: #{tpu_custom_call.1} parent=131 // pred_region
          %1043 = dma.done %s1037, 16
        $region144: #{tpu_custom_call.1} parent=131 // pred_fallthru
          _
        // Predicated region
        $region145: #{tpu_custom_call.1} parent=131 // pred_check
          %p1044 = pneg %p197
        $region146: #{tpu_custom_call.1} parent=131 // pred_check_branch
          %1046 = sbr.rel (%p1044) target = $region148
        $region147: #{tpu_custom_call.1} parent=131 // pred_region
          %1047 = dma.done [#allocation9], 16
        $region148: #{tpu_custom_call.1} parent=131 // pred_fallthru
          _
        // Predicated region
        $region149: #{tpu_custom_call.1} parent=131 // pred_check
          %p1048 = pneg %p218
        $region150: #{tpu_custom_call.1} parent=131 // pred_check_branch
          %1050 = sbr.rel (%p1048) target = $region152
        $region151: #{tpu_custom_call.1} parent=131 // pred_region
          %1051 = dma.done [#allocation9], 16
        $region152: #{tpu_custom_call.1} parent=131 // pred_fallthru
          _
        // Predicated region
        $region153: #{tpu_custom_call.1} parent=131 // pred_check
          %p1052 = pneg %p239
        $region154: #{tpu_custom_call.1} parent=131 // pred_check_branch
          %1054 = sbr.rel (%p1052) target = $region156
        $region155: #{tpu_custom_call.1} parent=131 // pred_region
          %1055 = dma.done [#allocation12], 16
        $region156: #{tpu_custom_call.1} parent=131 // pred_fallthru
          _
        // Predicated region
        $region157: #{tpu_custom_call.1} parent=131 // pred_check
          %p1056 = pneg %p260
        $region158: #{tpu_custom_call.1} parent=131 // pred_check_branch
          %1058 = sbr.rel (%p1056) target = $region160
        $region159: #{tpu_custom_call.1} parent=131 // pred_region
          %1059 = dma.done [#allocation12], 16
        $region160: #{tpu_custom_call.1} parent=131 // pred_fallthru
          _
        // Predicated region
        $region161: #{tpu_custom_call.1} parent=131 // pred_check
          %p1060 = pneg %p323
        $region162: #{tpu_custom_call.1} parent=131 // pred_check_branch
          %1062 = sbr.rel (%p1060) target = $region164
        $region163: #{tpu_custom_call.1} parent=131 // pred_region
          %1063 = dma.done [#allocation15], 128
        $region164: #{tpu_custom_call.1} parent=131 // pred_fallthru
          _
        // Predicated region
        $region165: #{tpu_custom_call.1} parent=131 // pred_check
          %p1064 = pneg %p365
        $region166: #{tpu_custom_call.1} parent=131 // pred_check_branch
          %1066 = sbr.rel (%p1064) target = $region168
        $region167: #{tpu_custom_call.1} parent=131 // pred_region
          %1067 = dma.done [#allocation15], 16
        $region168: #{tpu_custom_call.1} parent=131 // pred_fallthru
          _
        // Predicated region
        $region169: #{tpu_custom_call.1} parent=131 // pred_check
          %p1068 = pneg %p407
        $region170: #{tpu_custom_call.1} parent=131 // pred_check_branch
          %1070 = sbr.rel (%p1068) target = $region172
        $region171: #{tpu_custom_call.1} parent=131 // pred_region
          %1071 = dma.done [#allocation18], 16
        $region172: #{tpu_custom_call.1} parent=131 // pred_fallthru
          _
        // Predicated region
        $region173: #{tpu_custom_call.1} parent=131 // pred_check
          %p1072 = pneg %p449
        $region174: #{tpu_custom_call.1} parent=131 // pred_check_branch
          %1074 = sbr.rel (%p1072) target = $region176
        $region175: #{tpu_custom_call.1} parent=131 // pred_region
          %1075 = dma.done [#allocation18], 16
        $region176: #{tpu_custom_call.1} parent=131 // pred_fallthru
          _
        // Predicated region
        $region177: #{tpu_custom_call.1} parent=131 // pred_check
          %p1076 = pneg %p533
        $region178: #{tpu_custom_call.1} parent=131 // pred_check_branch
          %1078 = sbr.rel (%p1076) target = $region180
        $region179: #{tpu_custom_call.1} parent=131 // pred_region
          %1079 = dma.done [#allocation21], 16
        $region180: #{tpu_custom_call.1} parent=131 // pred_fallthru
          _
        // Predicated region
        $region181: #{tpu_custom_call.1} parent=131 // pred_check
          %p1080 = pneg %p575
        $region182: #{tpu_custom_call.1} parent=131 // pred_check_branch
          %1082 = sbr.rel (%p1080) target = $region184
        $region183: #{tpu_custom_call.1} parent=131 // pred_region
          %1083 = dma.done [#allocation21], 16
        $region184: #{tpu_custom_call.1} parent=131 // pred_fallthru
          _
        // Predicated region
        $region185: #{tpu_custom_call.1} parent=131 // pred_check
          %p1084 = pneg %p596
        $region186: #{tpu_custom_call.1} parent=131 // pred_check_branch
          %1086 = sbr.rel (%p1084) target = $region188
        $region187: #{tpu_custom_call.1} parent=131 // pred_region
          %1087 = dma.done [#allocation24], 16
        $region188: #{tpu_custom_call.1} parent=131 // pred_fallthru
          _
        // Predicated region
        $region189: #{tpu_custom_call.1} parent=131 // pred_check
          %p1088 = pneg %p617
        $region190: #{tpu_custom_call.1} parent=131 // pred_check_branch
          %1090 = sbr.rel (%p1088) target = $region192
        $region191: #{tpu_custom_call.1} parent=131 // pred_region
          %1091 = dma.done [#allocation24], 16
        $region192: #{tpu_custom_call.1} parent=131 // pred_fallthru
          _
        %s1092 = sand.u32 %s109, 1
        %s1093 = scalar_lea.sflag [#allocation3], %s1092
        %s1094 = sand.u32 %s109, 1
        %s1095 = smul.addr %s1094, 16
        %s1096 = scalar_lea.vmem [#allocation2], %s1095
        %p1097 = pneg %p122
        %p1098 = pneg %p119
        %s1099 = sand.u32 %s89, 1
        %s1100 = scalar_lea.sflag [#allocation6], %s1099
        %s1101 = sand.u32 %s137, 1
        %s1102 = smul.addr %s1101, 128
        %s1103 = scalar_lea.vmem [#allocation5], %s1102
        %p1104 = pneg %p150
        %p1105 = pneg %p147
        %s1106 = sand.u32 %s89, 1
        %s1107 = scalar_lea.sflag [#allocation6], %s1106
        %s1108 = sand.u32 %s163, 1
        %s1109 = scalar_lea.vmem [#allocation7], %s1108
        %p1110 = pneg %p176
        %p1111 = pneg %p173
        %p1112 = pneg %p197
        %p1113 = pneg %p194
        %p1114 = pneg %p218
        %p1115 = pneg %p215
        %p1116 = pneg %p239
        %p1117 = pneg %p236
        %p1118 = pneg %p260
        %p1119 = pneg %p257
        %p1120 = pneg %p281
        %p1121 = pneg %p278
        %p1122 = pneg %p302
        %p1123 = pneg %p299
        %p1124 = pneg %p323
        %p1125 = pneg %p320
        %p1126 = pneg %p344
        %p1127 = pneg %p341
        %p1128 = pneg %p365
        %p1129 = pneg %p362
        %p1130 = pneg %p386
        %p1131 = pneg %p383
        %p1132 = pneg %p407
        %p1133 = pneg %p404
        %p1134 = pneg %p428
        %p1135 = pneg %p425
        %p1136 = pneg %p449
        %p1137 = pneg %p446
        %p1138 = pneg %p470
        %p1139 = pneg %p467
        %p1140 = pneg %p491
        %p1141 = pneg %p488
        %p1142 = pneg %p512
        %p1143 = pneg %p509
        %p1144 = pneg %p533
        %p1145 = pneg %p530
        %p1146 = pneg %p554
        %p1147 = pneg %p551
        %p1148 = pneg %p575
        %p1149 = pneg %p572
        %p1150 = pneg %p596
        %p1151 = pneg %p593
        %p1152 = pneg %p617
        %p1153 = pneg %p614
        %p1154 = pneg %p638
        %p1155 = pneg %p635
        %p1156 = pneg %p659
        %p1157 = pneg %p656
        %p1158 = pneg %p680
        %p1159 = pneg %p677
        %p1160 = pneg %p701
        %p1161 = pneg %p698
        %p1162 = pneg %p729
        %p1163 = pneg %p726
        %s1164 = sand.u32 %s716, 1
        %s1165 = scalar_lea.sflag [#allocation4], %s1164
        %s1166 = sand.u32 %s716, 1
        %s1167 = smul.addr %s1166, 8
        %s1168 = scalar_lea.vmem [#allocation26], %s1167
        %p1169 = pneg %p757
        %p1170 = pneg %p754
        %s1171 = sand.u32 %s744, 1
        %s1172 = scalar_lea.sflag [#allocation28], %s1171
        %s1173 = sand.u32 %s744, 1
        %s1174 = smul.addr %s1173, 128
        %s1175 = scalar_lea.vmem [#allocation27], %s1174
        %s1176 = smul.u32 8, %s94
        %s1177 = smul.u32 8, %s94
        %v1179 = vld [vmem:[%s1022] sm:$0xff]
        %v1180 = vld [vmem:[%s1022 + $0x8] sm:$0xff]
        %v1181 = vld [vmem:[%s1031] sm:$0xff]
        %v1182 = vld [vmem:[%s1031 + $0x8] sm:$0xff]
        %v1183 = vld [vmem:[%s1031 + $0x10] sm:$0xff]
        %v1184 = vld [vmem:[%s1031 + $0x18] sm:$0xff]
        %v1185 = vld [vmem:[%s1031 + $0x20] sm:$0xff]
        %v1186 = vld [vmem:[%s1031 + $0x28] sm:$0xff]
        %v1187 = vld [vmem:[%s1031 + $0x30] sm:$0xff]
        %v1188 = vld [vmem:[%s1031 + $0x38] sm:$0xff]
        %v1189 = vld [vmem:[%s1031 + $0x40] sm:$0xff]
        %v1190 = vld [vmem:[%s1031 + $0x48] sm:$0xff]
        %v1191 = vld [vmem:[%s1031 + $0x50] sm:$0xff]
        %v1192 = vld [vmem:[%s1031 + $0x58] sm:$0xff]
        %v1193 = vld [vmem:[%s1031 + $0x60] sm:$0xff]
        %v1194 = vld [vmem:[%s1031 + $0x68] sm:$0xff]
        %v1195 = vld [vmem:[%s1031 + $0x70] sm:$0xff]
        %v1196 = vld [vmem:[%s1031 + $0x78] sm:$0xff]
        %v1197 = vld [vmem:[%s1039] sm:$0x1]
        %vm1198 = vcmp.gt.f32.partialorder %v1197, 0.0
        %s1199 = smul.u32 %s94, 8
        %s1200 = scalar_lea.vmem %s1022, %s1199 [#allocation2]
        %v1201 = vld [vmem:[%s1200] sm:$0xff]
        %v1202 = vld [vmem:[#allocation8] sm:$0x1]
        %v1203 = vld [vmem:[#allocation10] sm:$0x1]
        %vm1204 = vcmask 261120
        %v1205 = vsel %vm1204, %v1179, 0.0
        %1206 = vadd.xlane.f32.xlu0 %v1205
        %v1207 = vpop.xlane.xlu0 %1206
        %v1208 = vsel %vm1204, %v1180, 0.0
        %1209 = vadd.xlane.f32.xlu0 %v1208
        %v1210 = vpop.xlane.xlu0 %1209
        %v1211 = vrcp.pop 32.0
        %v1212 = vmul.f32 %v1207, %v1211
        %v1213 = vmul.f32 %v1210, %v1211
        %v1214 = vsub.f32 %v1179, %v1212
        %v1215 = vsub.f32 %v1180, %v1213
        %v1216 = vmul.f32 %v1214, %v1214
        %v1217 = vmul.f32 %v1215, %v1215
        %v1218 = vsel %vm1204, %v1216, 0.0
        %1219 = vadd.xlane.f32.xlu0 %v1218
        %v1220 = vpop.xlane.xlu0 %1219
        %v1221 = vsel %vm1204, %v1217, 0.0
        %1222 = vadd.xlane.f32.xlu0 %v1221
        %v1223 = vpop.xlane.xlu0 %1222
        %v1224 = vmul.f32 %v1220, %v1211
        %v1225 = vmul.f32 %v1223, %v1211
        %v1226 = vadd.f32 %v1224, 1e-05
        %v1227 = vadd.f32 %v1225, 1e-05
        %v1228 = vrsqrt.pop %v1226
        %v1229 = vrsqrt.pop %v1227
        %v1230 = vmul.f32 %v1214, %v1228
        %v1231 = vmul.f32 %v1215, %v1229
        %v1233 = vlaneseq
        %v1234 = vshrl.u32 %v1233, 7
        %v1235 = vsub.s32 0, %v1234
        %v1236 = vrot.slane %v1202, %v1235
        %v1238 = vmul.f32 %v1230, %v1236
        %v1239 = vmul.f32 %v1231, %v1236
        %v1241 = vlaneseq
        %v1242 = vshrl.u32 %v1241, 7
        %v1243 = vsub.s32 0, %v1242
        %v1244 = vrot.slane %v1203, %v1243
        %v1246 = vadd.f32 %v1238, %v1244
        %v1247 = vadd.f32 %v1239, %v1244
        %v1248 = vsel %vm1204, %v1201, 0.0
        %1249 = vadd.xlane.f32.xlu0 %v1248
        %v1250 = vpop.xlane.xlu0 %1249
        %v1251 = vmul.f32 %v1250, %v1211
        %v1252 = vsub.f32 %v1201, %v1251
        %v1253 = vmul.f32 %v1252, %v1252
        %v1254 = vsel %vm1204, %v1253, 0.0
        %1255 = vadd.xlane.f32.xlu0 %v1254
        %v1256 = vpop.xlane.xlu0 %1255
        %v1257 = vmul.f32 %v1256, %v1211
        %v1258 = vadd.f32 %v1257, 1e-05
        %v1259 = vrsqrt.pop %v1258
        %v1260 = vmul.f32 %v1252, %v1259
        %v1261 = vmul.f32 %v1260, %v1236
        %v1262 = vadd.f32 %v1261, %v1244
        %v1263 = vld [vmem:[#allocation11] sm:$0x1]
        %v1264 = vld [vmem:[#allocation13] sm:$0x1]
        %vm1265 = vcmask 130048
        %v1266 = vsel %vm1265, %v1181, 0.0
        %1267 = vadd.xlane.f32.xlu0 %v1266
        %v1268 = vpop.xlane.xlu0 %1267
        %v1269 = vsel %vm1265, %v1182, 0.0
        %1270 = vadd.xlane.f32.xlu0 %v1269
        %v1271 = vpop.xlane.xlu0 %1270
        %v1272 = vsel %vm1265, %v1183, 0.0
        %1273 = vadd.xlane.f32.xlu0 %v1272
        %v1274 = vpop.xlane.xlu0 %1273
        %v1275 = vsel %vm1265, %v1184, 0.0
        %1276 = vadd.xlane.f32.xlu0 %v1275
        %v1277 = vpop.xlane.xlu0 %1276
        %v1278 = vsel %vm1265, %v1185, 0.0
        %1279 = vadd.xlane.f32.xlu0 %v1278
        %v1280 = vpop.xlane.xlu0 %1279
        %v1281 = vsel %vm1265, %v1186, 0.0
        %1282 = vadd.xlane.f32.xlu0 %v1281
        %v1283 = vpop.xlane.xlu0 %1282
        %v1284 = vsel %vm1265, %v1187, 0.0
        %1285 = vadd.xlane.f32.xlu0 %v1284
        %v1286 = vpop.xlane.xlu0 %1285
        %v1287 = vsel %vm1265, %v1188, 0.0
        %1288 = vadd.xlane.f32.xlu0 %v1287
        %v1289 = vpop.xlane.xlu0 %1288
        %v1290 = vsel %vm1265, %v1189, 0.0
        %1291 = vadd.xlane.f32.xlu0 %v1290
        %v1292 = vpop.xlane.xlu0 %1291
        %v1293 = vsel %vm1265, %v1190, 0.0
        %1294 = vadd.xlane.f32.xlu0 %v1293
        %v1295 = vpop.xlane.xlu0 %1294
        %v1296 = vsel %vm1265, %v1191, 0.0
        %1297 = vadd.xlane.f32.xlu0 %v1296
        %v1298 = vpop.xlane.xlu0 %1297
        %v1299 = vsel %vm1265, %v1192, 0.0
        %1300 = vadd.xlane.f32.xlu0 %v1299
        %v1301 = vpop.xlane.xlu0 %1300
        %v1302 = vsel %vm1265, %v1193, 0.0
        %1303 = vadd.xlane.f32.xlu0 %v1302
        %v1304 = vpop.xlane.xlu0 %1303
        %v1305 = vsel %vm1265, %v1194, 0.0
        %1306 = vadd.xlane.f32.xlu0 %v1305
        %v1307 = vpop.xlane.xlu0 %1306
        %v1308 = vsel %vm1265, %v1195, 0.0
        %1309 = vadd.xlane.f32.xlu0 %v1308
        %v1310 = vpop.xlane.xlu0 %1309
        %v1311 = vsel %vm1265, %v1196, 0.0
        %1312 = vadd.xlane.f32.xlu0 %v1311
        %v1313 = vpop.xlane.xlu0 %1312
        %v1314 = vrcp.pop 16.0
        %v1315 = vmul.f32 %v1268, %v1314
        %v1316 = vmul.f32 %v1271, %v1314
        %v1317 = vmul.f32 %v1274, %v1314
        %v1318 = vmul.f32 %v1277, %v1314
        %v1319 = vmul.f32 %v1280, %v1314
        %v1320 = vmul.f32 %v1283, %v1314
        %v1321 = vmul.f32 %v1286, %v1314
        %v1322 = vmul.f32 %v1289, %v1314
        %v1323 = vmul.f32 %v1292, %v1314
        %v1324 = vmul.f32 %v1295, %v1314
        %v1325 = vmul.f32 %v1298, %v1314
        %v1326 = vmul.f32 %v1301, %v1314
        %v1327 = vmul.f32 %v1304, %v1314
        %v1328 = vmul.f32 %v1307, %v1314
        %v1329 = vmul.f32 %v1310, %v1314
        %v1330 = vmul.f32 %v1313, %v1314
        %v1331 = vsub.f32 %v1181, %v1315
        %v1332 = vsub.f32 %v1182, %v1316
        %v1333 = vsub.f32 %v1183, %v1317
        %v1334 = vsub.f32 %v1184, %v1318
        %v1335 = vsub.f32 %v1185, %v1319
        %v1336 = vsub.f32 %v1186, %v1320
        %v1337 = vsub.f32 %v1187, %v1321
        %v1338 = vsub.f32 %v1188, %v1322
        %v1339 = vsub.f32 %v1189, %v1323
        %v1340 = vsub.f32 %v1190, %v1324
        %v1341 = vsub.f32 %v1191, %v1325
        %v1342 = vsub.f32 %v1192, %v1326
        %v1343 = vsub.f32 %v1193, %v1327
        %v1344 = vsub.f32 %v1194, %v1328
        %v1345 = vsub.f32 %v1195, %v1329
        %v1346 = vsub.f32 %v1196, %v1330
        %v1347 = vmul.f32 %v1331, %v1331
        %v1348 = vmul.f32 %v1332, %v1332
        %v1349 = vmul.f32 %v1333, %v1333
        %v1350 = vmul.f32 %v1334, %v1334
        %v1351 = vmul.f32 %v1335, %v1335
        %v1352 = vmul.f32 %v1336, %v1336
        %v1353 = vmul.f32 %v1337, %v1337
        %v1354 = vmul.f32 %v1338, %v1338
        %v1355 = vmul.f32 %v1339, %v1339
        %v1356 = vmul.f32 %v1340, %v1340
        %v1357 = vmul.f32 %v1341, %v1341
        %v1358 = vmul.f32 %v1342, %v1342
        %v1359 = vmul.f32 %v1343, %v1343
        %v1360 = vmul.f32 %v1344, %v1344
        %v1361 = vmul.f32 %v1345, %v1345
        %v1362 = vmul.f32 %v1346, %v1346
        %v1363 = vsel %vm1265, %v1347, 0.0
        %1364 = vadd.xlane.f32.xlu0 %v1363
        %v1365 = vpop.xlane.xlu0 %1364
        %v1366 = vsel %vm1265, %v1348, 0.0
        %1367 = vadd.xlane.f32.xlu0 %v1366
        %v1368 = vpop.xlane.xlu0 %1367
        %v1369 = vsel %vm1265, %v1349, 0.0
        %1370 = vadd.xlane.f32.xlu0 %v1369
        %v1371 = vpop.xlane.xlu0 %1370
        %v1372 = vsel %vm1265, %v1350, 0.0
        %1373 = vadd.xlane.f32.xlu0 %v1372
        %v1374 = vpop.xlane.xlu0 %1373
        %v1375 = vsel %vm1265, %v1351, 0.0
        %1376 = vadd.xlane.f32.xlu0 %v1375
        %v1377 = vpop.xlane.xlu0 %1376
        %v1378 = vsel %vm1265, %v1352, 0.0
        %1379 = vadd.xlane.f32.xlu0 %v1378
        %v1380 = vpop.xlane.xlu0 %1379
        %v1381 = vsel %vm1265, %v1353, 0.0
        %1382 = vadd.xlane.f32.xlu0 %v1381
        %v1383 = vpop.xlane.xlu0 %1382
        %v1384 = vsel %vm1265, %v1354, 0.0
        %1385 = vadd.xlane.f32.xlu0 %v1384
        %v1386 = vpop.xlane.xlu0 %1385
        %v1387 = vsel %vm1265, %v1355, 0.0
        %1388 = vadd.xlane.f32.xlu0 %v1387
        %v1389 = vpop.xlane.xlu0 %1388
        %v1390 = vsel %vm1265, %v1356, 0.0
        %1391 = vadd.xlane.f32.xlu0 %v1390
        %v1392 = vpop.xlane.xlu0 %1391
        %v1393 = vsel %vm1265, %v1357, 0.0
        %1394 = vadd.xlane.f32.xlu0 %v1393
        %v1395 = vpop.xlane.xlu0 %1394
        %v1396 = vsel %vm1265, %v1358, 0.0
        %1397 = vadd.xlane.f32.xlu0 %v1396
        %v1398 = vpop.xlane.xlu0 %1397
        %v1399 = vsel %vm1265, %v1359, 0.0
        %1400 = vadd.xlane.f32.xlu0 %v1399
        %v1401 = vpop.xlane.xlu0 %1400
        %v1402 = vsel %vm1265, %v1360, 0.0
        %1403 = vadd.xlane.f32.xlu0 %v1402
        %v1404 = vpop.xlane.xlu0 %1403
        %v1405 = vsel %vm1265, %v1361, 0.0
        %1406 = vadd.xlane.f32.xlu0 %v1405
        %v1407 = vpop.xlane.xlu0 %1406
        %v1408 = vsel %vm1265, %v1362, 0.0
        %1409 = vadd.xlane.f32.xlu0 %v1408
        %v1410 = vpop.xlane.xlu0 %1409
        %v1411 = vmul.f32 %v1365, %v1314
        %v1412 = vmul.f32 %v1368, %v1314
        %v1413 = vmul.f32 %v1371, %v1314
        %v1414 = vmul.f32 %v1374, %v1314
        %v1415 = vmul.f32 %v1377, %v1314
        %v1416 = vmul.f32 %v1380, %v1314
        %v1417 = vmul.f32 %v1383, %v1314
        %v1418 = vmul.f32 %v1386, %v1314
        %v1419 = vmul.f32 %v1389, %v1314
        %v1420 = vmul.f32 %v1392, %v1314
        %v1421 = vmul.f32 %v1395, %v1314
        %v1422 = vmul.f32 %v1398, %v1314
        %v1423 = vmul.f32 %v1401, %v1314
        %v1424 = vmul.f32 %v1404, %v1314
        %v1425 = vmul.f32 %v1407, %v1314
        %v1426 = vmul.f32 %v1410, %v1314
        %v1427 = vadd.f32 %v1411, 1e-05
        %v1428 = vadd.f32 %v1412, 1e-05
        %v1429 = vadd.f32 %v1413, 1e-05
        %v1430 = vadd.f32 %v1414, 1e-05
        %v1431 = vadd.f32 %v1415, 1e-05
        %v1432 = vadd.f32 %v1416, 1e-05
        %v1433 = vadd.f32 %v1417, 1e-05
        %v1434 = vadd.f32 %v1418, 1e-05
        %v1435 = vadd.f32 %v1419, 1e-05
        %v1436 = vadd.f32 %v1420, 1e-05
        %v1437 = vadd.f32 %v1421, 1e-05
        %v1438 = vadd.f32 %v1422, 1e-05
        %v1439 = vadd.f32 %v1423, 1e-05
        %v1440 = vadd.f32 %v1424, 1e-05
        %v1441 = vadd.f32 %v1425, 1e-05
        %v1442 = vadd.f32 %v1426, 1e-05
        %v1443 = vrsqrt.pop %v1427
        %v1444 = vrsqrt.pop %v1428
        %v1445 = vrsqrt.pop %v1429
        %v1446 = vrsqrt.pop %v1430
        %v1447 = vrsqrt.pop %v1431
        %v1448 = vrsqrt.pop %v1432
        %v1449 = vrsqrt.pop %v1433
        %v1450 = vrsqrt.pop %v1434
        %v1451 = vrsqrt.pop %v1435
        %v1452 = vrsqrt.pop %v1436
        %v1453 = vrsqrt.pop %v1437
        %v1454 = vrsqrt.pop %v1438
        %v1455 = vrsqrt.pop %v1439
        %v1456 = vrsqrt.pop %v1440
        %v1457 = vrsqrt.pop %v1441
        %v1458 = vrsqrt.pop %v1442
        %v1459 = vmul.f32 %v1331, %v1443
        %v1460 = vmul.f32 %v1332, %v1444
        %v1461 = vmul.f32 %v1333, %v1445
        %v1462 = vmul.f32 %v1334, %v1446
        %v1463 = vmul.f32 %v1335, %v1447
        %v1464 = vmul.f32 %v1336, %v1448
        %v1465 = vmul.f32 %v1337, %v1449
        %v1466 = vmul.f32 %v1338, %v1450
        %v1467 = vmul.f32 %v1339, %v1451
        %v1468 = vmul.f32 %v1340, %v1452
        %v1469 = vmul.f32 %v1341, %v1453
        %v1470 = vmul.f32 %v1342, %v1454
        %v1471 = vmul.f32 %v1343, %v1455
        %v1472 = vmul.f32 %v1344, %v1456
        %v1473 = vmul.f32 %v1345, %v1457
        %v1474 = vmul.f32 %v1346, %v1458
        %v1476 = vlaneseq
        %v1477 = vshrl.u32 %v1476, 7
        %v1478 = vsub.s32 0, %v1477
        %v1479 = vrot.slane %v1263, %v1478
        %v1481 = vmul.f32 %v1459, %v1479
        %v1482 = vmul.f32 %v1460, %v1479
        %v1483 = vmul.f32 %v1461, %v1479
        %v1484 = vmul.f32 %v1462, %v1479
        %v1485 = vmul.f32 %v1463, %v1479
        %v1486 = vmul.f32 %v1464, %v1479
        %v1487 = vmul.f32 %v1465, %v1479
        %v1488 = vmul.f32 %v1466, %v1479
        %v1489 = vmul.f32 %v1467, %v1479
        %v1490 = vmul.f32 %v1468, %v1479
        %v1491 = vmul.f32 %v1469, %v1479
        %v1492 = vmul.f32 %v1470, %v1479
        %v1493 = vmul.f32 %v1471, %v1479
        %v1494 = vmul.f32 %v1472, %v1479
        %v1495 = vmul.f32 %v1473, %v1479
        %v1496 = vmul.f32 %v1474, %v1479
        %v1498 = vlaneseq
        %v1499 = vshrl.u32 %v1498, 7
        %v1500 = vsub.s32 0, %v1499
        %v1501 = vrot.slane %v1264, %v1500
        %v1503 = vadd.f32 %v1481, %v1501
        %v1504 = vadd.f32 %v1482, %v1501
        %v1505 = vadd.f32 %v1483, %v1501
        %v1506 = vadd.f32 %v1484, %v1501
        %v1507 = vadd.f32 %v1485, %v1501
        %v1508 = vadd.f32 %v1486, %v1501
        %v1509 = vadd.f32 %v1487, %v1501
        %v1510 = vadd.f32 %v1488, %v1501
        %v1511 = vadd.f32 %v1489, %v1501
        %v1512 = vadd.f32 %v1490, %v1501
        %v1513 = vadd.f32 %v1491, %v1501
        %v1514 = vadd.f32 %v1492, %v1501
        %v1515 = vadd.f32 %v1493, %v1501
        %v1516 = vadd.f32 %v1494, %v1501
        %v1517 = vadd.f32 %v1495, %v1501
        %v1518 = vadd.f32 %v1496, %v1501
        %v1519 = vpack.c.bf16 %v1247, %v1246
        %v1520 = vpack.c.bf16 %v1262, %v1262
        %v1521 = vpack.c.bf16 %v1504, %v1503
        %v1522 = vpack.c.bf16 %v1506, %v1505
        %v1523 = vpack.c.bf16 %v1508, %v1507
        %v1524 = vpack.c.bf16 %v1510, %v1509
        %v1525 = vpack.c.bf16 %v1512, %v1511
        %v1526 = vpack.c.bf16 %v1514, %v1513
        %v1527 = vpack.c.bf16 %v1516, %v1515
        %v1528 = vpack.c.bf16 %v1518, %v1517
        %v1529 = vld [vmem:[%s15] sm:$0xf]
        %v1530 = vld [vmem:[%s15 + $0x4] sm:$0xf]
        %v1531 = vld [vmem:[%s15 + $0x8] sm:$0xf]
        %v1532 = vld [vmem:[%s15 + $0xc] sm:$0xf]
        %v1537 = vunpack.c.l.b16 %v1529
        %v1538 = vunpack.c.l.b16 %v1530
        %v1539 = vunpack.c.l.b16 %v1531
        %v1540 = vunpack.c.l.b16 %v1532
        %v1541 = vpack.c.b16 %v1538, %v1537
        %v1542 = vpack.c.b16 %v1540, %v1539
        %v1546 = vsel %vm1204, %v1520, 0
        %1548 = vmatprep.subr.bf16.mxu0 0
        %1549 = vmatpush1.bf16.msra.mxu0 %v1541
        %1550 = vmatprep.subr.bf16.mxu0 0
        %1551 = vmatpush1.bf16.msra.mxu0 %v1542
        %1552 = vmatprep.subr.bf16.mxu0 0
        %1553 = vmatpush1.bf16.msra.mxu0 0
        %1554 = vmatprep.subr.bf16.mxu0 0
        %1555 = vmatpush1.bf16.msra.mxu0 0
        %1556 = vmatprep.subr.bf16.mxu0 0
        %1557 = vmatpush1.bf16.msra.mxu0 0
        %1558 = vmatprep.subr.bf16.mxu0 0
        %1559 = vmatpush1.bf16.msra.mxu0 0
        %1560 = vmatprep.subr.bf16.mxu0 0
        %1561 = vmatpush1.bf16.msra.mxu0 0
        %1562 = vmatprep.subr.bf16.mxu0 0
        %1563 = vmatpush1.bf16.msra.mxu0 0
        %1564 = vmatprep.subr.bf16.mxu0 0
        %1565 = vmatpush1.bf16.msra.mxu0 0
        %1566 = vmatprep.subr.bf16.mxu0 0
        %1567 = vmatpush1.bf16.msra.mxu0 0
        %1568 = vmatprep.subr.bf16.mxu0 0
        %1569 = vmatpush1.bf16.msra.mxu0 0
        %1570 = vmatprep.subr.bf16.mxu0 0
        %1571 = vmatpush1.bf16.msra.mxu0 0
        %1572 = vmatprep.subr.bf16.mxu0 0
        %1573 = vmatpush1.bf16.msra.mxu0 0
        %1574 = vmatprep.subr.bf16.mxu0 0
        %1575 = vmatpush1.bf16.msra.mxu0 0
        %1576 = vmatprep.subr.bf16.mxu0 0
        %1577 = vmatpush1.bf16.msra.mxu0 0
        %1578 = vmatprep.subr.bf16.mxu0 0
        %1579 = vmatpush1.bf16.msra.mxu0 0
        %1580 = vmatprep.mubr.bf16.mxu0 0
        %1581 = vmatmul.mubr.bf16.gmra.mrb[0].mxu0 %v1546
        %v1582 = vpop.f32.mrb[0].mxu0
        %v1583 = vadd.f32 0.0, %v1582
        %v1584 = vpop.f32.mrb[0].mxu0
        %v1585 = vpop.f32.mrb[0].mxu0
        %v1586 = vpop.f32.mrb[0].mxu0
        %1587 = vdwg.mxu0
        %v1588 = vld [vmem:[%s17] sm:$0xf]
        %v1589 = vld [vmem:[%s17 + $0x4] sm:$0xf]
        %v1590 = vld [vmem:[%s17 + $0x8] sm:$0xf]
        %v1591 = vld [vmem:[%s17 + $0xc] sm:$0xf]
        %v1596 = vunpack.c.l.b16 %v1588
        %v1597 = vunpack.c.l.b16 %v1589
        %v1598 = vunpack.c.l.b16 %v1590
        %v1599 = vunpack.c.l.b16 %v1591
        %v1600 = vpack.c.b16 %v1597, %v1596
        %v1601 = vpack.c.b16 %v1599, %v1598
        %v1605 = vsel %vm1204, %v1519, 0
        %1607 = vmatprep.subr.bf16.mxu0 0
        %1608 = vmatpush1.bf16.msra.mxu0 %v1600
        %1609 = vmatprep.subr.bf16.mxu0 0
        %1610 = vmatpush1.bf16.msra.mxu0 %v1601
        %1611 = vmatprep.subr.bf16.mxu0 0
        %1612 = vmatpush1.bf16.msra.mxu0 0
        %1613 = vmatprep.subr.bf16.mxu0 0
        %1614 = vmatpush1.bf16.msra.mxu0 0
        %1615 = vmatprep.subr.bf16.mxu0 0
        %1616 = vmatpush1.bf16.msra.mxu0 0
        %1617 = vmatprep.subr.bf16.mxu0 0
        %1618 = vmatpush1.bf16.msra.mxu0 0
        %1619 = vmatprep.subr.bf16.mxu0 0
        %1620 = vmatpush1.bf16.msra.mxu0 0
        %1621 = vmatprep.subr.bf16.mxu0 0
        %1622 = vmatpush1.bf16.msra.mxu0 0
        %1623 = vmatprep.subr.bf16.mxu0 0
        %1624 = vmatpush1.bf16.msra.mxu0 0
        %1625 = vmatprep.subr.bf16.mxu0 0
        %1626 = vmatpush1.bf16.msra.mxu0 0
        %1627 = vmatprep.subr.bf16.mxu0 0
        %1628 = vmatpush1.bf16.msra.mxu0 0
        %1629 = vmatprep.subr.bf16.mxu0 0
        %1630 = vmatpush1.bf16.msra.mxu0 0
        %1631 = vmatprep.subr.bf16.mxu0 0
        %1632 = vmatpush1.bf16.msra.mxu0 0
        %1633 = vmatprep.subr.bf16.mxu0 0
        %1634 = vmatpush1.bf16.msra.mxu0 0
        %1635 = vmatprep.subr.bf16.mxu0 0
        %1636 = vmatpush1.bf16.msra.mxu0 0
        %1637 = vmatprep.subr.bf16.mxu0 0
        %1638 = vmatpush1.bf16.msra.mxu0 0
        %1639 = vmatprep.mubr.bf16.mxu0 0
        %1640 = vmatmul.mubr.bf16.gmra.mrb[0].mxu0 %v1605
        %v1641 = vpop.f32.mrb[0].mxu0
        %v1642 = vadd.f32 0.0, %v1641
        %v1643 = vpop.f32.mrb[0].mxu0
        %v1644 = vpop.f32.mrb[0].mxu0
        %v1645 = vadd.f32 0.0, %v1644
        %v1646 = vpop.f32.mrb[0].mxu0
        %1647 = vdwg.mxu0
        %v1648 = vld [vmem:[%s21] sm:$0xf]
        %v1649 = vld [vmem:[%s21 + $0x4] sm:$0xf]
        %v1650 = vld [vmem:[%s21 + $0x8] sm:$0xf]
        %v1651 = vld [vmem:[%s21 + $0xc] sm:$0xf]
        %v1652 = vld [vmem:[#allocation16] sm:$0x1]
        %v1654 = vlaneseq
        %v1655 = vshrl.u32 %v1654, 7
        %v1656 = vsub.s32 0, %v1655
        %v1657 = vrot.slane %v1652, %v1656
        %v1663 = vunpack.c.l.b16 %v1648
        %v1664 = vunpack.c.l.b16 %v1649
        %v1665 = vunpack.c.l.b16 %v1650
        %v1666 = vunpack.c.l.b16 %v1651
        %v1667 = vpack.c.b16 %v1664, %v1663
        %v1668 = vpack.c.b16 %v1666, %v1665
        %1671 = vmatprep.subr.bf16.mxu0 0
        %1672 = vmatpush1.bf16.msra.mxu0 %v1667
        %1673 = vmatprep.subr.bf16.mxu0 0
        %1674 = vmatpush1.bf16.msra.mxu0 %v1668
        %1675 = vmatprep.subr.bf16.mxu0 0
        %1676 = vmatpush1.bf16.msra.mxu0 0
        %1677 = vmatprep.subr.bf16.mxu0 0
        %1678 = vmatpush1.bf16.msra.mxu0 0
        %1679 = vmatprep.subr.bf16.mxu0 0
        %1680 = vmatpush1.bf16.msra.mxu0 0
        %1681 = vmatprep.subr.bf16.mxu0 0
        %1682 = vmatpush1.bf16.msra.mxu0 0
        %1683 = vmatprep.subr.bf16.mxu0 0
        %1684 = vmatpush1.bf16.msra.mxu0 0
        %1685 = vmatprep.subr.bf16.mxu0 0
        %1686 = vmatpush1.bf16.msra.mxu0 0
        %1687 = vmatprep.subr.bf16.mxu0 0
        %1688 = vmatpush1.bf16.msra.mxu0 0
        %1689 = vmatprep.subr.bf16.mxu0 0
        %1690 = vmatpush1.bf16.msra.mxu0 0
        %1691 = vmatprep.subr.bf16.mxu0 0
        %1692 = vmatpush1.bf16.msra.mxu0 0
        %1693 = vmatprep.subr.bf16.mxu0 0
        %1694 = vmatpush1.bf16.msra.mxu0 0
        %1695 = vmatprep.subr.bf16.mxu0 0
        %1696 = vmatpush1.bf16.msra.mxu0 0
        %1697 = vmatprep.subr.bf16.mxu0 0
        %1698 = vmatpush1.bf16.msra.mxu0 0
        %1699 = vmatprep.subr.bf16.mxu0 0
        %1700 = vmatpush1.bf16.msra.mxu0 0
        %1701 = vmatprep.subr.bf16.mxu0 0
        %1702 = vmatpush1.bf16.msra.mxu0 0
        %1703 = vmatprep.mubr.bf16.mxu0 0
        %1704 = vmatmul.mubr.bf16.gmra.mrb[0].mxu0 %v1605
        %v1705 = vpop.f32.mrb[0].mxu0
        %v1706 = vadd.f32 %v1657, %v1705
        %v1707 = vpop.f32.mrb[0].mxu0
        %v1708 = vpop.f32.mrb[0].mxu0
        %v1709 = vadd.f32 %v1657, %v1708
        %v1710 = vpop.f32.mrb[0].mxu0
        %1711 = vdwg.mxu0
        %v1712 = vpack.c.bf16 %v1709, %v1706
        %v1713 = vld [vmem:[#allocation14] sm:$0xf]
        %v1714 = vld [vmem:[#allocation14 + $0x4] sm:$0xf]
        %v1715 = vld [vmem:[%s25] sm:$0xf]
        %v1716 = vld [vmem:[%s25 + $0x4] sm:$0xf]
        %v1717 = vld [vmem:[%s25 + $0x8] sm:$0xf]
        %v1718 = vld [vmem:[%s25 + $0xc] sm:$0xf]
        %v1719 = vld [vmem:[%s29] sm:$0xf]
        %v1720 = vld [vmem:[%s29 + $0x4] sm:$0xf]
        %v1721 = vld [vmem:[%s29 + $0x8] sm:$0xf]
        %v1722 = vld [vmem:[%s29 + $0xc] sm:$0xf]
        %v1723 = vld [vmem:[#allocation17] sm:$0x1]
        %v1725 = vlaneseq
        %v1726 = vshrl.u32 %v1725, 7
        %v1727 = vsub.s32 0, %v1726
        %v1728 = vrot.slane %v1723, %v1727
        %v1730 = vadd.f32 %v1728, 0.0
        %v1731 = vld [vmem:[#allocation19] sm:$0x1]
        %v1733 = vlaneseq
        %v1734 = vshrl.u32 %v1733, 7
        %v1735 = vsub.s32 0, %v1734
        %v1736 = vrot.slane %v1731, %v1735
        %v1738 = vadd.f32 %v1736, 0.0
        %v1741 = vunpack.c.l.b16 %v1713
        %v1742 = vunpack.c.l.b16 %v1714
        %v1743 = vpack.c.b16 %v1742, %v1741
        %v1746 = vsel %vm1265, %v1521, 0
        %v1749 = vsel %vm1265, %v1522, 0
        %v1752 = vsel %vm1265, %v1523, 0
        %v1755 = vsel %vm1265, %v1524, 0
        %v1758 = vsel %vm1265, %v1525, 0
        %v1761 = vsel %vm1265, %v1526, 0
        %v1764 = vsel %vm1265, %v1527, 0
        %v1767 = vsel %vm1265, %v1528, 0
        %1769 = vmatprep.subr.bf16.mxu0 0
        %1770 = vmatpush1.bf16.msra.mxu0 %v1743
        %1771 = vmatprep.subr.bf16.mxu0 0
        %1772 = vmatpush1.bf16.msra.mxu0 0
        %1773 = vmatprep.subr.bf16.mxu0 0
        %1774 = vmatpush1.bf16.msra.mxu0 0
        %1775 = vmatprep.subr.bf16.mxu0 0
        %1776 = vmatpush1.bf16.msra.mxu0 0
        %1777 = vmatprep.subr.bf16.mxu0 0
        %1778 = vmatpush1.bf16.msra.mxu0 0
        %1779 = vmatprep.subr.bf16.mxu0 0
        %1780 = vmatpush1.bf16.msra.mxu0 0
        %1781 = vmatprep.subr.bf16.mxu0 0
        %1782 = vmatpush1.bf16.msra.mxu0 0
        %1783 = vmatprep.subr.bf16.mxu0 0
        %1784 = vmatpush1.bf16.msra.mxu0 0
        %1785 = vmatprep.subr.bf16.mxu0 0
        %1786 = vmatpush1.bf16.msra.mxu0 0
        %1787 = vmatprep.subr.bf16.mxu0 0
        %1788 = vmatpush1.bf16.msra.mxu0 0
        %1789 = vmatprep.subr.bf16.mxu0 0
        %1790 = vmatpush1.bf16.msra.mxu0 0
        %1791 = vmatprep.subr.bf16.mxu0 0
        %1792 = vmatpush1.bf16.msra.mxu0 0
        %1793 = vmatprep.subr.bf16.mxu0 0
        %1794 = vmatpush1.bf16.msra.mxu0 0
        %1795 = vmatprep.subr.bf16.mxu0 0
        %1796 = vmatpush1.bf16.msra.mxu0 0
        %1797 = vmatprep.subr.bf16.mxu0 0
        %1798 = vmatpush1.bf16.msra.mxu0 0
        %1799 = vmatprep.subr.bf16.mxu0 0
        %1800 = vmatpush1.bf16.msra.mxu0 0
        %1801 = vmatprep.mubr.bf16.mxu0 0
        %1802 = vmatmul.mubr.bf16.gmra.mrb[0].mxu0 %v1746
        %v1803 = vpop.f32.mrb[0].mxu0
        %v1804 = vadd.f32 0.0, %v1803
        %v1805 = vpop.f32.mrb[0].mxu0
        %v1806 = vpop.f32.mrb[0].mxu0
        %v1807 = vadd.f32 0.0, %v1806
        %v1808 = vpop.f32.mrb[0].mxu0
        %1809 = vmatprep.mubr.bf16.mxu0 0
        %1810 = vmatmul.mubr.bf16.gmra.mrb[0].mxu0 %v1749
        %v1811 = vpop.f32.mrb[0].mxu0
        %v1812 = vadd.f32 0.0, %v1811
        %v1813 = vpop.f32.mrb[0].mxu0
        %v1814 = vpop.f32.mrb[0].mxu0
        %v1815 = vadd.f32 0.0, %v1814
        %v1816 = vpop.f32.mrb[0].mxu0
        %1817 = vmatprep.mubr.bf16.mxu0 0
        %1818 = vmatmul.mubr.bf16.gmra.mrb[0].mxu0 %v1752
        %v1819 = vpop.f32.mrb[0].mxu0
        %v1820 = vadd.f32 0.0, %v1819
        %v1821 = vpop.f32.mrb[0].mxu0
        %v1822 = vpop.f32.mrb[0].mxu0
        %v1823 = vadd.f32 0.0, %v1822
        %v1824 = vpop.f32.mrb[0].mxu0
        %1825 = vmatprep.mubr.bf16.mxu0 0
        %1826 = vmatmul.mubr.bf16.gmra.mrb[0].mxu0 %v1755
        %v1827 = vpop.f32.mrb[0].mxu0
        %v1828 = vadd.f32 0.0, %v1827
        %v1829 = vpop.f32.mrb[0].mxu0
        %v1830 = vpop.f32.mrb[0].mxu0
        %v1831 = vadd.f32 0.0, %v1830
        %v1832 = vpop.f32.mrb[0].mxu0
        %1833 = vmatprep.mubr.bf16.mxu0 0
        %1834 = vmatmul.mubr.bf16.gmra.mrb[0].mxu0 %v1758
        %v1835 = vpop.f32.mrb[0].mxu0
        %v1836 = vadd.f32 0.0, %v1835
        %v1837 = vpop.f32.mrb[0].mxu0
        %v1838 = vpop.f32.mrb[0].mxu0
        %v1839 = vadd.f32 0.0, %v1838
        %v1840 = vpop.f32.mrb[0].mxu0
        %1841 = vmatprep.mubr.bf16.mxu0 0
        %1842 = vmatmul.mubr.bf16.gmra.mrb[0].mxu0 %v1761
        %v1843 = vpop.f32.mrb[0].mxu0
        %v1844 = vadd.f32 0.0, %v1843
        %v1845 = vpop.f32.mrb[0].mxu0
        %v1846 = vpop.f32.mrb[0].mxu0
        %v1847 = vadd.f32 0.0, %v1846
        %v1848 = vpop.f32.mrb[0].mxu0
        %1849 = vmatprep.mubr.bf16.mxu0 0
        %1850 = vmatmul.mubr.bf16.gmra.mrb[0].mxu0 %v1764
        %v1851 = vpop.f32.mrb[0].mxu0
        %v1852 = vadd.f32 0.0, %v1851
        %v1853 = vpop.f32.mrb[0].mxu0
        %v1854 = vpop.f32.mrb[0].mxu0
        %v1855 = vadd.f32 0.0, %v1854
        %v1856 = vpop.f32.mrb[0].mxu0
        %1857 = vmatprep.mubr.bf16.mxu0 0
        %1858 = vmatmul.mubr.bf16.gmra.mrb[0].mxu0 %v1767
        %v1859 = vpop.f32.mrb[0].mxu0
        %v1860 = vadd.f32 0.0, %v1859
        %v1861 = vpop.f32.mrb[0].mxu0
        %v1862 = vpop.f32.mrb[0].mxu0
        %v1863 = vadd.f32 0.0, %v1862
        %v1864 = vpop.f32.mrb[0].mxu0
        %1865 = vdwg.mxu0
        %v1867 = vcombine.high %v1583, %v1583
        %v1869 = vunpack.c.l.s4 1966171168
        %v1870 = vunpack.c.0.s8 %v1869
        %v1871 = vlaneseq
        %v1872 = vshrl.u32 %v1871, 7
        %v1873 = vsub.s32 %v1870, %v1872
        %v1874 = vrot.slane %v1583, %v1873
        %v1876 = vunpack.c.l.s4 1966171168
        %v1877 = vunpack.c.0.s8 %v1876
        %v1878 = vlaneseq
        %v1879 = vshrl.u32 %v1878, 7
        %v1880 = vsub.s32 %v1877, %v1879
        %v1881 = vrot.slane %v1867, %v1880
        %v1882 = vcombine.high %v1874, %v1874
        %v1883 = vcombine.high %v1881, %v1881
        %v1885 = vunpack.c.l.s4 1966171168
        %v1886 = vunpack.c.0.s8 %v1885
        %v1887 = vlaneseq
        %v1888 = vshrl.u32 %v1887, 7
        %v1889 = vsub.s32 %v1886, %v1888
        %v1890 = vrot.slane %v1874, %v1889
        %v1892 = vunpack.c.l.s4 1966171168
        %v1893 = vunpack.c.0.s8 %v1892
        %v1894 = vlaneseq
        %v1895 = vshrl.u32 %v1894, 7
        %v1896 = vsub.s32 %v1893, %v1895
        %v1897 = vrot.slane %v1881, %v1896
        %v1899 = vunpack.c.l.s4 1966171168
        %v1900 = vunpack.c.0.s8 %v1899
        %v1901 = vlaneseq
        %v1902 = vshrl.u32 %v1901, 7
        %v1903 = vsub.s32 %v1900, %v1902
        %v1904 = vrot.slane %v1882, %v1903
        %v1906 = vunpack.c.l.s4 1966171168
        %v1907 = vunpack.c.0.s8 %v1906
        %v1908 = vlaneseq
        %v1909 = vshrl.u32 %v1908, 7
        %v1910 = vsub.s32 %v1907, %v1909
        %v1911 = vrot.slane %v1883, %v1910
        %v1912 = vcombine.high %v1890, %v1890
        %v1913 = vcombine.high %v1897, %v1897
        %v1914 = vcombine.high %v1904, %v1904
        %v1915 = vcombine.high %v1911, %v1911
        %v1916 = vlaneseq
        %v1917 = vshrl.u32 %v1916, 7
        %v1918 = vsub.s32 0, %v1917
        %v1919 = vrot.slane %v1890, %v1918
        %v1920 = vlaneseq
        %v1921 = vshrl.u32 %v1920, 7
        %v1922 = vsub.s32 0, %v1921
        %v1923 = vrot.slane %v1904, %v1922
        %v1924 = vlaneseq
        %v1925 = vshrl.u32 %v1924, 7
        %v1926 = vsub.s32 0, %v1925
        %v1927 = vrot.slane %v1912, %v1926
        %v1928 = vlaneseq
        %v1929 = vshrl.u32 %v1928, 7
        %v1930 = vsub.s32 0, %v1929
        %v1931 = vrot.slane %v1914, %v1930
        %v1932 = vlaneseq
        %v1933 = vshrl.u32 %v1932, 7
        %v1934 = vsub.s32 0, %v1933
        %v1935 = vrot.slane %v1897, %v1934
        %v1936 = vlaneseq
        %v1937 = vshrl.u32 %v1936, 7
        %v1938 = vsub.s32 0, %v1937
        %v1939 = vrot.slane %v1911, %v1938
        %v1940 = vlaneseq
        %v1941 = vshrl.u32 %v1940, 7
        %v1942 = vsub.s32 0, %v1941
        %v1943 = vrot.slane %v1913, %v1942
        %v1944 = vlaneseq
        %v1945 = vshrl.u32 %v1944, 7
        %v1946 = vsub.s32 0, %v1945
        %v1947 = vrot.slane %v1915, %v1946
        %v1956 = vmul.f32 %v1919, %v1642
        %v1957 = vmul.f32 %v1919, %v1645
        %v1958 = vmul.f32 %v1923, %v1642
        %v1959 = vmul.f32 %v1923, %v1645
        %v1960 = vmul.f32 %v1927, %v1642
        %v1961 = vmul.f32 %v1927, %v1645
        %v1962 = vmul.f32 %v1931, %v1642
        %v1963 = vmul.f32 %v1931, %v1645
        %v1964 = vmul.f32 %v1935, %v1642
        %v1965 = vmul.f32 %v1935, %v1645
        %v1966 = vmul.f32 %v1939, %v1642
        %v1967 = vmul.f32 %v1939, %v1645
        %v1968 = vmul.f32 %v1943, %v1642
        %v1969 = vmul.f32 %v1943, %v1645
        %v1970 = vmul.f32 %v1947, %v1642
        %v1971 = vmul.f32 %v1947, %v1645
        %v1972 = vadd.f32 %v1956, %v1804
        %v1973 = vadd.f32 %v1957, %v1807
        %v1974 = vadd.f32 %v1958, %v1812
        %v1975 = vadd.f32 %v1959, %v1815
        %v1976 = vadd.f32 %v1960, %v1820
        %v1977 = vadd.f32 %v1961, %v1823
        %v1978 = vadd.f32 %v1962, %v1828
        %v1979 = vadd.f32 %v1963, %v1831
        %v1980 = vadd.f32 %v1964, %v1836
        %v1981 = vadd.f32 %v1965, %v1839
        %v1982 = vadd.f32 %v1966, %v1844
        %v1983 = vadd.f32 %v1967, %v1847
        %v1984 = vadd.f32 %v1968, %v1852
        %v1985 = vadd.f32 %v1969, %v1855
        %v1986 = vadd.f32 %v1970, %v1860
        %v1987 = vadd.f32 %v1971, %v1863
        %vm1988 = vcmask 64512
        %v1989 = vsel %vm1988, %v1972, 0.0
        %1990 = vadd.xlane.f32.xlu0 %v1989
        %v1991 = vpop.xlane.xlu0 %1990
        %v1992 = vsel %vm1988, %v1973, 0.0
        %1993 = vadd.xlane.f32.xlu0 %v1992
        %v1994 = vpop.xlane.xlu0 %1993
        %v1995 = vsel %vm1988, %v1974, 0.0
        %1996 = vadd.xlane.f32.xlu0 %v1995
        %v1997 = vpop.xlane.xlu0 %1996
        %v1998 = vsel %vm1988, %v1975, 0.0
        %1999 = vadd.xlane.f32.xlu0 %v1998
        %v2000 = vpop.xlane.xlu0 %1999
        %v2001 = vsel %vm1988, %v1976, 0.0
        %2002 = vadd.xlane.f32.xlu0 %v2001
        %v2003 = vpop.xlane.xlu0 %2002
        %v2004 = vsel %vm1988, %v1977, 0.0
        %2005 = vadd.xlane.f32.xlu0 %v2004
        %v2006 = vpop.xlane.xlu0 %2005
        %v2007 = vsel %vm1988, %v1978, 0.0
        %2008 = vadd.xlane.f32.xlu0 %v2007
        %v2009 = vpop.xlane.xlu0 %2008
        %v2010 = vsel %vm1988, %v1979, 0.0
        %2011 = vadd.xlane.f32.xlu0 %v2010
        %v2012 = vpop.xlane.xlu0 %2011
        %v2013 = vsel %vm1988, %v1980, 0.0
        %2014 = vadd.xlane.f32.xlu0 %v2013
        %v2015 = vpop.xlane.xlu0 %2014
        %v2016 = vsel %vm1988, %v1981, 0.0
        %2017 = vadd.xlane.f32.xlu0 %v2016
        %v2018 = vpop.xlane.xlu0 %2017
        %v2019 = vsel %vm1988, %v1982, 0.0
        %2020 = vadd.xlane.f32.xlu0 %v2019
        %v2021 = vpop.xlane.xlu0 %2020
        %v2022 = vsel %vm1988, %v1983, 0.0
        %2023 = vadd.xlane.f32.xlu0 %v2022
        %v2024 = vpop.xlane.xlu0 %2023
        %v2025 = vsel %vm1988, %v1984, 0.0
        %2026 = vadd.xlane.f32.xlu0 %v2025
        %v2027 = vpop.xlane.xlu0 %2026
        %v2028 = vsel %vm1988, %v1985, 0.0
        %2029 = vadd.xlane.f32.xlu0 %v2028
        %v2030 = vpop.xlane.xlu0 %2029
        %v2031 = vsel %vm1988, %v1986, 0.0
        %2032 = vadd.xlane.f32.xlu0 %v2031
        %v2033 = vpop.xlane.xlu0 %2032
        %v2034 = vsel %vm1988, %v1987, 0.0
        %2035 = vadd.xlane.f32.xlu0 %v2034
        %v2036 = vpop.xlane.xlu0 %2035
        %v2037 = vmul.f32 %v1991, 0.35355338
        %v2038 = vmul.f32 %v1994, 0.35355338
        %v2039 = vmul.f32 %v1997, 0.35355338
        %v2040 = vmul.f32 %v2000, 0.35355338
        %v2041 = vmul.f32 %v2003, 0.35355338
        %v2042 = vmul.f32 %v2006, 0.35355338
        %v2043 = vmul.f32 %v2009, 0.35355338
        %v2044 = vmul.f32 %v2012, 0.35355338
        %v2045 = vmul.f32 %v2015, 0.35355338
        %v2046 = vmul.f32 %v2018, 0.35355338
        %v2047 = vmul.f32 %v2021, 0.35355338
        %v2048 = vmul.f32 %v2024, 0.35355338
        %v2049 = vmul.f32 %v2027, 0.35355338
        %v2050 = vmul.f32 %v2030, 0.35355338
        %v2051 = vmul.f32 %v2033, 0.35355338
        %v2052 = vmul.f32 %v2036, 0.35355338
        %v2053 = vsel %vm1198, 1, 0
        %v2054 = vlaneseq
        %v2055 = vshrl.u32 %v2054, 7
        %v2056 = vsub.s32 0, %v2055
        %v2057 = vrot.slane %v2053, %v2056
        %vm2058 = vcmp.eq.s32.totalorder %v2057, 1
        %v2075 = vlaneseq
        %v2076 = vand.u32 %v2075, 127
        %v2077 = vlaneseq
        %v2078 = vshrl.u32 %v2077, 7
        %v2079 = vsub.s32 %v2076, %v2078
        %v2080 = vrot.slane %v2037, %v2079
        %v2081 = vadd.s32 %v2076, 4294967288
        %v2082 = vlaneseq
        %v2083 = vshrl.u32 %v2082, 7
        %v2084 = vsub.s32 %v2081, %v2083
        %v2085 = vrot.slane %v2038, %v2084
        %vm2086 = vcmask 130112
        %v2087 = vsel %vm2086, %v2085, %v2080
        %v2088 = vlaneseq
        %v2089 = vshrl.u32 %v2088, 7
        %v2090 = vsub.s32 %v2076, %v2089
        %v2091 = vrot.slane %v2039, %v2090
        %v2092 = vlaneseq
        %v2093 = vshrl.u32 %v2092, 7
        %v2094 = vsub.s32 %v2081, %v2093
        %v2095 = vrot.slane %v2040, %v2094
        %v2096 = vsel %vm2086, %v2095, %v2091
        %v2097 = vlaneseq
        %v2098 = vshrl.u32 %v2097, 7
        %v2099 = vsub.s32 %v2076, %v2098
        %v2100 = vrot.slane %v2041, %v2099
        %v2101 = vlaneseq
        %v2102 = vshrl.u32 %v2101, 7
        %v2103 = vsub.s32 %v2081, %v2102
        %v2104 = vrot.slane %v2042, %v2103
        %v2105 = vsel %vm2086, %v2104, %v2100
        %v2106 = vlaneseq
        %v2107 = vshrl.u32 %v2106, 7
        %v2108 = vsub.s32 %v2076, %v2107
        %v2109 = vrot.slane %v2043, %v2108
        %v2110 = vlaneseq
        %v2111 = vshrl.u32 %v2110, 7
        %v2112 = vsub.s32 %v2081, %v2111
        %v2113 = vrot.slane %v2044, %v2112
        %v2114 = vsel %vm2086, %v2113, %v2109
        %v2115 = vlaneseq
        %v2116 = vshrl.u32 %v2115, 7
        %v2117 = vsub.s32 %v2076, %v2116
        %v2118 = vrot.slane %v2045, %v2117
        %v2119 = vlaneseq
        %v2120 = vshrl.u32 %v2119, 7
        %v2121 = vsub.s32 %v2081, %v2120
        %v2122 = vrot.slane %v2046, %v2121
        %v2123 = vsel %vm2086, %v2122, %v2118
        %v2124 = vlaneseq
        %v2125 = vshrl.u32 %v2124, 7
        %v2126 = vsub.s32 %v2076, %v2125
        %v2127 = vrot.slane %v2047, %v2126
        %v2128 = vlaneseq
        %v2129 = vshrl.u32 %v2128, 7
        %v2130 = vsub.s32 %v2081, %v2129
        %v2131 = vrot.slane %v2048, %v2130
        %v2132 = vsel %vm2086, %v2131, %v2127
        %v2133 = vlaneseq
        %v2134 = vshrl.u32 %v2133, 7
        %v2135 = vsub.s32 %v2076, %v2134
        %v2136 = vrot.slane %v2049, %v2135
        %v2137 = vlaneseq
        %v2138 = vshrl.u32 %v2137, 7
        %v2139 = vsub.s32 %v2081, %v2138
        %v2140 = vrot.slane %v2050, %v2139
        %v2141 = vsel %vm2086, %v2140, %v2136
        %v2142 = vlaneseq
        %v2143 = vshrl.u32 %v2142, 7
        %v2144 = vsub.s32 %v2076, %v2143
        %v2145 = vrot.slane %v2051, %v2144
        %v2146 = vlaneseq
        %v2147 = vshrl.u32 %v2146, 7
        %v2148 = vsub.s32 %v2081, %v2147
        %v2149 = vrot.slane %v2052, %v2148
        %v2150 = vsel %vm2086, %v2149, %v2145
        %vm2151 = vcmask 1041409
        %v2152 = vsel %vm2151, %v2096, %v2087
        %vm2153 = vcmask 1042434
        %v2154 = vsel %vm2153, %v2105, %v2152
        %vm2155 = vcmask 1043459
        %v2156 = vsel %vm2155, %v2114, %v2154
        %vm2157 = vcmask 1044484
        %v2158 = vsel %vm2157, %v2123, %v2156
        %vm2159 = vcmask 1045509
        %v2160 = vsel %vm2159, %v2132, %v2158
        %vm2161 = vcmask 1046534
        %v2162 = vsel %vm2161, %v2141, %v2160
        %vm2163 = vcmask 1047559
        %v2164 = vsel %vm2163, %v2150, %v2162
        %v2166 = vsel %vm2058, %v2164, -3.4028235e+38
        %v2167 = vsel %vm1265, %v2166, -inf
        %2168 = vmax.xlane.f32.xlu0 %v2167
        %v2169 = vpop.xlane.xlu0 %2168
        %v2170 = vsub.f32 %v2166, %v2169
        %v2171 = vmul.f32 %v2170, 1.442695
        %v2172 = vpow.pop %v2171
        %v2173 = vsel %vm1265, %v2172, 0.0
        %2174 = vadd.xlane.f32.xlu0 %v2173
        %v2175 = vpop.xlane.xlu0 %2174
        %v2176 = vrcp.pop %v2175
        %v2177 = vmul.f32 %v2172, %v2176
        %v2178 = vpack.c.bf16 %v2177, %v2177
        %v2180 = vsel %vm1265, %v2178, 0
        %2182 = vmatprep.subr.bf16.mxu0 0
        %2183 = vmatpush1.bf16.msra.mxu0 %v1712
        %2184 = vmatprep.subr.bf16.mxu0 0
        %2185 = vmatpush1.bf16.msra.mxu0 0
        %2186 = vmatprep.subr.bf16.mxu0 0
        %2187 = vmatpush1.bf16.msra.mxu0 0
        %2188 = vmatprep.subr.bf16.mxu0 0
        %2189 = vmatpush1.bf16.msra.mxu0 0
        %2190 = vmatprep.subr.bf16.mxu0 0
        %2191 = vmatpush1.bf16.msra.mxu0 0
        %2192 = vmatprep.subr.bf16.mxu0 0
        %2193 = vmatpush1.bf16.msra.mxu0 0
        %2194 = vmatprep.subr.bf16.mxu0 0
        %2195 = vmatpush1.bf16.msra.mxu0 0
        %2196 = vmatprep.subr.bf16.mxu0 0
        %2197 = vmatpush1.bf16.msra.mxu0 0
        %2198 = vmatprep.subr.bf16.mxu0 0
        %2199 = vmatpush1.bf16.msra.mxu0 0
        %2200 = vmatprep.subr.bf16.mxu0 0
        %2201 = vmatpush1.bf16.msra.mxu0 0
        %2202 = vmatprep.subr.bf16.mxu0 0
        %2203 = vmatpush1.bf16.msra.mxu0 0
        %2204 = vmatprep.subr.bf16.mxu0 0
        %2205 = vmatpush1.bf16.msra.mxu0 0
        %2206 = vmatprep.subr.bf16.mxu0 0
        %2207 = vmatpush1.bf16.msra.mxu0 0
        %2208 = vmatprep.subr.bf16.mxu0 0
        %2209 = vmatpush1.bf16.msra.mxu0 0
        %2210 = vmatprep.subr.bf16.mxu0 0
        %2211 = vmatpush1.bf16.msra.mxu0 0
        %2212 = vmatprep.subr.bf16.mxu0 0
        %2213 = vmatpush1.bf16.msra.mxu0 0
        %2214 = vmatprep.mubr.bf16.mxu0 0
        %2215 = vmatmul.mubr.bf16.gmra.mrb[0].mxu0 %v2180
        %v2216 = vpop.f32.mrb[0].mxu0
        %v2217 = vadd.f32 0.0, %v2216
        %v2218 = vpop.f32.mrb[0].mxu0
        %v2219 = vpop.f32.mrb[0].mxu0
        %v2220 = vpop.f32.mrb[0].mxu0
        %2221 = vdwg.mxu0
        %v2222 = vpack.c.bf16 %v2217, %v2217
        %v2224 = vsel %vm1988, %v2222, 0
        %vm2226 = vcmask 1043456
        %v2228 = vsel %vm2226, %v1715, 0
        %2230 = vmatprep.subr.bf16.mxu0 0
        %2231 = vmatpush1.bf16.msra.mxu0 %v2228
        %2232 = vmatprep.subr.bf16.mxu0 0
        %2233 = vmatpush1.bf16.msra.mxu0 0
        %2234 = vmatprep.subr.bf16.mxu0 0
        %2235 = vmatpush1.bf16.msra.mxu0 0
        %2236 = vmatprep.subr.bf16.mxu0 0
        %2237 = vmatpush1.bf16.msra.mxu0 0
        %2238 = vmatprep.subr.bf16.mxu0 0
        %2239 = vmatpush1.bf16.msra.mxu0 0
        %2240 = vmatprep.subr.bf16.mxu0 0
        %2241 = vmatpush1.bf16.msra.mxu0 0
        %2242 = vmatprep.subr.bf16.mxu0 0
        %2243 = vmatpush1.bf16.msra.mxu0 0
        %2244 = vmatprep.subr.bf16.mxu0 0
        %2245 = vmatpush1.bf16.msra.mxu0 0
        %2246 = vmatprep.subr.bf16.mxu0 0
        %2247 = vmatpush1.bf16.msra.mxu0 0
        %2248 = vmatprep.subr.bf16.mxu0 0
        %2249 = vmatpush1.bf16.msra.mxu0 0
        %2250 = vmatprep.subr.bf16.mxu0 0
        %2251 = vmatpush1.bf16.msra.mxu0 0
        %2252 = vmatprep.subr.bf16.mxu0 0
        %2253 = vmatpush1.bf16.msra.mxu0 0
        %2254 = vmatprep.subr.bf16.mxu0 0
        %2255 = vmatpush1.bf16.msra.mxu0 0
        %2256 = vmatprep.subr.bf16.mxu0 0
        %2257 = vmatpush1.bf16.msra.mxu0 0
        %2258 = vmatprep.subr.bf16.mxu0 0
        %2259 = vmatpush1.bf16.msra.mxu0 0
        %2260 = vmatprep.subr.bf16.mxu0 0
        %2261 = vmatpush1.bf16.msra.mxu0 0
        %2262 = vmatprep.mubr.bf16.mxu0 0
        %2263 = vmatmul.mubr.bf16.gmra.mrb[0].mxu0 %v2224
        %v2264 = vpop.f32.mrb[0].mxu0
        %v2265 = vadd.f32 0.0, %v2264
        %v2266 = vpop.f32.mrb[0].mxu0
        %v2267 = vpop.f32.mrb[0].mxu0
        %v2268 = vpop.f32.mrb[0].mxu0
        %2269 = vdwg.mxu0
        %v2270 = vadd.f32 %v1730, %v2265
        %v2271 = vpack.c.bf16 %v1973, %v1972
        %v2272 = vpack.c.bf16 %v1975, %v1974
        %v2273 = vpack.c.bf16 %v1977, %v1976
        %v2274 = vpack.c.bf16 %v1979, %v1978
        %v2275 = vpack.c.bf16 %v1981, %v1980
        %v2276 = vpack.c.bf16 %v1983, %v1982
        %v2277 = vpack.c.bf16 %v1985, %v1984
        %v2278 = vpack.c.bf16 %v1987, %v1986
        %v2280 = vsel %vm1988, %v2271, 0
        %v2283 = vsel %vm1988, %v2272, 0
        %v2286 = vsel %vm1988, %v2273, 0
        %v2289 = vsel %vm1988, %v2274, 0
        %v2292 = vsel %vm1988, %v2275, 0
        %v2295 = vsel %vm1988, %v2276, 0
        %v2298 = vsel %vm1988, %v2277, 0
        %v2301 = vsel %vm1988, %v2278, 0
        %v2304 = vsel %vm2226, %v1719, 0
        %2306 = vmatprep.subr.bf16.mxu0 0
        %2307 = vmatpush1.bf16.msra.mxu0 %v2304
        %2308 = vmatprep.subr.bf16.mxu0 0
        %2309 = vmatpush1.bf16.msra.mxu0 0
        %2310 = vmatprep.subr.bf16.mxu0 0
        %2311 = vmatpush1.bf16.msra.mxu0 0
        %2312 = vmatprep.subr.bf16.mxu0 0
        %2313 = vmatpush1.bf16.msra.mxu0 0
        %2314 = vmatprep.subr.bf16.mxu0 0
        %2315 = vmatpush1.bf16.msra.mxu0 0
        %2316 = vmatprep.subr.bf16.mxu0 0
        %2317 = vmatpush1.bf16.msra.mxu0 0
        %2318 = vmatprep.subr.bf16.mxu0 0
        %2319 = vmatpush1.bf16.msra.mxu0 0
        %2320 = vmatprep.subr.bf16.mxu0 0
        %2321 = vmatpush1.bf16.msra.mxu0 0
        %2322 = vmatprep.subr.bf16.mxu0 0
        %2323 = vmatpush1.bf16.msra.mxu0 0
        %2324 = vmatprep.subr.bf16.mxu0 0
        %2325 = vmatpush1.bf16.msra.mxu0 0
        %2326 = vmatprep.subr.bf16.mxu0 0
        %2327 = vmatpush1.bf16.msra.mxu0 0
        %2328 = vmatprep.subr.bf16.mxu0 0
        %2329 = vmatpush1.bf16.msra.mxu0 0
        %2330 = vmatprep.subr.bf16.mxu0 0
        %2331 = vmatpush1.bf16.msra.mxu0 0
        %2332 = vmatprep.subr.bf16.mxu0 0
        %2333 = vmatpush1.bf16.msra.mxu0 0
        %2334 = vmatprep.subr.bf16.mxu0 0
        %2335 = vmatpush1.bf16.msra.mxu0 0
        %2336 = vmatprep.subr.bf16.mxu0 0
        %2337 = vmatpush1.bf16.msra.mxu0 0
        %2338 = vmatprep.mubr.bf16.mxu0 0
        %2339 = vmatmul.mubr.bf16.gmra.mrb[0].mxu0 %v2280
        %v2340 = vpop.f32.mrb[0].mxu0
        %v2341 = vadd.f32 0.0, %v2340
        %v2342 = vpop.f32.mrb[0].mxu0
        %v2343 = vpop.f32.mrb[0].mxu0
        %v2344 = vadd.f32 0.0, %v2343
        %v2345 = vpop.f32.mrb[0].mxu0
        %2346 = vmatprep.mubr.bf16.mxu0 0
        %2347 = vmatmul.mubr.bf16.gmra.mrb[0].mxu0 %v2283
        %v2348 = vpop.f32.mrb[0].mxu0
        %v2349 = vadd.f32 0.0, %v2348
        %v2350 = vpop.f32.mrb[0].mxu0
        %v2351 = vpop.f32.mrb[0].mxu0
        %v2352 = vadd.f32 0.0, %v2351
        %v2353 = vpop.f32.mrb[0].mxu0
        %2354 = vmatprep.mubr.bf16.mxu0 0
        %2355 = vmatmul.mubr.bf16.gmra.mrb[0].mxu0 %v2286
        %v2356 = vpop.f32.mrb[0].mxu0
        %v2357 = vadd.f32 0.0, %v2356
        %v2358 = vpop.f32.mrb[0].mxu0
        %v2359 = vpop.f32.mrb[0].mxu0
        %v2360 = vadd.f32 0.0, %v2359
        %v2361 = vpop.f32.mrb[0].mxu0
        %2362 = vmatprep.mubr.bf16.mxu0 0
        %2363 = vmatmul.mubr.bf16.gmra.mrb[0].mxu0 %v2289
        %v2364 = vpop.f32.mrb[0].mxu0
        %v2365 = vadd.f32 0.0, %v2364
        %v2366 = vpop.f32.mrb[0].mxu0
        %v2367 = vpop.f32.mrb[0].mxu0
        %v2368 = vadd.f32 0.0, %v2367
        %v2369 = vpop.f32.mrb[0].mxu0
        %2370 = vmatprep.mubr.bf16.mxu0 0
        %2371 = vmatmul.mubr.bf16.gmra.mrb[0].mxu0 %v2292
        %v2372 = vpop.f32.mrb[0].mxu0
        %v2373 = vadd.f32 0.0, %v2372
        %v2374 = vpop.f32.mrb[0].mxu0
        %v2375 = vpop.f32.mrb[0].mxu0
        %v2376 = vadd.f32 0.0, %v2375
        %v2377 = vpop.f32.mrb[0].mxu0
        %2378 = vmatprep.mubr.bf16.mxu0 0
        %2379 = vmatmul.mubr.bf16.gmra.mrb[0].mxu0 %v2295
        %v2380 = vpop.f32.mrb[0].mxu0
        %v2381 = vadd.f32 0.0, %v2380
        %v2382 = vpop.f32.mrb[0].mxu0
        %v2383 = vpop.f32.mrb[0].mxu0
        %v2384 = vadd.f32 0.0, %v2383
        %v2385 = vpop.f32.mrb[0].mxu0
        %2386 = vmatprep.mubr.bf16.mxu0 0
        %2387 = vmatmul.mubr.bf16.gmra.mrb[0].mxu0 %v2298
        %v2388 = vpop.f32.mrb[0].mxu0
        %v2389 = vadd.f32 0.0, %v2388
        %v2390 = vpop.f32.mrb[0].mxu0
        %v2391 = vpop.f32.mrb[0].mxu0
        %v2392 = vadd.f32 0.0, %v2391
        %v2393 = vpop.f32.mrb[0].mxu0
        %2394 = vmatprep.mubr.bf16.mxu0 0
        %2395 = vmatmul.mubr.bf16.gmra.mrb[0].mxu0 %v2301
        %v2396 = vpop.f32.mrb[0].mxu0
        %v2397 = vadd.f32 0.0, %v2396
        %v2398 = vpop.f32.mrb[0].mxu0
        %v2399 = vpop.f32.mrb[0].mxu0
        %v2400 = vadd.f32 0.0, %v2399
        %v2401 = vpop.f32.mrb[0].mxu0
        %2402 = vdwg.mxu0
        %v2403 = vadd.f32 %v1738, %v2341
        %v2404 = vadd.f32 %v1738, %v2344
        %v2405 = vadd.f32 %v1738, %v2349
        %v2406 = vadd.f32 %v1738, %v2352
        %v2407 = vadd.f32 %v1738, %v2357
        %v2408 = vadd.f32 %v1738, %v2360
        %v2409 = vadd.f32 %v1738, %v2365
        %v2410 = vadd.f32 %v1738, %v2368
        %v2411 = vadd.f32 %v1738, %v2373
        %v2412 = vadd.f32 %v1738, %v2376
        %v2413 = vadd.f32 %v1738, %v2381
        %v2414 = vadd.f32 %v1738, %v2384
        %v2415 = vadd.f32 %v1738, %v2389
        %v2416 = vadd.f32 %v1738, %v2392
        %v2417 = vadd.f32 %v1738, %v2397
        %v2418 = vadd.f32 %v1738, %v2400
        %2419 = vrot.lane.b32.xlu0 %v1743, 120
        %v2420 = vpop.permute.xlu0 %2419
        %2422 = vmatprep.subr.bf16.mxu0 0
        %2423 = vmatpush1.bf16.msra.mxu0 %v2420
        %2424 = vmatprep.subr.bf16.mxu0 0
        %2425 = vmatpush1.bf16.msra.mxu0 0
        %2426 = vmatprep.subr.bf16.mxu0 0
        %2427 = vmatpush1.bf16.msra.mxu0 0
        %2428 = vmatprep.subr.bf16.mxu0 0
        %2429 = vmatpush1.bf16.msra.mxu0 0
        %2430 = vmatprep.subr.bf16.mxu0 0
        %2431 = vmatpush1.bf16.msra.mxu0 0
        %2432 = vmatprep.subr.bf16.mxu0 0
        %2433 = vmatpush1.bf16.msra.mxu0 0
        %2434 = vmatprep.subr.bf16.mxu0 0
        %2435 = vmatpush1.bf16.msra.mxu0 0
        %2436 = vmatprep.subr.bf16.mxu0 0
        %2437 = vmatpush1.bf16.msra.mxu0 0
        %2438 = vmatprep.subr.bf16.mxu0 0
        %2439 = vmatpush1.bf16.msra.mxu0 0
        %2440 = vmatprep.subr.bf16.mxu0 0
        %2441 = vmatpush1.bf16.msra.mxu0 0
        %2442 = vmatprep.subr.bf16.mxu0 0
        %2443 = vmatpush1.bf16.msra.mxu0 0
        %2444 = vmatprep.subr.bf16.mxu0 0
        %2445 = vmatpush1.bf16.msra.mxu0 0
        %2446 = vmatprep.subr.bf16.mxu0 0
        %2447 = vmatpush1.bf16.msra.mxu0 0
        %2448 = vmatprep.subr.bf16.mxu0 0
        %2449 = vmatpush1.bf16.msra.mxu0 0
        %2450 = vmatprep.subr.bf16.mxu0 0
        %2451 = vmatpush1.bf16.msra.mxu0 0
        %2452 = vmatprep.subr.bf16.mxu0 0
        %2453 = vmatpush1.bf16.msra.mxu0 0
        %2454 = vmatprep.mubr.bf16.mxu0 0
        %2455 = vmatmul.mubr.bf16.gmra.mrb[0].mxu0 %v1746
        %v2456 = vpop.f32.mrb[0].mxu0
        %v2457 = vadd.f32 0.0, %v2456
        %v2458 = vpop.f32.mrb[0].mxu0
        %v2459 = vpop.f32.mrb[0].mxu0
        %v2460 = vadd.f32 0.0, %v2459
        %v2461 = vpop.f32.mrb[0].mxu0
        %2462 = vmatprep.mubr.bf16.mxu0 0
        %2463 = vmatmul.mubr.bf16.gmra.mrb[0].mxu0 %v1749
        %v2464 = vpop.f32.mrb[0].mxu0
        %v2465 = vadd.f32 0.0, %v2464
        %v2466 = vpop.f32.mrb[0].mxu0
        %v2467 = vpop.f32.mrb[0].mxu0
        %v2468 = vadd.f32 0.0, %v2467
        %v2469 = vpop.f32.mrb[0].mxu0
        %2470 = vmatprep.mubr.bf16.mxu0 0
        %2471 = vmatmul.mubr.bf16.gmra.mrb[0].mxu0 %v1752
        %v2472 = vpop.f32.mrb[0].mxu0
        %v2473 = vadd.f32 0.0, %v2472
        %v2474 = vpop.f32.mrb[0].mxu0
        %v2475 = vpop.f32.mrb[0].mxu0
        %v2476 = vadd.f32 0.0, %v2475
        %v2477 = vpop.f32.mrb[0].mxu0
        %2478 = vmatprep.mubr.bf16.mxu0 0
        %2479 = vmatmul.mubr.bf16.gmra.mrb[0].mxu0 %v1755
        %v2480 = vpop.f32.mrb[0].mxu0
        %v2481 = vadd.f32 0.0, %v2480
        %v2482 = vpop.f32.mrb[0].mxu0
        %v2483 = vpop.f32.mrb[0].mxu0
        %v2484 = vadd.f32 0.0, %v2483
        %v2485 = vpop.f32.mrb[0].mxu0
        %2486 = vmatprep.mubr.bf16.mxu0 0
        %2487 = vmatmul.mubr.bf16.gmra.mrb[0].mxu0 %v1758
        %v2488 = vpop.f32.mrb[0].mxu0
        %v2489 = vadd.f32 0.0, %v2488
        %v2490 = vpop.f32.mrb[0].mxu0
        %v2491 = vpop.f32.mrb[0].mxu0
        %v2492 = vadd.f32 0.0, %v2491
        %v2493 = vpop.f32.mrb[0].mxu0
        %2494 = vmatprep.mubr.bf16.mxu0 0
        %2495 = vmatmul.mubr.bf16.gmra.mrb[0].mxu0 %v1761
        %v2496 = vpop.f32.mrb[0].mxu0
        %v2497 = vadd.f32 0.0, %v2496
        %v2498 = vpop.f32.mrb[0].mxu0
        %v2499 = vpop.f32.mrb[0].mxu0
        %v2500 = vadd.f32 0.0, %v2499
        %v2501 = vpop.f32.mrb[0].mxu0
        %2502 = vmatprep.mubr.bf16.mxu0 0
        %2503 = vmatmul.mubr.bf16.gmra.mrb[0].mxu0 %v1764
        %v2504 = vpop.f32.mrb[0].mxu0
        %v2505 = vadd.f32 0.0, %v2504
        %v2506 = vpop.f32.mrb[0].mxu0
        %v2507 = vpop.f32.mrb[0].mxu0
        %v2508 = vadd.f32 0.0, %v2507
        %v2509 = vpop.f32.mrb[0].mxu0
        %2510 = vmatprep.mubr.bf16.mxu0 0
        %2511 = vmatmul.mubr.bf16.gmra.mrb[0].mxu0 %v1767
        %v2512 = vpop.f32.mrb[0].mxu0
        %v2513 = vadd.f32 0.0, %v2512
        %v2514 = vpop.f32.mrb[0].mxu0
        %v2515 = vpop.f32.mrb[0].mxu0
        %v2516 = vadd.f32 0.0, %v2515
        %v2517 = vpop.f32.mrb[0].mxu0
        %2518 = vdwg.mxu0
        %2535 = vrot.lane.b32.xlu0 %v2457, 8
        %v2536 = vpop.permute.xlu0 %2535
        %2537 = vrot.lane.b32.xlu0 %v2460, 8
        %v2538 = vpop.permute.xlu0 %2537
        %2539 = vrot.lane.b32.xlu0 %v2465, 8
        %v2540 = vpop.permute.xlu0 %2539
        %2541 = vrot.lane.b32.xlu0 %v2468, 8
        %v2542 = vpop.permute.xlu0 %2541
        %2543 = vrot.lane.b32.xlu0 %v2473, 8
        %v2544 = vpop.permute.xlu0 %2543
        %2545 = vrot.lane.b32.xlu0 %v2476, 8
        %v2546 = vpop.permute.xlu0 %2545
        %2547 = vrot.lane.b32.xlu0 %v2481, 8
        %v2548 = vpop.permute.xlu0 %2547
        %2549 = vrot.lane.b32.xlu0 %v2484, 8
        %v2550 = vpop.permute.xlu0 %2549
        %2551 = vrot.lane.b32.xlu0 %v2489, 8
        %v2552 = vpop.permute.xlu0 %2551
        %2553 = vrot.lane.b32.xlu0 %v2492, 8
        %v2554 = vpop.permute.xlu0 %2553
        %2555 = vrot.lane.b32.xlu0 %v2497, 8
        %v2556 = vpop.permute.xlu0 %2555
        %2557 = vrot.lane.b32.xlu0 %v2500, 8
        %v2558 = vpop.permute.xlu0 %2557
        %2559 = vrot.lane.b32.xlu0 %v2505, 8
        %v2560 = vpop.permute.xlu0 %2559
        %2561 = vrot.lane.b32.xlu0 %v2508, 8
        %v2562 = vpop.permute.xlu0 %2561
        %2563 = vrot.lane.b32.xlu0 %v2513, 8
        %v2564 = vpop.permute.xlu0 %2563
        %2565 = vrot.lane.b32.xlu0 %v2516, 8
        %v2566 = vpop.permute.xlu0 %2565
        %v2583 = vadd.f32 %v1956, %v2536
        %v2584 = vadd.f32 %v1957, %v2538
        %v2585 = vadd.f32 %v1958, %v2540
        %v2586 = vadd.f32 %v1959, %v2542
        %v2587 = vadd.f32 %v1960, %v2544
        %v2588 = vadd.f32 %v1961, %v2546
        %v2589 = vadd.f32 %v1962, %v2548
        %v2590 = vadd.f32 %v1963, %v2550
        %v2591 = vadd.f32 %v1964, %v2552
        %v2592 = vadd.f32 %v1965, %v2554
        %v2593 = vadd.f32 %v1966, %v2556
        %v2594 = vadd.f32 %v1967, %v2558
        %v2595 = vadd.f32 %v1968, %v2560
        %v2596 = vadd.f32 %v1969, %v2562
        %v2597 = vadd.f32 %v1970, %v2564
        %v2598 = vadd.f32 %v1971, %v2566
        %2615 = vrot.lane.b32.xlu0 %v2583, 120
        %v2616 = vpop.permute.xlu0 %2615
        %2617 = vrot.lane.b32.xlu0 %v2584, 120
        %v2618 = vpop.permute.xlu0 %2617
        %2619 = vrot.lane.b32.xlu0 %v2585, 120
        %v2620 = vpop.permute.xlu0 %2619
        %2621 = vrot.lane.b32.xlu0 %v2586, 120
        %v2622 = vpop.permute.xlu0 %2621
        %2623 = vrot.lane.b32.xlu0 %v2587, 120
        %v2624 = vpop.permute.xlu0 %2623
        %2625 = vrot.lane.b32.xlu0 %v2588, 120
        %v2626 = vpop.permute.xlu0 %2625
        %2627 = vrot.lane.b32.xlu0 %v2589, 120
        %v2628 = vpop.permute.xlu0 %2627
        %2629 = vrot.lane.b32.xlu0 %v2590, 120
        %v2630 = vpop.permute.xlu0 %2629
        %2631 = vrot.lane.b32.xlu0 %v2591, 120
        %v2632 = vpop.permute.xlu0 %2631
        %2633 = vrot.lane.b32.xlu0 %v2592, 120
        %v2634 = vpop.permute.xlu0 %2633
        %2635 = vrot.lane.b32.xlu0 %v2593, 120
        %v2636 = vpop.permute.xlu0 %2635
        %2637 = vrot.lane.b32.xlu0 %v2594, 120
        %v2638 = vpop.permute.xlu0 %2637
        %2639 = vrot.lane.b32.xlu0 %v2595, 120
        %v2640 = vpop.permute.xlu0 %2639
        %2641 = vrot.lane.b32.xlu0 %v2596, 120
        %v2642 = vpop.permute.xlu0 %2641
        %2643 = vrot.lane.b32.xlu0 %v2597, 120
        %v2644 = vpop.permute.xlu0 %2643
        %2645 = vrot.lane.b32.xlu0 %v2598, 120
        %v2646 = vpop.permute.xlu0 %2645
        %v2663 = vsel %vm1988, %v2616, 0.0
        %2664 = vadd.xlane.f32.xlu0 %v2663
        %v2665 = vpop.xlane.xlu0 %2664
        %v2666 = vsel %vm1988, %v2618, 0.0
        %2667 = vadd.xlane.f32.xlu0 %v2666
        %v2668 = vpop.xlane.xlu0 %2667
        %v2669 = vsel %vm1988, %v2620, 0.0
        %2670 = vadd.xlane.f32.xlu0 %v2669
        %v2671 = vpop.xlane.xlu0 %2670
        %v2672 = vsel %vm1988, %v2622, 0.0
        %2673 = vadd.xlane.f32.xlu0 %v2672
        %v2674 = vpop.xlane.xlu0 %2673
        %v2675 = vsel %vm1988, %v2624, 0.0
        %2676 = vadd.xlane.f32.xlu0 %v2675
        %v2677 = vpop.xlane.xlu0 %2676
        %v2678 = vsel %vm1988, %v2626, 0.0
        %2679 = vadd.xlane.f32.xlu0 %v2678
        %v2680 = vpop.xlane.xlu0 %2679
        %v2681 = vsel %vm1988, %v2628, 0.0
        %2682 = vadd.xlane.f32.xlu0 %v2681
        %v2683 = vpop.xlane.xlu0 %2682
        %v2684 = vsel %vm1988, %v2630, 0.0
        %2685 = vadd.xlane.f32.xlu0 %v2684
        %v2686 = vpop.xlane.xlu0 %2685
        %v2687 = vsel %vm1988, %v2632, 0.0
        %2688 = vadd.xlane.f32.xlu0 %v2687
        %v2689 = vpop.xlane.xlu0 %2688
        %v2690 = vsel %vm1988, %v2634, 0.0
        %2691 = vadd.xlane.f32.xlu0 %v2690
        %v2692 = vpop.xlane.xlu0 %2691
        %v2693 = vsel %vm1988, %v2636, 0.0
        %2694 = vadd.xlane.f32.xlu0 %v2693
        %v2695 = vpop.xlane.xlu0 %2694
        %v2696 = vsel %vm1988, %v2638, 0.0
        %2697 = vadd.xlane.f32.xlu0 %v2696
        %v2698 = vpop.xlane.xlu0 %2697
        %v2699 = vsel %vm1988, %v2640, 0.0
        %2700 = vadd.xlane.f32.xlu0 %v2699
        %v2701 = vpop.xlane.xlu0 %2700
        %v2702 = vsel %vm1988, %v2642, 0.0
        %2703 = vadd.xlane.f32.xlu0 %v2702
        %v2704 = vpop.xlane.xlu0 %2703
        %v2705 = vsel %vm1988, %v2644, 0.0
        %2706 = vadd.xlane.f32.xlu0 %v2705
        %v2707 = vpop.xlane.xlu0 %2706
        %v2708 = vsel %vm1988, %v2646, 0.0
        %2709 = vadd.xlane.f32.xlu0 %v2708
        %v2710 = vpop.xlane.xlu0 %2709
        %v2711 = vmul.f32 %v2665, 0.35355338
        %v2712 = vmul.f32 %v2668, 0.35355338
        %v2713 = vmul.f32 %v2671, 0.35355338
        %v2714 = vmul.f32 %v2674, 0.35355338
        %v2715 = vmul.f32 %v2677, 0.35355338
        %v2716 = vmul.f32 %v2680, 0.35355338
        %v2717 = vmul.f32 %v2683, 0.35355338
        %v2718 = vmul.f32 %v2686, 0.35355338
        %v2719 = vmul.f32 %v2689, 0.35355338
        %v2720 = vmul.f32 %v2692, 0.35355338
        %v2721 = vmul.f32 %v2695, 0.35355338
        %v2722 = vmul.f32 %v2698, 0.35355338
        %v2723 = vmul.f32 %v2701, 0.35355338
        %v2724 = vmul.f32 %v2704, 0.35355338
        %v2725 = vmul.f32 %v2707, 0.35355338
        %v2726 = vmul.f32 %v2710, 0.35355338
        %v2743 = vlaneseq
        %v2744 = vshrl.u32 %v2743, 7
        %v2745 = vsub.s32 %v2076, %v2744
        %v2746 = vrot.slane %v2711, %v2745
        %v2747 = vlaneseq
        %v2748 = vshrl.u32 %v2747, 7
        %v2749 = vsub.s32 %v2081, %v2748
        %v2750 = vrot.slane %v2712, %v2749
        %v2751 = vsel %vm2086, %v2750, %v2746
        %v2752 = vlaneseq
        %v2753 = vshrl.u32 %v2752, 7
        %v2754 = vsub.s32 %v2076, %v2753
        %v2755 = vrot.slane %v2713, %v2754
        %v2756 = vlaneseq
        %v2757 = vshrl.u32 %v2756, 7
        %v2758 = vsub.s32 %v2081, %v2757
        %v2759 = vrot.slane %v2714, %v2758
        %v2760 = vsel %vm2086, %v2759, %v2755
        %v2761 = vlaneseq
        %v2762 = vshrl.u32 %v2761, 7
        %v2763 = vsub.s32 %v2076, %v2762
        %v2764 = vrot.slane %v2715, %v2763
        %v2765 = vlaneseq
        %v2766 = vshrl.u32 %v2765, 7
        %v2767 = vsub.s32 %v2081, %v2766
        %v2768 = vrot.slane %v2716, %v2767
        %v2769 = vsel %vm2086, %v2768, %v2764
        %v2770 = vlaneseq
        %v2771 = vshrl.u32 %v2770, 7
        %v2772 = vsub.s32 %v2076, %v2771
        %v2773 = vrot.slane %v2717, %v2772
        %v2774 = vlaneseq
        %v2775 = vshrl.u32 %v2774, 7
        %v2776 = vsub.s32 %v2081, %v2775
        %v2777 = vrot.slane %v2718, %v2776
        %v2778 = vsel %vm2086, %v2777, %v2773
        %v2779 = vlaneseq
        %v2780 = vshrl.u32 %v2779, 7
        %v2781 = vsub.s32 %v2076, %v2780
        %v2782 = vrot.slane %v2719, %v2781
        %v2783 = vlaneseq
        %v2784 = vshrl.u32 %v2783, 7
        %v2785 = vsub.s32 %v2081, %v2784
        %v2786 = vrot.slane %v2720, %v2785
        %v2787 = vsel %vm2086, %v2786, %v2782
        %v2788 = vlaneseq
        %v2789 = vshrl.u32 %v2788, 7
        %v2790 = vsub.s32 %v2076, %v2789
        %v2791 = vrot.slane %v2721, %v2790
        %v2792 = vlaneseq
        %v2793 = vshrl.u32 %v2792, 7
        %v2794 = vsub.s32 %v2081, %v2793
        %v2795 = vrot.slane %v2722, %v2794
        %v2796 = vsel %vm2086, %v2795, %v2791
        %v2797 = vlaneseq
        %v2798 = vshrl.u32 %v2797, 7
        %v2799 = vsub.s32 %v2076, %v2798
        %v2800 = vrot.slane %v2723, %v2799
        %v2801 = vlaneseq
        %v2802 = vshrl.u32 %v2801, 7
        %v2803 = vsub.s32 %v2081, %v2802
        %v2804 = vrot.slane %v2724, %v2803
        %v2805 = vsel %vm2086, %v2804, %v2800
        %v2806 = vlaneseq
        %v2807 = vshrl.u32 %v2806, 7
        %v2808 = vsub.s32 %v2076, %v2807
        %v2809 = vrot.slane %v2725, %v2808
        %v2810 = vlaneseq
        %v2811 = vshrl.u32 %v2810, 7
        %v2812 = vsub.s32 %v2081, %v2811
        %v2813 = vrot.slane %v2726, %v2812
        %v2814 = vsel %vm2086, %v2813, %v2809
        %v2815 = vsel %vm2151, %v2760, %v2751
        %v2816 = vsel %vm2153, %v2769, %v2815
        %v2817 = vsel %vm2155, %v2778, %v2816
        %v2818 = vsel %vm2157, %v2787, %v2817
        %v2819 = vsel %vm2159, %v2796, %v2818
        %v2820 = vsel %vm2161, %v2805, %v2819
        %v2821 = vsel %vm2163, %v2814, %v2820
        %v2823 = vsel %vm2058, %v2821, -3.4028235e+38
        %v2824 = vsel %vm1265, %v2823, -inf
        %2825 = vmax.xlane.f32.xlu0 %v2824
        %v2826 = vpop.xlane.xlu0 %2825
        %v2827 = vsub.f32 %v2823, %v2826
        %v2828 = vmul.f32 %v2827, 1.442695
        %v2829 = vpow.pop %v2828
        %v2830 = vsel %vm1265, %v2829, 0.0
        %2831 = vadd.xlane.f32.xlu0 %v2830
        %v2832 = vpop.xlane.xlu0 %2831
        %v2833 = vrcp.pop %v2832
        %v2834 = vmul.f32 %v2829, %v2833
        %v2835 = vpack.c.bf16 %v2834, %v2834
        %2837 = vrot.lane.b32.xlu0 %v1712, 120
        %v2838 = vpop.permute.xlu0 %2837
        %v2841 = vsel %vm1265, %v2835, 0
        %2843 = vmatprep.subr.bf16.mxu0 0
        %2844 = vmatpush1.bf16.msra.mxu0 %v2838
        %2845 = vmatprep.subr.bf16.mxu0 0
        %2846 = vmatpush1.bf16.msra.mxu0 0
        %2847 = vmatprep.subr.bf16.mxu0 0
        %2848 = vmatpush1.bf16.msra.mxu0 0
        %2849 = vmatprep.subr.bf16.mxu0 0
        %2850 = vmatpush1.bf16.msra.mxu0 0
        %2851 = vmatprep.subr.bf16.mxu0 0
        %2852 = vmatpush1.bf16.msra.mxu0 0
        %2853 = vmatprep.subr.bf16.mxu0 0
        %2854 = vmatpush1.bf16.msra.mxu0 0
        %2855 = vmatprep.subr.bf16.mxu0 0
        %2856 = vmatpush1.bf16.msra.mxu0 0
        %2857 = vmatprep.subr.bf16.mxu0 0
        %2858 = vmatpush1.bf16.msra.mxu0 0
        %2859 = vmatprep.subr.bf16.mxu0 0
        %2860 = vmatpush1.bf16.msra.mxu0 0
        %2861 = vmatprep.subr.bf16.mxu0 0
        %2862 = vmatpush1.bf16.msra.mxu0 0
        %2863 = vmatprep.subr.bf16.mxu0 0
        %2864 = vmatpush1.bf16.msra.mxu0 0
        %2865 = vmatprep.subr.bf16.mxu0 0
        %2866 = vmatpush1.bf16.msra.mxu0 0
        %2867 = vmatprep.subr.bf16.mxu0 0
        %2868 = vmatpush1.bf16.msra.mxu0 0
        %2869 = vmatprep.subr.bf16.mxu0 0
        %2870 = vmatpush1.bf16.msra.mxu0 0
        %2871 = vmatprep.subr.bf16.mxu0 0
        %2872 = vmatpush1.bf16.msra.mxu0 0
        %2873 = vmatprep.subr.bf16.mxu0 0
        %2874 = vmatpush1.bf16.msra.mxu0 0
        %2875 = vmatprep.mubr.bf16.mxu0 0
        %2876 = vmatmul.mubr.bf16.gmra.mrb[0].mxu0 %v2841
        %v2877 = vpop.f32.mrb[0].mxu0
        %v2878 = vadd.f32 0.0, %v2877
        %v2879 = vpop.f32.mrb[0].mxu0
        %v2880 = vpop.f32.mrb[0].mxu0
        %v2881 = vpop.f32.mrb[0].mxu0
        %2882 = vdwg.mxu0
        %v2883 = vpack.c.bf16 %v2878, %v2878
        %v2885 = vsel %vm1988, %v2883, 0
        %v2888 = vsel %vm2226, %v1716, 0
        %2890 = vmatprep.subr.bf16.mxu0 0
        %2891 = vmatpush1.bf16.msra.mxu0 %v2888
        %2892 = vmatprep.subr.bf16.mxu0 0
        %2893 = vmatpush1.bf16.msra.mxu0 0
        %2894 = vmatprep.subr.bf16.mxu0 0
        %2895 = vmatpush1.bf16.msra.mxu0 0
        %2896 = vmatprep.subr.bf16.mxu0 0
        %2897 = vmatpush1.bf16.msra.mxu0 0
        %2898 = vmatprep.subr.bf16.mxu0 0
        %2899 = vmatpush1.bf16.msra.mxu0 0
        %2900 = vmatprep.subr.bf16.mxu0 0
        %2901 = vmatpush1.bf16.msra.mxu0 0
        %2902 = vmatprep.subr.bf16.mxu0 0
        %2903 = vmatpush1.bf16.msra.mxu0 0
        %2904 = vmatprep.subr.bf16.mxu0 0
        %2905 = vmatpush1.bf16.msra.mxu0 0
        %2906 = vmatprep.subr.bf16.mxu0 0
        %2907 = vmatpush1.bf16.msra.mxu0 0
        %2908 = vmatprep.subr.bf16.mxu0 0
        %2909 = vmatpush1.bf16.msra.mxu0 0
        %2910 = vmatprep.subr.bf16.mxu0 0
        %2911 = vmatpush1.bf16.msra.mxu0 0
        %2912 = vmatprep.subr.bf16.mxu0 0
        %2913 = vmatpush1.bf16.msra.mxu0 0
        %2914 = vmatprep.subr.bf16.mxu0 0
        %2915 = vmatpush1.bf16.msra.mxu0 0
        %2916 = vmatprep.subr.bf16.mxu0 0
        %2917 = vmatpush1.bf16.msra.mxu0 0
        %2918 = vmatprep.subr.bf16.mxu0 0
        %2919 = vmatpush1.bf16.msra.mxu0 0
        %2920 = vmatprep.subr.bf16.mxu0 0
        %2921 = vmatpush1.bf16.msra.mxu0 0
        %2922 = vmatprep.mubr.bf16.mxu0 0
        %2923 = vmatmul.mubr.bf16.gmra.mrb[0].mxu0 %v2885
        %v2924 = vpop.f32.mrb[0].mxu0
        %v2925 = vadd.f32 0.0, %v2924
        %v2926 = vpop.f32.mrb[0].mxu0
        %v2927 = vpop.f32.mrb[0].mxu0
        %v2928 = vpop.f32.mrb[0].mxu0
        %2929 = vdwg.mxu0
        %v2930 = vadd.f32 %v2270, %v2925
        %v2931 = vpack.c.bf16 %v2584, %v2583
        %v2932 = vpack.c.bf16 %v2586, %v2585
        %v2933 = vpack.c.bf16 %v2588, %v2587
        %v2934 = vpack.c.bf16 %v2590, %v2589
        %v2935 = vpack.c.bf16 %v2592, %v2591
        %v2936 = vpack.c.bf16 %v2594, %v2593
        %v2937 = vpack.c.bf16 %v2596, %v2595
        %v2938 = vpack.c.bf16 %v2598, %v2597
        %2947 = vrot.lane.b32.xlu0 %v2931, 120
        %v2948 = vpop.permute.xlu0 %2947
        %2949 = vrot.lane.b32.xlu0 %v2932, 120
        %v2950 = vpop.permute.xlu0 %2949
        %2951 = vrot.lane.b32.xlu0 %v2933, 120
        %v2952 = vpop.permute.xlu0 %2951
        %2953 = vrot.lane.b32.xlu0 %v2934, 120
        %v2954 = vpop.permute.xlu0 %2953
        %2955 = vrot.lane.b32.xlu0 %v2935, 120
        %v2956 = vpop.permute.xlu0 %2955
        %2957 = vrot.lane.b32.xlu0 %v2936, 120
        %v2958 = vpop.permute.xlu0 %2957
        %2959 = vrot.lane.b32.xlu0 %v2937, 120
        %v2960 = vpop.permute.xlu0 %2959
        %2961 = vrot.lane.b32.xlu0 %v2938, 120
        %v2962 = vpop.permute.xlu0 %2961
        %v2964 = vsel %vm1988, %v2948, 0
        %v2967 = vsel %vm1988, %v2950, 0
        %v2970 = vsel %vm1988, %v2952, 0
        %v2973 = vsel %vm1988, %v2954, 0
        %v2976 = vsel %vm1988, %v2956, 0
        %v2979 = vsel %vm1988, %v2958, 0
        %v2982 = vsel %vm1988, %v2960, 0
        %v2985 = vsel %vm1988, %v2962, 0
        %v2988 = vsel %vm2226, %v1720, 0
        %2990 = vmatprep.subr.bf16.mxu0 0
        %2991 = vmatpush1.bf16.msra.mxu0 %v2988
        %2992 = vmatprep.subr.bf16.mxu0 0
        %2993 = vmatpush1.bf16.msra.mxu0 0
        %2994 = vmatprep.subr.bf16.mxu0 0
        %2995 = vmatpush1.bf16.msra.mxu0 0
        %2996 = vmatprep.subr.bf16.mxu0 0
        %2997 = vmatpush1.bf16.msra.mxu0 0
        %2998 = vmatprep.subr.bf16.mxu0 0
        %2999 = vmatpush1.bf16.msra.mxu0 0
        %3000 = vmatprep.subr.bf16.mxu0 0
        %3001 = vmatpush1.bf16.msra.mxu0 0
        %3002 = vmatprep.subr.bf16.mxu0 0
        %3003 = vmatpush1.bf16.msra.mxu0 0
        %3004 = vmatprep.subr.bf16.mxu0 0
        %3005 = vmatpush1.bf16.msra.mxu0 0
        %3006 = vmatprep.subr.bf16.mxu0 0
        %3007 = vmatpush1.bf16.msra.mxu0 0
        %3008 = vmatprep.subr.bf16.mxu0 0
        %3009 = vmatpush1.bf16.msra.mxu0 0
        %3010 = vmatprep.subr.bf16.mxu0 0
        %3011 = vmatpush1.bf16.msra.mxu0 0
        %3012 = vmatprep.subr.bf16.mxu0 0
        %3013 = vmatpush1.bf16.msra.mxu0 0
        %3014 = vmatprep.subr.bf16.mxu0 0
        %3015 = vmatpush1.bf16.msra.mxu0 0
        %3016 = vmatprep.subr.bf16.mxu0 0
        %3017 = vmatpush1.bf16.msra.mxu0 0
        %3018 = vmatprep.subr.bf16.mxu0 0
        %3019 = vmatpush1.bf16.msra.mxu0 0
        %3020 = vmatprep.subr.bf16.mxu0 0
        %3021 = vmatpush1.bf16.msra.mxu0 0
        %3022 = vmatprep.mubr.bf16.mxu0 0
        %3023 = vmatmul.mubr.bf16.gmra.mrb[0].mxu0 %v2964
        %v3024 = vpop.f32.mrb[0].mxu0
        %v3025 = vadd.f32 0.0, %v3024
        %v3026 = vpop.f32.mrb[0].mxu0
        %v3027 = vpop.f32.mrb[0].mxu0
        %v3028 = vadd.f32 0.0, %v3027
        %v3029 = vpop.f32.mrb[0].mxu0
        %3030 = vmatprep.mubr.bf16.mxu0 0
        %3031 = vmatmul.mubr.bf16.gmra.mrb[0].mxu0 %v2967
        %v3032 = vpop.f32.mrb[0].mxu0
        %v3033 = vadd.f32 0.0, %v3032
        %v3034 = vpop.f32.mrb[0].mxu0
        %v3035 = vpop.f32.mrb[0].mxu0
        %v3036 = vadd.f32 0.0, %v3035
        %v3037 = vpop.f32.mrb[0].mxu0
        %3038 = vmatprep.mubr.bf16.mxu0 0
        %3039 = vmatmul.mubr.bf16.gmra.mrb[0].mxu0 %v2970
        %v3040 = vpop.f32.mrb[0].mxu0
        %v3041 = vadd.f32 0.0, %v3040
        %v3042 = vpop.f32.mrb[0].mxu0
        %v3043 = vpop.f32.mrb[0].mxu0
        %v3044 = vadd.f32 0.0, %v3043
        %v3045 = vpop.f32.mrb[0].mxu0
        %3046 = vmatprep.mubr.bf16.mxu0 0
        %3047 = vmatmul.mubr.bf16.gmra.mrb[0].mxu0 %v2973
        %v3048 = vpop.f32.mrb[0].mxu0
        %v3049 = vadd.f32 0.0, %v3048
        %v3050 = vpop.f32.mrb[0].mxu0
        %v3051 = vpop.f32.mrb[0].mxu0
        %v3052 = vadd.f32 0.0, %v3051
        %v3053 = vpop.f32.mrb[0].mxu0
        %3054 = vmatprep.mubr.bf16.mxu0 0
        %3055 = vmatmul.mubr.bf16.gmra.mrb[0].mxu0 %v2976
        %v3056 = vpop.f32.mrb[0].mxu0
        %v3057 = vadd.f32 0.0, %v3056
        %v3058 = vpop.f32.mrb[0].mxu0
        %v3059 = vpop.f32.mrb[0].mxu0
        %v3060 = vadd.f32 0.0, %v3059
        %v3061 = vpop.f32.mrb[0].mxu0
        %3062 = vmatprep.mubr.bf16.mxu0 0
        %3063 = vmatmul.mubr.bf16.gmra.mrb[0].mxu0 %v2979
        %v3064 = vpop.f32.mrb[0].mxu0
        %v3065 = vadd.f32 0.0, %v3064
        %v3066 = vpop.f32.mrb[0].mxu0
        %v3067 = vpop.f32.mrb[0].mxu0
        %v3068 = vadd.f32 0.0, %v3067
        %v3069 = vpop.f32.mrb[0].mxu0
        %3070 = vmatprep.mubr.bf16.mxu0 0
        %3071 = vmatmul.mubr.bf16.gmra.mrb[0].mxu0 %v2982
        %v3072 = vpop.f32.mrb[0].mxu0
        %v3073 = vadd.f32 0.0, %v3072
        %v3074 = vpop.f32.mrb[0].mxu0
        %v3075 = vpop.f32.mrb[0].mxu0
        %v3076 = vadd.f32 0.0, %v3075
        %v3077 = vpop.f32.mrb[0].mxu0
        %3078 = vmatprep.mubr.bf16.mxu0 0
        %3079 = vmatmul.mubr.bf16.gmra.mrb[0].mxu0 %v2985
        %v3080 = vpop.f32.mrb[0].mxu0
        %v3081 = vadd.f32 0.0, %v3080
        %v3082 = vpop.f32.mrb[0].mxu0
        %v3083 = vpop.f32.mrb[0].mxu0
        %v3084 = vadd.f32 0.0, %v3083
        %v3085 = vpop.f32.mrb[0].mxu0
        %3086 = vdwg.mxu0
        %v3087 = vadd.f32 %v2403, %v3025
        %v3088 = vadd.f32 %v2404, %v3028
        %v3089 = vadd.f32 %v2405, %v3033
        %v3090 = vadd.f32 %v2406, %v3036
        %v3091 = vadd.f32 %v2407, %v3041
        %v3092 = vadd.f32 %v2408, %v3044
        %v3093 = vadd.f32 %v2409, %v3049
        %v3094 = vadd.f32 %v2410, %v3052
        %v3095 = vadd.f32 %v2411, %v3057
        %v3096 = vadd.f32 %v2412, %v3060
        %v3097 = vadd.f32 %v2413, %v3065
        %v3098 = vadd.f32 %v2414, %v3068
        %v3099 = vadd.f32 %v2415, %v3073
        %v3100 = vadd.f32 %v2416, %v3076
        %v3101 = vadd.f32 %v2417, %v3081
        %v3102 = vadd.f32 %v2418, %v3084
        %3103 = vrot.lane.b32.xlu0 %v1743, 112
        %v3104 = vpop.permute.xlu0 %3103
        %3106 = vmatprep.subr.bf16.mxu0 0
        %3107 = vmatpush1.bf16.msra.mxu0 %v3104
        %3108 = vmatprep.subr.bf16.mxu0 0
        %3109 = vmatpush1.bf16.msra.mxu0 0
        %3110 = vmatprep.subr.bf16.mxu0 0
        %3111 = vmatpush1.bf16.msra.mxu0 0
        %3112 = vmatprep.subr.bf16.mxu0 0
        %3113 = vmatpush1.bf16.msra.mxu0 0
        %3114 = vmatprep.subr.bf16.mxu0 0
        %3115 = vmatpush1.bf16.msra.mxu0 0
        %3116 = vmatprep.subr.bf16.mxu0 0
        %3117 = vmatpush1.bf16.msra.mxu0 0
        %3118 = vmatprep.subr.bf16.mxu0 0
        %3119 = vmatpush1.bf16.msra.mxu0 0
        %3120 = vmatprep.subr.bf16.mxu0 0
        %3121 = vmatpush1.bf16.msra.mxu0 0
        %3122 = vmatprep.subr.bf16.mxu0 0
        %3123 = vmatpush1.bf16.msra.mxu0 0
        %3124 = vmatprep.subr.bf16.mxu0 0
        %3125 = vmatpush1.bf16.msra.mxu0 0
        %3126 = vmatprep.subr.bf16.mxu0 0
        %3127 = vmatpush1.bf16.msra.mxu0 0
        %3128 = vmatprep.subr.bf16.mxu0 0
        %3129 = vmatpush1.bf16.msra.mxu0 0
        %3130 = vmatprep.subr.bf16.mxu0 0
        %3131 = vmatpush1.bf16.msra.mxu0 0
        %3132 = vmatprep.subr.bf16.mxu0 0
        %3133 = vmatpush1.bf16.msra.mxu0 0
        %3134 = vmatprep.subr.bf16.mxu0 0
        %3135 = vmatpush1.bf16.msra.mxu0 0
        %3136 = vmatprep.subr.bf16.mxu0 0
        %3137 = vmatpush1.bf16.msra.mxu0 0
        %3138 = vmatprep.mubr.bf16.mxu0 0
        %3139 = vmatmul.mubr.bf16.gmra.mrb[0].mxu0 %v1746
        %v3140 = vpop.f32.mrb[0].mxu0
        %v3141 = vadd.f32 0.0, %v3140
        %v3142 = vpop.f32.mrb[0].mxu0
        %v3143 = vpop.f32.mrb[0].mxu0
        %v3144 = vadd.f32 0.0, %v3143
        %v3145 = vpop.f32.mrb[0].mxu0
        %3146 = vmatprep.mubr.bf16.mxu0 0
        %3147 = vmatmul.mubr.bf16.gmra.mrb[0].mxu0 %v1749
        %v3148 = vpop.f32.mrb[0].mxu0
        %v3149 = vadd.f32 0.0, %v3148
        %v3150 = vpop.f32.mrb[0].mxu0
        %v3151 = vpop.f32.mrb[0].mxu0
        %v3152 = vadd.f32 0.0, %v3151
        %v3153 = vpop.f32.mrb[0].mxu0
        %3154 = vmatprep.mubr.bf16.mxu0 0
        %3155 = vmatmul.mubr.bf16.gmra.mrb[0].mxu0 %v1752
        %v3156 = vpop.f32.mrb[0].mxu0
        %v3157 = vadd.f32 0.0, %v3156
        %v3158 = vpop.f32.mrb[0].mxu0
        %v3159 = vpop.f32.mrb[0].mxu0
        %v3160 = vadd.f32 0.0, %v3159
        %v3161 = vpop.f32.mrb[0].mxu0
        %3162 = vmatprep.mubr.bf16.mxu0 0
        %3163 = vmatmul.mubr.bf16.gmra.mrb[0].mxu0 %v1755
        %v3164 = vpop.f32.mrb[0].mxu0
        %v3165 = vadd.f32 0.0, %v3164
        %v3166 = vpop.f32.mrb[0].mxu0
        %v3167 = vpop.f32.mrb[0].mxu0
        %v3168 = vadd.f32 0.0, %v3167
        %v3169 = vpop.f32.mrb[0].mxu0
        %3170 = vmatprep.mubr.bf16.mxu0 0
        %3171 = vmatmul.mubr.bf16.gmra.mrb[0].mxu0 %v1758
        %v3172 = vpop.f32.mrb[0].mxu0
        %v3173 = vadd.f32 0.0, %v3172
        %v3174 = vpop.f32.mrb[0].mxu0
        %v3175 = vpop.f32.mrb[0].mxu0
        %v3176 = vadd.f32 0.0, %v3175
        %v3177 = vpop.f32.mrb[0].mxu0
        %3178 = vmatprep.mubr.bf16.mxu0 0
        %3179 = vmatmul.mubr.bf16.gmra.mrb[0].mxu0 %v1761
        %v3180 = vpop.f32.mrb[0].mxu0
        %v3181 = vadd.f32 0.0, %v3180
        %v3182 = vpop.f32.mrb[0].mxu0
        %v3183 = vpop.f32.mrb[0].mxu0
        %v3184 = vadd.f32 0.0, %v3183
        %v3185 = vpop.f32.mrb[0].mxu0
        %3186 = vmatprep.mubr.bf16.mxu0 0
        %3187 = vmatmul.mubr.bf16.gmra.mrb[0].mxu0 %v1764
        %v3188 = vpop.f32.mrb[0].mxu0
        %v3189 = vadd.f32 0.0, %v3188
        %v3190 = vpop.f32.mrb[0].mxu0
        %v3191 = vpop.f32.mrb[0].mxu0
        %v3192 = vadd.f32 0.0, %v3191
        %v3193 = vpop.f32.mrb[0].mxu0
        %3194 = vmatprep.mubr.bf16.mxu0 0
        %3195 = vmatmul.mubr.bf16.gmra.mrb[0].mxu0 %v1767
        %v3196 = vpop.f32.mrb[0].mxu0
        %v3197 = vadd.f32 0.0, %v3196
        %v3198 = vpop.f32.mrb[0].mxu0
        %v3199 = vpop.f32.mrb[0].mxu0
        %v3200 = vadd.f32 0.0, %v3199
        %v3201 = vpop.f32.mrb[0].mxu0
        %3202 = vdwg.mxu0
        %3219 = vrot.lane.b32.xlu0 %v3141, 16
        %v3220 = vpop.permute.xlu0 %3219
        %3221 = vrot.lane.b32.xlu0 %v3144, 16
        %v3222 = vpop.permute.xlu0 %3221
        %3223 = vrot.lane.b32.xlu0 %v3149, 16
        %v3224 = vpop.permute.xlu0 %3223
        %3225 = vrot.lane.b32.xlu0 %v3152, 16
        %v3226 = vpop.permute.xlu0 %3225
        %3227 = vrot.lane.b32.xlu0 %v3157, 16
        %v3228 = vpop.permute.xlu0 %3227
        %3229 = vrot.lane.b32.xlu0 %v3160, 16
        %v3230 = vpop.permute.xlu0 %3229
        %3231 = vrot.lane.b32.xlu0 %v3165, 16
        %v3232 = vpop.permute.xlu0 %3231
        %3233 = vrot.lane.b32.xlu0 %v3168, 16
        %v3234 = vpop.permute.xlu0 %3233
        %3235 = vrot.lane.b32.xlu0 %v3173, 16
        %v3236 = vpop.permute.xlu0 %3235
        %3237 = vrot.lane.b32.xlu0 %v3176, 16
        %v3238 = vpop.permute.xlu0 %3237
        %3239 = vrot.lane.b32.xlu0 %v3181, 16
        %v3240 = vpop.permute.xlu0 %3239
        %3241 = vrot.lane.b32.xlu0 %v3184, 16
        %v3242 = vpop.permute.xlu0 %3241
        %3243 = vrot.lane.b32.xlu0 %v3189, 16
        %v3244 = vpop.permute.xlu0 %3243
        %3245 = vrot.lane.b32.xlu0 %v3192, 16
        %v3246 = vpop.permute.xlu0 %3245
        %3247 = vrot.lane.b32.xlu0 %v3197, 16
        %v3248 = vpop.permute.xlu0 %3247
        %3249 = vrot.lane.b32.xlu0 %v3200, 16
        %v3250 = vpop.permute.xlu0 %3249
        %v3267 = vadd.f32 %v1956, %v3220
        %v3268 = vadd.f32 %v1957, %v3222
        %v3269 = vadd.f32 %v1958, %v3224
        %v3270 = vadd.f32 %v1959, %v3226
        %v3271 = vadd.f32 %v1960, %v3228
        %v3272 = vadd.f32 %v1961, %v3230
        %v3273 = vadd.f32 %v1962, %v3232
        %v3274 = vadd.f32 %v1963, %v3234
        %v3275 = vadd.f32 %v1964, %v3236
        %v3276 = vadd.f32 %v1965, %v3238
        %v3277 = vadd.f32 %v1966, %v3240
        %v3278 = vadd.f32 %v1967, %v3242
        %v3279 = vadd.f32 %v1968, %v3244
        %v3280 = vadd.f32 %v1969, %v3246
        %v3281 = vadd.f32 %v1970, %v3248
        %v3282 = vadd.f32 %v1971, %v3250
        %3299 = vrot.lane.b32.xlu0 %v3267, 112
        %v3300 = vpop.permute.xlu0 %3299
        %3301 = vrot.lane.b32.xlu0 %v3268, 112
        %v3302 = vpop.permute.xlu0 %3301
        %3303 = vrot.lane.b32.xlu0 %v3269, 112
        %v3304 = vpop.permute.xlu0 %3303
        %3305 = vrot.lane.b32.xlu0 %v3270, 112
        %v3306 = vpop.permute.xlu0 %3305
        %3307 = vrot.lane.b32.xlu0 %v3271, 112
        %v3308 = vpop.permute.xlu0 %3307
        %3309 = vrot.lane.b32.xlu0 %v3272, 112
        %v3310 = vpop.permute.xlu0 %3309
        %3311 = vrot.lane.b32.xlu0 %v3273, 112
        %v3312 = vpop.permute.xlu0 %3311
        %3313 = vrot.lane.b32.xlu0 %v3274, 112
        %v3314 = vpop.permute.xlu0 %3313
        %3315 = vrot.lane.b32.xlu0 %v3275, 112
        %v3316 = vpop.permute.xlu0 %3315
        %3317 = vrot.lane.b32.xlu0 %v3276, 112
        %v3318 = vpop.permute.xlu0 %3317
        %3319 = vrot.lane.b32.xlu0 %v3277, 112
        %v3320 = vpop.permute.xlu0 %3319
        %3321 = vrot.lane.b32.xlu0 %v3278, 112
        %v3322 = vpop.permute.xlu0 %3321
        %3323 = vrot.lane.b32.xlu0 %v3279, 112
        %v3324 = vpop.permute.xlu0 %3323
        %3325 = vrot.lane.b32.xlu0 %v3280, 112
        %v3326 = vpop.permute.xlu0 %3325
        %3327 = vrot.lane.b32.xlu0 %v3281, 112
        %v3328 = vpop.permute.xlu0 %3327
        %3329 = vrot.lane.b32.xlu0 %v3282, 112
        %v3330 = vpop.permute.xlu0 %3329
        %v3347 = vsel %vm1988, %v3300, 0.0
        %3348 = vadd.xlane.f32.xlu0 %v3347
        %v3349 = vpop.xlane.xlu0 %3348
        %v3350 = vsel %vm1988, %v3302, 0.0
        %3351 = vadd.xlane.f32.xlu0 %v3350
        %v3352 = vpop.xlane.xlu0 %3351
        %v3353 = vsel %vm1988, %v3304, 0.0
        %3354 = vadd.xlane.f32.xlu0 %v3353
        %v3355 = vpop.xlane.xlu0 %3354
        %v3356 = vsel %vm1988, %v3306, 0.0
        %3357 = vadd.xlane.f32.xlu0 %v3356
        %v3358 = vpop.xlane.xlu0 %3357
        %v3359 = vsel %vm1988, %v3308, 0.0
        %3360 = vadd.xlane.f32.xlu0 %v3359
        %v3361 = vpop.xlane.xlu0 %3360
        %v3362 = vsel %vm1988, %v3310, 0.0
        %3363 = vadd.xlane.f32.xlu0 %v3362
        %v3364 = vpop.xlane.xlu0 %3363
        %v3365 = vsel %vm1988, %v3312, 0.0
        %3366 = vadd.xlane.f32.xlu0 %v3365
        %v3367 = vpop.xlane.xlu0 %3366
        %v3368 = vsel %vm1988, %v3314, 0.0
        %3369 = vadd.xlane.f32.xlu0 %v3368
        %v3370 = vpop.xlane.xlu0 %3369
        %v3371 = vsel %vm1988, %v3316, 0.0
        %3372 = vadd.xlane.f32.xlu0 %v3371
        %v3373 = vpop.xlane.xlu0 %3372
        %v3374 = vsel %vm1988, %v3318, 0.0
        %3375 = vadd.xlane.f32.xlu0 %v3374
        %v3376 = vpop.xlane.xlu0 %3375
        %v3377 = vsel %vm1988, %v3320, 0.0
        %3378 = vadd.xlane.f32.xlu0 %v3377
        %v3379 = vpop.xlane.xlu0 %3378
        %v3380 = vsel %vm1988, %v3322, 0.0
        %3381 = vadd.xlane.f32.xlu0 %v3380
        %v3382 = vpop.xlane.xlu0 %3381
        %v3383 = vsel %vm1988, %v3324, 0.0
        %3384 = vadd.xlane.f32.xlu0 %v3383
        %v3385 = vpop.xlane.xlu0 %3384
        %v3386 = vsel %vm1988, %v3326, 0.0
        %3387 = vadd.xlane.f32.xlu0 %v3386
        %v3388 = vpop.xlane.xlu0 %3387
        %v3389 = vsel %vm1988, %v3328, 0.0
        %3390 = vadd.xlane.f32.xlu0 %v3389
        %v3391 = vpop.xlane.xlu0 %3390
        %v3392 = vsel %vm1988, %v3330, 0.0
        %3393 = vadd.xlane.f32.xlu0 %v3392
        %v3394 = vpop.xlane.xlu0 %3393
        %v3395 = vmul.f32 %v3349, 0.35355338
        %v3396 = vmul.f32 %v3352, 0.35355338
        %v3397 = vmul.f32 %v3355, 0.35355338
        %v3398 = vmul.f32 %v3358, 0.35355338
        %v3399 = vmul.f32 %v3361, 0.35355338
        %v3400 = vmul.f32 %v3364, 0.35355338
        %v3401 = vmul.f32 %v3367, 0.35355338
        %v3402 = vmul.f32 %v3370, 0.35355338
        %v3403 = vmul.f32 %v3373, 0.35355338
        %v3404 = vmul.f32 %v3376, 0.35355338
        %v3405 = vmul.f32 %v3379, 0.35355338
        %v3406 = vmul.f32 %v3382, 0.35355338
        %v3407 = vmul.f32 %v3385, 0.35355338
        %v3408 = vmul.f32 %v3388, 0.35355338
        %v3409 = vmul.f32 %v3391, 0.35355338
        %v3410 = vmul.f32 %v3394, 0.35355338
        %v3427 = vlaneseq
        %v3428 = vshrl.u32 %v3427, 7
        %v3429 = vsub.s32 %v2076, %v3428
        %v3430 = vrot.slane %v3395, %v3429
        %v3431 = vlaneseq
        %v3432 = vshrl.u32 %v3431, 7
        %v3433 = vsub.s32 %v2081, %v3432
        %v3434 = vrot.slane %v3396, %v3433
        %v3435 = vsel %vm2086, %v3434, %v3430
        %v3436 = vlaneseq
        %v3437 = vshrl.u32 %v3436, 7
        %v3438 = vsub.s32 %v2076, %v3437
        %v3439 = vrot.slane %v3397, %v3438
        %v3440 = vlaneseq
        %v3441 = vshrl.u32 %v3440, 7
        %v3442 = vsub.s32 %v2081, %v3441
        %v3443 = vrot.slane %v3398, %v3442
        %v3444 = vsel %vm2086, %v3443, %v3439
        %v3445 = vlaneseq
        %v3446 = vshrl.u32 %v3445, 7
        %v3447 = vsub.s32 %v2076, %v3446
        %v3448 = vrot.slane %v3399, %v3447
        %v3449 = vlaneseq
        %v3450 = vshrl.u32 %v3449, 7
        %v3451 = vsub.s32 %v2081, %v3450
        %v3452 = vrot.slane %v3400, %v3451
        %v3453 = vsel %vm2086, %v3452, %v3448
        %v3454 = vlaneseq
        %v3455 = vshrl.u32 %v3454, 7
        %v3456 = vsub.s32 %v2076, %v3455
        %v3457 = vrot.slane %v3401, %v3456
        %v3458 = vlaneseq
        %v3459 = vshrl.u32 %v3458, 7
        %v3460 = vsub.s32 %v2081, %v3459
        %v3461 = vrot.slane %v3402, %v3460
        %v3462 = vsel %vm2086, %v3461, %v3457
        %v3463 = vlaneseq
        %v3464 = vshrl.u32 %v3463, 7
        %v3465 = vsub.s32 %v2076, %v3464
        %v3466 = vrot.slane %v3403, %v3465
        %v3467 = vlaneseq
        %v3468 = vshrl.u32 %v3467, 7
        %v3469 = vsub.s32 %v2081, %v3468
        %v3470 = vrot.slane %v3404, %v3469
        %v3471 = vsel %vm2086, %v3470, %v3466
        %v3472 = vlaneseq
        %v3473 = vshrl.u32 %v3472, 7
        %v3474 = vsub.s32 %v2076, %v3473
        %v3475 = vrot.slane %v3405, %v3474
        %v3476 = vlaneseq
        %v3477 = vshrl.u32 %v3476, 7
        %v3478 = vsub.s32 %v2081, %v3477
        %v3479 = vrot.slane %v3406, %v3478
        %v3480 = vsel %vm2086, %v3479, %v3475
        %v3481 = vlaneseq
        %v3482 = vshrl.u32 %v3481, 7
        %v3483 = vsub.s32 %v2076, %v3482
        %v3484 = vrot.slane %v3407, %v3483
        %v3485 = vlaneseq
        %v3486 = vshrl.u32 %v3485, 7
        %v3487 = vsub.s32 %v2081, %v3486
        %v3488 = vrot.slane %v3408, %v3487
        %v3489 = vsel %vm2086, %v3488, %v3484
        %v3490 = vlaneseq
        %v3491 = vshrl.u32 %v3490, 7
        %v3492 = vsub.s32 %v2076, %v3491
        %v3493 = vrot.slane %v3409, %v3492
        %v3494 = vlaneseq
        %v3495 = vshrl.u32 %v3494, 7
        %v3496 = vsub.s32 %v2081, %v3495
        %v3497 = vrot.slane %v3410, %v3496
        %v3498 = vsel %vm2086, %v3497, %v3493
        %v3499 = vsel %vm2151, %v3444, %v3435
        %v3500 = vsel %vm2153, %v3453, %v3499
        %v3501 = vsel %vm2155, %v3462, %v3500
        %v3502 = vsel %vm2157, %v3471, %v3501
        %v3503 = vsel %vm2159, %v3480, %v3502
        %v3504 = vsel %vm2161, %v3489, %v3503
        %v3505 = vsel %vm2163, %v3498, %v3504
        %v3507 = vsel %vm2058, %v3505, -3.4028235e+38
        %v3508 = vsel %vm1265, %v3507, -inf
        %3509 = vmax.xlane.f32.xlu0 %v3508
        %v3510 = vpop.xlane.xlu0 %3509
        %v3511 = vsub.f32 %v3507, %v3510
        %v3512 = vmul.f32 %v3511, 1.442695
        %v3513 = vpow.pop %v3512
        %v3514 = vsel %vm1265, %v3513, 0.0
        %3515 = vadd.xlane.f32.xlu0 %v3514
        %v3516 = vpop.xlane.xlu0 %3515
        %v3517 = vrcp.pop %v3516
        %v3518 = vmul.f32 %v3513, %v3517
        %v3519 = vpack.c.bf16 %v3518, %v3518
        %3520 = vrot.lane.b32.xlu0 %v1712, 112
        %v3521 = vpop.permute.xlu0 %3520
        %v3524 = vsel %vm1265, %v3519, 0
        %3526 = vmatprep.subr.bf16.mxu0 0
        %3527 = vmatpush1.bf16.msra.mxu0 %v3521
        %3528 = vmatprep.subr.bf16.mxu0 0
        %3529 = vmatpush1.bf16.msra.mxu0 0
        %3530 = vmatprep.subr.bf16.mxu0 0
        %3531 = vmatpush1.bf16.msra.mxu0 0
        %3532 = vmatprep.subr.bf16.mxu0 0
        %3533 = vmatpush1.bf16.msra.mxu0 0
        %3534 = vmatprep.subr.bf16.mxu0 0
        %3535 = vmatpush1.bf16.msra.mxu0 0
        %3536 = vmatprep.subr.bf16.mxu0 0
        %3537 = vmatpush1.bf16.msra.mxu0 0
        %3538 = vmatprep.subr.bf16.mxu0 0
        %3539 = vmatpush1.bf16.msra.mxu0 0
        %3540 = vmatprep.subr.bf16.mxu0 0
        %3541 = vmatpush1.bf16.msra.mxu0 0
        %3542 = vmatprep.subr.bf16.mxu0 0
        %3543 = vmatpush1.bf16.msra.mxu0 0
        %3544 = vmatprep.subr.bf16.mxu0 0
        %3545 = vmatpush1.bf16.msra.mxu0 0
        %3546 = vmatprep.subr.bf16.mxu0 0
        %3547 = vmatpush1.bf16.msra.mxu0 0
        %3548 = vmatprep.subr.bf16.mxu0 0
        %3549 = vmatpush1.bf16.msra.mxu0 0
        %3550 = vmatprep.subr.bf16.mxu0 0
        %3551 = vmatpush1.bf16.msra.mxu0 0
        %3552 = vmatprep.subr.bf16.mxu0 0
        %3553 = vmatpush1.bf16.msra.mxu0 0
        %3554 = vmatprep.subr.bf16.mxu0 0
        %3555 = vmatpush1.bf16.msra.mxu0 0
        %3556 = vmatprep.subr.bf16.mxu0 0
        %3557 = vmatpush1.bf16.msra.mxu0 0
        %3558 = vmatprep.mubr.bf16.mxu0 0
        %3559 = vmatmul.mubr.bf16.gmra.mrb[0].mxu0 %v3524
        %v3560 = vpop.f32.mrb[0].mxu0
        %v3561 = vadd.f32 0.0, %v3560
        %v3562 = vpop.f32.mrb[0].mxu0
        %v3563 = vpop.f32.mrb[0].mxu0
        %v3564 = vpop.f32.mrb[0].mxu0
        %3565 = vdwg.mxu0
        %v3566 = vpack.c.bf16 %v3561, %v3561
        %v3568 = vsel %vm1988, %v3566, 0
        %v3571 = vsel %vm2226, %v1717, 0
        %3573 = vmatprep.subr.bf16.mxu0 0
        %3574 = vmatpush1.bf16.msra.mxu0 %v3571
        %3575 = vmatprep.subr.bf16.mxu0 0
        %3576 = vmatpush1.bf16.msra.mxu0 0
        %3577 = vmatprep.subr.bf16.mxu0 0
        %3578 = vmatpush1.bf16.msra.mxu0 0
        %3579 = vmatprep.subr.bf16.mxu0 0
        %3580 = vmatpush1.bf16.msra.mxu0 0
        %3581 = vmatprep.subr.bf16.mxu0 0
        %3582 = vmatpush1.bf16.msra.mxu0 0
        %3583 = vmatprep.subr.bf16.mxu0 0
        %3584 = vmatpush1.bf16.msra.mxu0 0
        %3585 = vmatprep.subr.bf16.mxu0 0
        %3586 = vmatpush1.bf16.msra.mxu0 0
        %3587 = vmatprep.subr.bf16.mxu0 0
        %3588 = vmatpush1.bf16.msra.mxu0 0
        %3589 = vmatprep.subr.bf16.mxu0 0
        %3590 = vmatpush1.bf16.msra.mxu0 0
        %3591 = vmatprep.subr.bf16.mxu0 0
        %3592 = vmatpush1.bf16.msra.mxu0 0
        %3593 = vmatprep.subr.bf16.mxu0 0
        %3594 = vmatpush1.bf16.msra.mxu0 0
        %3595 = vmatprep.subr.bf16.mxu0 0
        %3596 = vmatpush1.bf16.msra.mxu0 0
        %3597 = vmatprep.subr.bf16.mxu0 0
        %3598 = vmatpush1.bf16.msra.mxu0 0
        %3599 = vmatprep.subr.bf16.mxu0 0
        %3600 = vmatpush1.bf16.msra.mxu0 0
        %3601 = vmatprep.subr.bf16.mxu0 0
        %3602 = vmatpush1.bf16.msra.mxu0 0
        %3603 = vmatprep.subr.bf16.mxu0 0
        %3604 = vmatpush1.bf16.msra.mxu0 0
        %3605 = vmatprep.mubr.bf16.mxu0 0
        %3606 = vmatmul.mubr.bf16.gmra.mrb[0].mxu0 %v3568
        %v3607 = vpop.f32.mrb[0].mxu0
        %v3608 = vadd.f32 0.0, %v3607
        %v3609 = vpop.f32.mrb[0].mxu0
        %v3610 = vpop.f32.mrb[0].mxu0
        %v3611 = vpop.f32.mrb[0].mxu0
        %3612 = vdwg.mxu0
        %v3613 = vadd.f32 %v2930, %v3608
        %v3614 = vpack.c.bf16 %v3268, %v3267
        %v3615 = vpack.c.bf16 %v3270, %v3269
        %v3616 = vpack.c.bf16 %v3272, %v3271
        %v3617 = vpack.c.bf16 %v3274, %v3273
        %v3618 = vpack.c.bf16 %v3276, %v3275
        %v3619 = vpack.c.bf16 %v3278, %v3277
        %v3620 = vpack.c.bf16 %v3280, %v3279
        %v3621 = vpack.c.bf16 %v3282, %v3281
        %3630 = vrot.lane.b32.xlu0 %v3614, 112
        %v3631 = vpop.permute.xlu0 %3630
        %3632 = vrot.lane.b32.xlu0 %v3615, 112
        %v3633 = vpop.permute.xlu0 %3632
        %3634 = vrot.lane.b32.xlu0 %v3616, 112
        %v3635 = vpop.permute.xlu0 %3634
        %3636 = vrot.lane.b32.xlu0 %v3617, 112
        %v3637 = vpop.permute.xlu0 %3636
        %3638 = vrot.lane.b32.xlu0 %v3618, 112
        %v3639 = vpop.permute.xlu0 %3638
        %3640 = vrot.lane.b32.xlu0 %v3619, 112
        %v3641 = vpop.permute.xlu0 %3640
        %3642 = vrot.lane.b32.xlu0 %v3620, 112
        %v3643 = vpop.permute.xlu0 %3642
        %3644 = vrot.lane.b32.xlu0 %v3621, 112
        %v3645 = vpop.permute.xlu0 %3644
        %v3647 = vsel %vm1988, %v3631, 0
        %v3650 = vsel %vm1988, %v3633, 0
        %v3653 = vsel %vm1988, %v3635, 0
        %v3656 = vsel %vm1988, %v3637, 0
        %v3659 = vsel %vm1988, %v3639, 0
        %v3662 = vsel %vm1988, %v3641, 0
        %v3665 = vsel %vm1988, %v3643, 0
        %v3668 = vsel %vm1988, %v3645, 0
        %v3671 = vsel %vm2226, %v1721, 0
        %3673 = vmatprep.subr.bf16.mxu0 0
        %3674 = vmatpush1.bf16.msra.mxu0 %v3671
        %3675 = vmatprep.subr.bf16.mxu0 0
        %3676 = vmatpush1.bf16.msra.mxu0 0
        %3677 = vmatprep.subr.bf16.mxu0 0
        %3678 = vmatpush1.bf16.msra.mxu0 0
        %3679 = vmatprep.subr.bf16.mxu0 0
        %3680 = vmatpush1.bf16.msra.mxu0 0
        %3681 = vmatprep.subr.bf16.mxu0 0
        %3682 = vmatpush1.bf16.msra.mxu0 0
        %3683 = vmatprep.subr.bf16.mxu0 0
        %3684 = vmatpush1.bf16.msra.mxu0 0
        %3685 = vmatprep.subr.bf16.mxu0 0
        %3686 = vmatpush1.bf16.msra.mxu0 0
        %3687 = vmatprep.subr.bf16.mxu0 0
        %3688 = vmatpush1.bf16.msra.mxu0 0
        %3689 = vmatprep.subr.bf16.mxu0 0
        %3690 = vmatpush1.bf16.msra.mxu0 0
        %3691 = vmatprep.subr.bf16.mxu0 0
        %3692 = vmatpush1.bf16.msra.mxu0 0
        %3693 = vmatprep.subr.bf16.mxu0 0
        %3694 = vmatpush1.bf16.msra.mxu0 0
        %3695 = vmatprep.subr.bf16.mxu0 0
        %3696 = vmatpush1.bf16.msra.mxu0 0
        %3697 = vmatprep.subr.bf16.mxu0 0
        %3698 = vmatpush1.bf16.msra.mxu0 0
        %3699 = vmatprep.subr.bf16.mxu0 0
        %3700 = vmatpush1.bf16.msra.mxu0 0
        %3701 = vmatprep.subr.bf16.mxu0 0
        %3702 = vmatpush1.bf16.msra.mxu0 0
        %3703 = vmatprep.subr.bf16.mxu0 0
        %3704 = vmatpush1.bf16.msra.mxu0 0
        %3705 = vmatprep.mubr.bf16.mxu0 0
        %3706 = vmatmul.mubr.bf16.gmra.mrb[0].mxu0 %v3647
        %v3707 = vpop.f32.mrb[0].mxu0
        %v3708 = vadd.f32 0.0, %v3707
        %v3709 = vpop.f32.mrb[0].mxu0
        %v3710 = vpop.f32.mrb[0].mxu0
        %v3711 = vadd.f32 0.0, %v3710
        %v3712 = vpop.f32.mrb[0].mxu0
        %3713 = vmatprep.mubr.bf16.mxu0 0
        %3714 = vmatmul.mubr.bf16.gmra.mrb[0].mxu0 %v3650
        %v3715 = vpop.f32.mrb[0].mxu0
        %v3716 = vadd.f32 0.0, %v3715
        %v3717 = vpop.f32.mrb[0].mxu0
        %v3718 = vpop.f32.mrb[0].mxu0
        %v3719 = vadd.f32 0.0, %v3718
        %v3720 = vpop.f32.mrb[0].mxu0
        %3721 = vmatprep.mubr.bf16.mxu0 0
        %3722 = vmatmul.mubr.bf16.gmra.mrb[0].mxu0 %v3653
        %v3723 = vpop.f32.mrb[0].mxu0
        %v3724 = vadd.f32 0.0, %v3723
        %v3725 = vpop.f32.mrb[0].mxu0
        %v3726 = vpop.f32.mrb[0].mxu0
        %v3727 = vadd.f32 0.0, %v3726
        %v3728 = vpop.f32.mrb[0].mxu0
        %3729 = vmatprep.mubr.bf16.mxu0 0
        %3730 = vmatmul.mubr.bf16.gmra.mrb[0].mxu0 %v3656
        %v3731 = vpop.f32.mrb[0].mxu0
        %v3732 = vadd.f32 0.0, %v3731
        %v3733 = vpop.f32.mrb[0].mxu0
        %v3734 = vpop.f32.mrb[0].mxu0
        %v3735 = vadd.f32 0.0, %v3734
        %v3736 = vpop.f32.mrb[0].mxu0
        %3737 = vmatprep.mubr.bf16.mxu0 0
        %3738 = vmatmul.mubr.bf16.gmra.mrb[0].mxu0 %v3659
        %v3739 = vpop.f32.mrb[0].mxu0
        %v3740 = vadd.f32 0.0, %v3739
        %v3741 = vpop.f32.mrb[0].mxu0
        %v3742 = vpop.f32.mrb[0].mxu0
        %v3743 = vadd.f32 0.0, %v3742
        %v3744 = vpop.f32.mrb[0].mxu0
        %3745 = vmatprep.mubr.bf16.mxu0 0
        %3746 = vmatmul.mubr.bf16.gmra.mrb[0].mxu0 %v3662
        %v3747 = vpop.f32.mrb[0].mxu0
        %v3748 = vadd.f32 0.0, %v3747
        %v3749 = vpop.f32.mrb[0].mxu0
        %v3750 = vpop.f32.mrb[0].mxu0
        %v3751 = vadd.f32 0.0, %v3750
        %v3752 = vpop.f32.mrb[0].mxu0
        %3753 = vmatprep.mubr.bf16.mxu0 0
        %3754 = vmatmul.mubr.bf16.gmra.mrb[0].mxu0 %v3665
        %v3755 = vpop.f32.mrb[0].mxu0
        %v3756 = vadd.f32 0.0, %v3755
        %v3757 = vpop.f32.mrb[0].mxu0
        %v3758 = vpop.f32.mrb[0].mxu0
        %v3759 = vadd.f32 0.0, %v3758
        %v3760 = vpop.f32.mrb[0].mxu0
        %3761 = vmatprep.mubr.bf16.mxu0 0
        %3762 = vmatmul.mubr.bf16.gmra.mrb[0].mxu0 %v3668
        %v3763 = vpop.f32.mrb[0].mxu0
        %v3764 = vadd.f32 0.0, %v3763
        %v3765 = vpop.f32.mrb[0].mxu0
        %v3766 = vpop.f32.mrb[0].mxu0
        %v3767 = vadd.f32 0.0, %v3766
        %v3768 = vpop.f32.mrb[0].mxu0
        %3769 = vdwg.mxu0
        %v3770 = vadd.f32 %v3087, %v3708
        %v3771 = vadd.f32 %v3088, %v3711
        %v3772 = vadd.f32 %v3089, %v3716
        %v3773 = vadd.f32 %v3090, %v3719
        %v3774 = vadd.f32 %v3091, %v3724
        %v3775 = vadd.f32 %v3092, %v3727
        %v3776 = vadd.f32 %v3093, %v3732
        %v3777 = vadd.f32 %v3094, %v3735
        %v3778 = vadd.f32 %v3095, %v3740
        %v3779 = vadd.f32 %v3096, %v3743
        %v3780 = vadd.f32 %v3097, %v3748
        %v3781 = vadd.f32 %v3098, %v3751
        %v3782 = vadd.f32 %v3099, %v3756
        %v3783 = vadd.f32 %v3100, %v3759
        %v3784 = vadd.f32 %v3101, %v3764
        %v3785 = vadd.f32 %v3102, %v3767
        %3786 = vrot.lane.b32.xlu0 %v1743, 104
        %v3787 = vpop.permute.xlu0 %3786
        %3789 = vmatprep.subr.bf16.mxu0 0
        %3790 = vmatpush1.bf16.msra.mxu0 %v3787
        %3791 = vmatprep.subr.bf16.mxu0 0
        %3792 = vmatpush1.bf16.msra.mxu0 0
        %3793 = vmatprep.subr.bf16.mxu0 0
        %3794 = vmatpush1.bf16.msra.mxu0 0
        %3795 = vmatprep.subr.bf16.mxu0 0
        %3796 = vmatpush1.bf16.msra.mxu0 0
        %3797 = vmatprep.subr.bf16.mxu0 0
        %3798 = vmatpush1.bf16.msra.mxu0 0
        %3799 = vmatprep.subr.bf16.mxu0 0
        %3800 = vmatpush1.bf16.msra.mxu0 0
        %3801 = vmatprep.subr.bf16.mxu0 0
        %3802 = vmatpush1.bf16.msra.mxu0 0
        %3803 = vmatprep.subr.bf16.mxu0 0
        %3804 = vmatpush1.bf16.msra.mxu0 0
        %3805 = vmatprep.subr.bf16.mxu0 0
        %3806 = vmatpush1.bf16.msra.mxu0 0
        %3807 = vmatprep.subr.bf16.mxu0 0
        %3808 = vmatpush1.bf16.msra.mxu0 0
        %3809 = vmatprep.subr.bf16.mxu0 0
        %3810 = vmatpush1.bf16.msra.mxu0 0
        %3811 = vmatprep.subr.bf16.mxu0 0
        %3812 = vmatpush1.bf16.msra.mxu0 0
        %3813 = vmatprep.subr.bf16.mxu0 0
        %3814 = vmatpush1.bf16.msra.mxu0 0
        %3815 = vmatprep.subr.bf16.mxu0 0
        %3816 = vmatpush1.bf16.msra.mxu0 0
        %3817 = vmatprep.subr.bf16.mxu0 0
        %3818 = vmatpush1.bf16.msra.mxu0 0
        %3819 = vmatprep.subr.bf16.mxu0 0
        %3820 = vmatpush1.bf16.msra.mxu0 0
        %3821 = vmatprep.mubr.bf16.mxu0 0
        %3822 = vmatmul.mubr.bf16.gmra.mrb[0].mxu0 %v1746
        %v3823 = vpop.f32.mrb[0].mxu0
        %v3824 = vadd.f32 0.0, %v3823
        %v3825 = vpop.f32.mrb[0].mxu0
        %v3826 = vpop.f32.mrb[0].mxu0
        %v3827 = vadd.f32 0.0, %v3826
        %v3828 = vpop.f32.mrb[0].mxu0
        %3829 = vmatprep.mubr.bf16.mxu0 0
        %3830 = vmatmul.mubr.bf16.gmra.mrb[0].mxu0 %v1749
        %v3831 = vpop.f32.mrb[0].mxu0
        %v3832 = vadd.f32 0.0, %v3831
        %v3833 = vpop.f32.mrb[0].mxu0
        %v3834 = vpop.f32.mrb[0].mxu0
        %v3835 = vadd.f32 0.0, %v3834
        %v3836 = vpop.f32.mrb[0].mxu0
        %3837 = vmatprep.mubr.bf16.mxu0 0
        %3838 = vmatmul.mubr.bf16.gmra.mrb[0].mxu0 %v1752
        %v3839 = vpop.f32.mrb[0].mxu0
        %v3840 = vadd.f32 0.0, %v3839
        %v3841 = vpop.f32.mrb[0].mxu0
        %v3842 = vpop.f32.mrb[0].mxu0
        %v3843 = vadd.f32 0.0, %v3842
        %v3844 = vpop.f32.mrb[0].mxu0
        %3845 = vmatprep.mubr.bf16.mxu0 0
        %3846 = vmatmul.mubr.bf16.gmra.mrb[0].mxu0 %v1755
        %v3847 = vpop.f32.mrb[0].mxu0
        %v3848 = vadd.f32 0.0, %v3847
        %v3849 = vpop.f32.mrb[0].mxu0
        %v3850 = vpop.f32.mrb[0].mxu0
        %v3851 = vadd.f32 0.0, %v3850
        %v3852 = vpop.f32.mrb[0].mxu0
        %3853 = vmatprep.mubr.bf16.mxu0 0
        %3854 = vmatmul.mubr.bf16.gmra.mrb[0].mxu0 %v1758
        %v3855 = vpop.f32.mrb[0].mxu0
        %v3856 = vadd.f32 0.0, %v3855
        %v3857 = vpop.f32.mrb[0].mxu0
        %v3858 = vpop.f32.mrb[0].mxu0
        %v3859 = vadd.f32 0.0, %v3858
        %v3860 = vpop.f32.mrb[0].mxu0
        %3861 = vmatprep.mubr.bf16.mxu0 0
        %3862 = vmatmul.mubr.bf16.gmra.mrb[0].mxu0 %v1761
        %v3863 = vpop.f32.mrb[0].mxu0
        %v3864 = vadd.f32 0.0, %v3863
        %v3865 = vpop.f32.mrb[0].mxu0
        %v3866 = vpop.f32.mrb[0].mxu0
        %v3867 = vadd.f32 0.0, %v3866
        %v3868 = vpop.f32.mrb[0].mxu0
        %3869 = vmatprep.mubr.bf16.mxu0 0
        %3870 = vmatmul.mubr.bf16.gmra.mrb[0].mxu0 %v1764
        %v3871 = vpop.f32.mrb[0].mxu0
        %v3872 = vadd.f32 0.0, %v3871
        %v3873 = vpop.f32.mrb[0].mxu0
        %v3874 = vpop.f32.mrb[0].mxu0
        %v3875 = vadd.f32 0.0, %v3874
        %v3876 = vpop.f32.mrb[0].mxu0
        %3877 = vmatprep.mubr.bf16.mxu0 0
        %3878 = vmatmul.mubr.bf16.gmra.mrb[0].mxu0 %v1767
        %v3879 = vpop.f32.mrb[0].mxu0
        %v3880 = vadd.f32 0.0, %v3879
        %v3881 = vpop.f32.mrb[0].mxu0
        %v3882 = vpop.f32.mrb[0].mxu0
        %v3883 = vadd.f32 0.0, %v3882
        %v3884 = vpop.f32.mrb[0].mxu0
        %3885 = vdwg.mxu0
        %3902 = vrot.lane.b32.xlu0 %v3824, 24
        %v3903 = vpop.permute.xlu0 %3902
        %3904 = vrot.lane.b32.xlu0 %v3827, 24
        %v3905 = vpop.permute.xlu0 %3904
        %3906 = vrot.lane.b32.xlu0 %v3832, 24
        %v3907 = vpop.permute.xlu0 %3906
        %3908 = vrot.lane.b32.xlu0 %v3835, 24
        %v3909 = vpop.permute.xlu0 %3908
        %3910 = vrot.lane.b32.xlu0 %v3840, 24
        %v3911 = vpop.permute.xlu0 %3910
        %3912 = vrot.lane.b32.xlu0 %v3843, 24
        %v3913 = vpop.permute.xlu0 %3912
        %3914 = vrot.lane.b32.xlu0 %v3848, 24
        %v3915 = vpop.permute.xlu0 %3914
        %3916 = vrot.lane.b32.xlu0 %v3851, 24
        %v3917 = vpop.permute.xlu0 %3916
        %3918 = vrot.lane.b32.xlu0 %v3856, 24
        %v3919 = vpop.permute.xlu0 %3918
        %3920 = vrot.lane.b32.xlu0 %v3859, 24
        %v3921 = vpop.permute.xlu0 %3920
        %3922 = vrot.lane.b32.xlu0 %v3864, 24
        %v3923 = vpop.permute.xlu0 %3922
        %3924 = vrot.lane.b32.xlu0 %v3867, 24
        %v3925 = vpop.permute.xlu0 %3924
        %3926 = vrot.lane.b32.xlu0 %v3872, 24
        %v3927 = vpop.permute.xlu0 %3926
        %3928 = vrot.lane.b32.xlu0 %v3875, 24
        %v3929 = vpop.permute.xlu0 %3928
        %3930 = vrot.lane.b32.xlu0 %v3880, 24
        %v3931 = vpop.permute.xlu0 %3930
        %3932 = vrot.lane.b32.xlu0 %v3883, 24
        %v3933 = vpop.permute.xlu0 %3932
        %v3950 = vadd.f32 %v1956, %v3903
        %v3951 = vadd.f32 %v1957, %v3905
        %v3952 = vadd.f32 %v1958, %v3907
        %v3953 = vadd.f32 %v1959, %v3909
        %v3954 = vadd.f32 %v1960, %v3911
        %v3955 = vadd.f32 %v1961, %v3913
        %v3956 = vadd.f32 %v1962, %v3915
        %v3957 = vadd.f32 %v1963, %v3917
        %v3958 = vadd.f32 %v1964, %v3919
        %v3959 = vadd.f32 %v1965, %v3921
        %v3960 = vadd.f32 %v1966, %v3923
        %v3961 = vadd.f32 %v1967, %v3925
        %v3962 = vadd.f32 %v1968, %v3927
        %v3963 = vadd.f32 %v1969, %v3929
        %v3964 = vadd.f32 %v1970, %v3931
        %v3965 = vadd.f32 %v1971, %v3933
        %3982 = vrot.lane.b32.xlu0 %v3950, 104
        %v3983 = vpop.permute.xlu0 %3982
        %3984 = vrot.lane.b32.xlu0 %v3951, 104
        %v3985 = vpop.permute.xlu0 %3984
        %3986 = vrot.lane.b32.xlu0 %v3952, 104
        %v3987 = vpop.permute.xlu0 %3986
        %3988 = vrot.lane.b32.xlu0 %v3953, 104
        %v3989 = vpop.permute.xlu0 %3988
        %3990 = vrot.lane.b32.xlu0 %v3954, 104
        %v3991 = vpop.permute.xlu0 %3990
        %3992 = vrot.lane.b32.xlu0 %v3955, 104
        %v3993 = vpop.permute.xlu0 %3992
        %3994 = vrot.lane.b32.xlu0 %v3956, 104
        %v3995 = vpop.permute.xlu0 %3994
        %3996 = vrot.lane.b32.xlu0 %v3957, 104
        %v3997 = vpop.permute.xlu0 %3996
        %3998 = vrot.lane.b32.xlu0 %v3958, 104
        %v3999 = vpop.permute.xlu0 %3998
        %4000 = vrot.lane.b32.xlu0 %v3959, 104
        %v4001 = vpop.permute.xlu0 %4000
        %4002 = vrot.lane.b32.xlu0 %v3960, 104
        %v4003 = vpop.permute.xlu0 %4002
        %4004 = vrot.lane.b32.xlu0 %v3961, 104
        %v4005 = vpop.permute.xlu0 %4004
        %4006 = vrot.lane.b32.xlu0 %v3962, 104
        %v4007 = vpop.permute.xlu0 %4006
        %4008 = vrot.lane.b32.xlu0 %v3963, 104
        %v4009 = vpop.permute.xlu0 %4008
        %4010 = vrot.lane.b32.xlu0 %v3964, 104
        %v4011 = vpop.permute.xlu0 %4010
        %4012 = vrot.lane.b32.xlu0 %v3965, 104
        %v4013 = vpop.permute.xlu0 %4012
        %v4030 = vsel %vm1988, %v3983, 0.0
        %4031 = vadd.xlane.f32.xlu0 %v4030
        %v4032 = vpop.xlane.xlu0 %4031
        %v4033 = vsel %vm1988, %v3985, 0.0
        %4034 = vadd.xlane.f32.xlu0 %v4033
        %v4035 = vpop.xlane.xlu0 %4034
        %v4036 = vsel %vm1988, %v3987, 0.0
        %4037 = vadd.xlane.f32.xlu0 %v4036
        %v4038 = vpop.xlane.xlu0 %4037
        %v4039 = vsel %vm1988, %v3989, 0.0
        %4040 = vadd.xlane.f32.xlu0 %v4039
        %v4041 = vpop.xlane.xlu0 %4040
        %v4042 = vsel %vm1988, %v3991, 0.0
        %4043 = vadd.xlane.f32.xlu0 %v4042
        %v4044 = vpop.xlane.xlu0 %4043
        %v4045 = vsel %vm1988, %v3993, 0.0
        %4046 = vadd.xlane.f32.xlu0 %v4045
        %v4047 = vpop.xlane.xlu0 %4046
        %v4048 = vsel %vm1988, %v3995, 0.0
        %4049 = vadd.xlane.f32.xlu0 %v4048
        %v4050 = vpop.xlane.xlu0 %4049
        %v4051 = vsel %vm1988, %v3997, 0.0
        %4052 = vadd.xlane.f32.xlu0 %v4051
        %v4053 = vpop.xlane.xlu0 %4052
        %v4054 = vsel %vm1988, %v3999, 0.0
        %4055 = vadd.xlane.f32.xlu0 %v4054
        %v4056 = vpop.xlane.xlu0 %4055
        %v4057 = vsel %vm1988, %v4001, 0.0
        %4058 = vadd.xlane.f32.xlu0 %v4057
        %v4059 = vpop.xlane.xlu0 %4058
        %v4060 = vsel %vm1988, %v4003, 0.0
        %4061 = vadd.xlane.f32.xlu0 %v4060
        %v4062 = vpop.xlane.xlu0 %4061
        %v4063 = vsel %vm1988, %v4005, 0.0
        %4064 = vadd.xlane.f32.xlu0 %v4063
        %v4065 = vpop.xlane.xlu0 %4064
        %v4066 = vsel %vm1988, %v4007, 0.0
        %4067 = vadd.xlane.f32.xlu0 %v4066
        %v4068 = vpop.xlane.xlu0 %4067
        %v4069 = vsel %vm1988, %v4009, 0.0
        %4070 = vadd.xlane.f32.xlu0 %v4069
        %v4071 = vpop.xlane.xlu0 %4070
        %v4072 = vsel %vm1988, %v4011, 0.0
        %4073 = vadd.xlane.f32.xlu0 %v4072
        %v4074 = vpop.xlane.xlu0 %4073
        %v4075 = vsel %vm1988, %v4013, 0.0
        %4076 = vadd.xlane.f32.xlu0 %v4075
        %v4077 = vpop.xlane.xlu0 %4076
        %v4078 = vmul.f32 %v4032, 0.35355338
        %v4079 = vmul.f32 %v4035, 0.35355338
        %v4080 = vmul.f32 %v4038, 0.35355338
        %v4081 = vmul.f32 %v4041, 0.35355338
        %v4082 = vmul.f32 %v4044, 0.35355338
        %v4083 = vmul.f32 %v4047, 0.35355338
        %v4084 = vmul.f32 %v4050, 0.35355338
        %v4085 = vmul.f32 %v4053, 0.35355338
        %v4086 = vmul.f32 %v4056, 0.35355338
        %v4087 = vmul.f32 %v4059, 0.35355338
        %v4088 = vmul.f32 %v4062, 0.35355338
        %v4089 = vmul.f32 %v4065, 0.35355338
        %v4090 = vmul.f32 %v4068, 0.35355338
        %v4091 = vmul.f32 %v4071, 0.35355338
        %v4092 = vmul.f32 %v4074, 0.35355338
        %v4093 = vmul.f32 %v4077, 0.35355338
        %v4110 = vlaneseq
        %v4111 = vshrl.u32 %v4110, 7
        %v4112 = vsub.s32 %v2076, %v4111
        %v4113 = vrot.slane %v4078, %v4112
        %v4114 = vlaneseq
        %v4115 = vshrl.u32 %v4114, 7
        %v4116 = vsub.s32 %v2081, %v4115
        %v4117 = vrot.slane %v4079, %v4116
        %v4118 = vsel %vm2086, %v4117, %v4113
        %v4119 = vlaneseq
        %v4120 = vshrl.u32 %v4119, 7
        %v4121 = vsub.s32 %v2076, %v4120
        %v4122 = vrot.slane %v4080, %v4121
        %v4123 = vlaneseq
        %v4124 = vshrl.u32 %v4123, 7
        %v4125 = vsub.s32 %v2081, %v4124
        %v4126 = vrot.slane %v4081, %v4125
        %v4127 = vsel %vm2086, %v4126, %v4122
        %v4128 = vlaneseq
        %v4129 = vshrl.u32 %v4128, 7
        %v4130 = vsub.s32 %v2076, %v4129
        %v4131 = vrot.slane %v4082, %v4130
        %v4132 = vlaneseq
        %v4133 = vshrl.u32 %v4132, 7
        %v4134 = vsub.s32 %v2081, %v4133
        %v4135 = vrot.slane %v4083, %v4134
        %v4136 = vsel %vm2086, %v4135, %v4131
        %v4137 = vlaneseq
        %v4138 = vshrl.u32 %v4137, 7
        %v4139 = vsub.s32 %v2076, %v4138
        %v4140 = vrot.slane %v4084, %v4139
        %v4141 = vlaneseq
        %v4142 = vshrl.u32 %v4141, 7
        %v4143 = vsub.s32 %v2081, %v4142
        %v4144 = vrot.slane %v4085, %v4143
        %v4145 = vsel %vm2086, %v4144, %v4140
        %v4146 = vlaneseq
        %v4147 = vshrl.u32 %v4146, 7
        %v4148 = vsub.s32 %v2076, %v4147
        %v4149 = vrot.slane %v4086, %v4148
        %v4150 = vlaneseq
        %v4151 = vshrl.u32 %v4150, 7
        %v4152 = vsub.s32 %v2081, %v4151
        %v4153 = vrot.slane %v4087, %v4152
        %v4154 = vsel %vm2086, %v4153, %v4149
        %v4155 = vlaneseq
        %v4156 = vshrl.u32 %v4155, 7
        %v4157 = vsub.s32 %v2076, %v4156
        %v4158 = vrot.slane %v4088, %v4157
        %v4159 = vlaneseq
        %v4160 = vshrl.u32 %v4159, 7
        %v4161 = vsub.s32 %v2081, %v4160
        %v4162 = vrot.slane %v4089, %v4161
        %v4163 = vsel %vm2086, %v4162, %v4158
        %v4164 = vlaneseq
        %v4165 = vshrl.u32 %v4164, 7
        %v4166 = vsub.s32 %v2076, %v4165
        %v4167 = vrot.slane %v4090, %v4166
        %v4168 = vlaneseq
        %v4169 = vshrl.u32 %v4168, 7
        %v4170 = vsub.s32 %v2081, %v4169
        %v4171 = vrot.slane %v4091, %v4170
        %v4172 = vsel %vm2086, %v4171, %v4167
        %v4173 = vlaneseq
        %v4174 = vshrl.u32 %v4173, 7
        %v4175 = vsub.s32 %v2076, %v4174
        %v4176 = vrot.slane %v4092, %v4175
        %v4177 = vlaneseq
        %v4178 = vshrl.u32 %v4177, 7
        %v4179 = vsub.s32 %v2081, %v4178
        %v4180 = vrot.slane %v4093, %v4179
        %v4181 = vsel %vm2086, %v4180, %v4176
        %v4182 = vsel %vm2151, %v4127, %v4118
        %v4183 = vsel %vm2153, %v4136, %v4182
        %v4184 = vsel %vm2155, %v4145, %v4183
        %v4185 = vsel %vm2157, %v4154, %v4184
        %v4186 = vsel %vm2159, %v4163, %v4185
        %v4187 = vsel %vm2161, %v4172, %v4186
        %v4188 = vsel %vm2163, %v4181, %v4187
        %v4190 = vsel %vm2058, %v4188, -3.4028235e+38
        %v4191 = vsel %vm1265, %v4190, -inf
        %4192 = vmax.xlane.f32.xlu0 %v4191
        %v4193 = vpop.xlane.xlu0 %4192
        %v4194 = vsub.f32 %v4190, %v4193
        %v4195 = vmul.f32 %v4194, 1.442695
        %v4196 = vpow.pop %v4195
        %v4197 = vsel %vm1265, %v4196, 0.0
        %4198 = vadd.xlane.f32.xlu0 %v4197
        %v4199 = vpop.xlane.xlu0 %4198
        %v4200 = vrcp.pop %v4199
        %v4201 = vmul.f32 %v4196, %v4200
        %v4202 = vpack.c.bf16 %v4201, %v4201
        %4203 = vrot.lane.b32.xlu0 %v1712, 104
        %v4204 = vpop.permute.xlu0 %4203
        %v4207 = vsel %vm1265, %v4202, 0
        %4209 = vmatprep.subr.bf16.mxu0 0
        %4210 = vmatpush1.bf16.msra.mxu0 %v4204
        %4211 = vmatprep.subr.bf16.mxu0 0
        %4212 = vmatpush1.bf16.msra.mxu0 0
        %4213 = vmatprep.subr.bf16.mxu0 0
        %4214 = vmatpush1.bf16.msra.mxu0 0
        %4215 = vmatprep.subr.bf16.mxu0 0
        %4216 = vmatpush1.bf16.msra.mxu0 0
        %4217 = vmatprep.subr.bf16.mxu0 0
        %4218 = vmatpush1.bf16.msra.mxu0 0
        %4219 = vmatprep.subr.bf16.mxu0 0
        %4220 = vmatpush1.bf16.msra.mxu0 0
        %4221 = vmatprep.subr.bf16.mxu0 0
        %4222 = vmatpush1.bf16.msra.mxu0 0
        %4223 = vmatprep.subr.bf16.mxu0 0
        %4224 = vmatpush1.bf16.msra.mxu0 0
        %4225 = vmatprep.subr.bf16.mxu0 0
        %4226 = vmatpush1.bf16.msra.mxu0 0
        %4227 = vmatprep.subr.bf16.mxu0 0
        %4228 = vmatpush1.bf16.msra.mxu0 0
        %4229 = vmatprep.subr.bf16.mxu0 0
        %4230 = vmatpush1.bf16.msra.mxu0 0
        %4231 = vmatprep.subr.bf16.mxu0 0
        %4232 = vmatpush1.bf16.msra.mxu0 0
        %4233 = vmatprep.subr.bf16.mxu0 0
        %4234 = vmatpush1.bf16.msra.mxu0 0
        %4235 = vmatprep.subr.bf16.mxu0 0
        %4236 = vmatpush1.bf16.msra.mxu0 0
        %4237 = vmatprep.subr.bf16.mxu0 0
        %4238 = vmatpush1.bf16.msra.mxu0 0
        %4239 = vmatprep.subr.bf16.mxu0 0
        %4240 = vmatpush1.bf16.msra.mxu0 0
        %4241 = vmatprep.mubr.bf16.mxu0 0
        %4242 = vmatmul.mubr.bf16.gmra.mrb[0].mxu0 %v4207
        %v4243 = vpop.f32.mrb[0].mxu0
        %v4244 = vadd.f32 0.0, %v4243
        %v4245 = vpop.f32.mrb[0].mxu0
        %v4246 = vpop.f32.mrb[0].mxu0
        %v4247 = vpop.f32.mrb[0].mxu0
        %4248 = vdwg.mxu0
        %v4249 = vpack.c.bf16 %v4244, %v4244
        %v4251 = vsel %vm1988, %v4249, 0
        %v4254 = vsel %vm2226, %v1718, 0
        %4256 = vmatprep.subr.bf16.mxu0 0
        %4257 = vmatpush1.bf16.msra.mxu0 %v4254
        %4258 = vmatprep.subr.bf16.mxu0 0
        %4259 = vmatpush1.bf16.msra.mxu0 0
        %4260 = vmatprep.subr.bf16.mxu0 0
        %4261 = vmatpush1.bf16.msra.mxu0 0
        %4262 = vmatprep.subr.bf16.mxu0 0
        %4263 = vmatpush1.bf16.msra.mxu0 0
        %4264 = vmatprep.subr.bf16.mxu0 0
        %4265 = vmatpush1.bf16.msra.mxu0 0
        %4266 = vmatprep.subr.bf16.mxu0 0
        %4267 = vmatpush1.bf16.msra.mxu0 0
        %4268 = vmatprep.subr.bf16.mxu0 0
        %4269 = vmatpush1.bf16.msra.mxu0 0
        %4270 = vmatprep.subr.bf16.mxu0 0
        %4271 = vmatpush1.bf16.msra.mxu0 0
        %4272 = vmatprep.subr.bf16.mxu0 0
        %4273 = vmatpush1.bf16.msra.mxu0 0
        %4274 = vmatprep.subr.bf16.mxu0 0
        %4275 = vmatpush1.bf16.msra.mxu0 0
        %4276 = vmatprep.subr.bf16.mxu0 0
        %4277 = vmatpush1.bf16.msra.mxu0 0
        %4278 = vmatprep.subr.bf16.mxu0 0
        %4279 = vmatpush1.bf16.msra.mxu0 0
        %4280 = vmatprep.subr.bf16.mxu0 0
        %4281 = vmatpush1.bf16.msra.mxu0 0
        %4282 = vmatprep.subr.bf16.mxu0 0
        %4283 = vmatpush1.bf16.msra.mxu0 0
        %4284 = vmatprep.subr.bf16.mxu0 0
        %4285 = vmatpush1.bf16.msra.mxu0 0
        %4286 = vmatprep.subr.bf16.mxu0 0
        %4287 = vmatpush1.bf16.msra.mxu0 0
        %4288 = vmatprep.mubr.bf16.mxu0 0
        %4289 = vmatmul.mubr.bf16.gmra.mrb[0].mxu0 %v4251
        %v4290 = vpop.f32.mrb[0].mxu0
        %v4291 = vadd.f32 0.0, %v4290
        %v4292 = vpop.f32.mrb[0].mxu0
        %v4293 = vpop.f32.mrb[0].mxu0
        %v4294 = vpop.f32.mrb[0].mxu0
        %4295 = vdwg.mxu0
        %v4296 = vadd.f32 %v3613, %v4291
        %v4297 = vpack.c.bf16 %v3951, %v3950
        %v4298 = vpack.c.bf16 %v3953, %v3952
        %v4299 = vpack.c.bf16 %v3955, %v3954
        %v4300 = vpack.c.bf16 %v3957, %v3956
        %v4301 = vpack.c.bf16 %v3959, %v3958
        %v4302 = vpack.c.bf16 %v3961, %v3960
        %v4303 = vpack.c.bf16 %v3963, %v3962
        %v4304 = vpack.c.bf16 %v3965, %v3964
        %4313 = vrot.lane.b32.xlu0 %v4297, 104
        %v4314 = vpop.permute.xlu0 %4313
        %4315 = vrot.lane.b32.xlu0 %v4298, 104
        %v4316 = vpop.permute.xlu0 %4315
        %4317 = vrot.lane.b32.xlu0 %v4299, 104
        %v4318 = vpop.permute.xlu0 %4317
        %4319 = vrot.lane.b32.xlu0 %v4300, 104
        %v4320 = vpop.permute.xlu0 %4319
        %4321 = vrot.lane.b32.xlu0 %v4301, 104
        %v4322 = vpop.permute.xlu0 %4321
        %4323 = vrot.lane.b32.xlu0 %v4302, 104
        %v4324 = vpop.permute.xlu0 %4323
        %4325 = vrot.lane.b32.xlu0 %v4303, 104
        %v4326 = vpop.permute.xlu0 %4325
        %4327 = vrot.lane.b32.xlu0 %v4304, 104
        %v4328 = vpop.permute.xlu0 %4327
        %v4330 = vsel %vm1988, %v4314, 0
        %v4333 = vsel %vm1988, %v4316, 0
        %v4336 = vsel %vm1988, %v4318, 0
        %v4339 = vsel %vm1988, %v4320, 0
        %v4342 = vsel %vm1988, %v4322, 0
        %v4345 = vsel %vm1988, %v4324, 0
        %v4348 = vsel %vm1988, %v4326, 0
        %v4351 = vsel %vm1988, %v4328, 0
        %v4354 = vsel %vm2226, %v1722, 0
        %4356 = vmatprep.subr.bf16.mxu0 0
        %4357 = vmatpush1.bf16.msra.mxu0 %v4354
        %4358 = vmatprep.subr.bf16.mxu0 0
        %4359 = vmatpush1.bf16.msra.mxu0 0
        %4360 = vmatprep.subr.bf16.mxu0 0
        %4361 = vmatpush1.bf16.msra.mxu0 0
        %4362 = vmatprep.subr.bf16.mxu0 0
        %4363 = vmatpush1.bf16.msra.mxu0 0
        %4364 = vmatprep.subr.bf16.mxu0 0
        %4365 = vmatpush1.bf16.msra.mxu0 0
        %4366 = vmatprep.subr.bf16.mxu0 0
        %4367 = vmatpush1.bf16.msra.mxu0 0
        %4368 = vmatprep.subr.bf16.mxu0 0
        %4369 = vmatpush1.bf16.msra.mxu0 0
        %4370 = vmatprep.subr.bf16.mxu0 0
        %4371 = vmatpush1.bf16.msra.mxu0 0
        %4372 = vmatprep.subr.bf16.mxu0 0
        %4373 = vmatpush1.bf16.msra.mxu0 0
        %4374 = vmatprep.subr.bf16.mxu0 0
        %4375 = vmatpush1.bf16.msra.mxu0 0
        %4376 = vmatprep.subr.bf16.mxu0 0
        %4377 = vmatpush1.bf16.msra.mxu0 0
        %4378 = vmatprep.subr.bf16.mxu0 0
        %4379 = vmatpush1.bf16.msra.mxu0 0
        %4380 = vmatprep.subr.bf16.mxu0 0
        %4381 = vmatpush1.bf16.msra.mxu0 0
        %4382 = vmatprep.subr.bf16.mxu0 0
        %4383 = vmatpush1.bf16.msra.mxu0 0
        %4384 = vmatprep.subr.bf16.mxu0 0
        %4385 = vmatpush1.bf16.msra.mxu0 0
        %4386 = vmatprep.subr.bf16.mxu0 0
        %4387 = vmatpush1.bf16.msra.mxu0 0
        %4388 = vmatprep.mubr.bf16.mxu0 0
        %4389 = vmatmul.mubr.bf16.gmra.mrb[0].mxu0 %v4330
        %v4390 = vpop.f32.mrb[0].mxu0
        %v4391 = vadd.f32 0.0, %v4390
        %v4392 = vpop.f32.mrb[0].mxu0
        %v4393 = vpop.f32.mrb[0].mxu0
        %v4394 = vadd.f32 0.0, %v4393
        %v4395 = vpop.f32.mrb[0].mxu0
        %4396 = vmatprep.mubr.bf16.mxu0 0
        %4397 = vmatmul.mubr.bf16.gmra.mrb[0].mxu0 %v4333
        %v4398 = vpop.f32.mrb[0].mxu0
        %v4399 = vadd.f32 0.0, %v4398
        %v4400 = vpop.f32.mrb[0].mxu0
        %v4401 = vpop.f32.mrb[0].mxu0
        %v4402 = vadd.f32 0.0, %v4401
        %v4403 = vpop.f32.mrb[0].mxu0
        %4404 = vmatprep.mubr.bf16.mxu0 0
        %4405 = vmatmul.mubr.bf16.gmra.mrb[0].mxu0 %v4336
        %v4406 = vpop.f32.mrb[0].mxu0
        %v4407 = vadd.f32 0.0, %v4406
        %v4408 = vpop.f32.mrb[0].mxu0
        %v4409 = vpop.f32.mrb[0].mxu0
        %v4410 = vadd.f32 0.0, %v4409
        %v4411 = vpop.f32.mrb[0].mxu0
        %4412 = vmatprep.mubr.bf16.mxu0 0
        %4413 = vmatmul.mubr.bf16.gmra.mrb[0].mxu0 %v4339
        %v4414 = vpop.f32.mrb[0].mxu0
        %v4415 = vadd.f32 0.0, %v4414
        %v4416 = vpop.f32.mrb[0].mxu0
        %v4417 = vpop.f32.mrb[0].mxu0
        %v4418 = vadd.f32 0.0, %v4417
        %v4419 = vpop.f32.mrb[0].mxu0
        %4420 = vmatprep.mubr.bf16.mxu0 0
        %4421 = vmatmul.mubr.bf16.gmra.mrb[0].mxu0 %v4342
        %v4422 = vpop.f32.mrb[0].mxu0
        %v4423 = vadd.f32 0.0, %v4422
        %v4424 = vpop.f32.mrb[0].mxu0
        %v4425 = vpop.f32.mrb[0].mxu0
        %v4426 = vadd.f32 0.0, %v4425
        %v4427 = vpop.f32.mrb[0].mxu0
        %4428 = vmatprep.mubr.bf16.mxu0 0
        %4429 = vmatmul.mubr.bf16.gmra.mrb[0].mxu0 %v4345
        %v4430 = vpop.f32.mrb[0].mxu0
        %v4431 = vadd.f32 0.0, %v4430
        %v4432 = vpop.f32.mrb[0].mxu0
        %v4433 = vpop.f32.mrb[0].mxu0
        %v4434 = vadd.f32 0.0, %v4433
        %v4435 = vpop.f32.mrb[0].mxu0
        %4436 = vmatprep.mubr.bf16.mxu0 0
        %4437 = vmatmul.mubr.bf16.gmra.mrb[0].mxu0 %v4348
        %v4438 = vpop.f32.mrb[0].mxu0
        %v4439 = vadd.f32 0.0, %v4438
        %v4440 = vpop.f32.mrb[0].mxu0
        %v4441 = vpop.f32.mrb[0].mxu0
        %v4442 = vadd.f32 0.0, %v4441
        %v4443 = vpop.f32.mrb[0].mxu0
        %4444 = vmatprep.mubr.bf16.mxu0 0
        %4445 = vmatmul.mubr.bf16.gmra.mrb[0].mxu0 %v4351
        %v4446 = vpop.f32.mrb[0].mxu0
        %v4447 = vadd.f32 0.0, %v4446
        %v4448 = vpop.f32.mrb[0].mxu0
        %v4449 = vpop.f32.mrb[0].mxu0
        %v4450 = vadd.f32 0.0, %v4449
        %v4451 = vpop.f32.mrb[0].mxu0
        %4452 = vdwg.mxu0
        %v4453 = vadd.f32 %v3770, %v4391
        %v4454 = vadd.f32 %v3771, %v4394
        %v4455 = vadd.f32 %v3772, %v4399
        %v4456 = vadd.f32 %v3773, %v4402
        %v4457 = vadd.f32 %v3774, %v4407
        %v4458 = vadd.f32 %v3775, %v4410
        %v4459 = vadd.f32 %v3776, %v4415
        %v4460 = vadd.f32 %v3777, %v4418
        %v4461 = vadd.f32 %v3778, %v4423
        %v4462 = vadd.f32 %v3779, %v4426
        %v4463 = vadd.f32 %v3780, %v4431
        %v4464 = vadd.f32 %v3781, %v4434
        %v4465 = vadd.f32 %v3782, %v4439
        %v4466 = vadd.f32 %v3783, %v4442
        %v4467 = vadd.f32 %v3784, %v4447
        %v4468 = vadd.f32 %v3785, %v4450
        %v4469 = vadd.f32 %v4296, %v1201
        %v4470 = vadd.f32 %v4453, %v1181
        %v4471 = vadd.f32 %v4454, %v1182
        %v4472 = vadd.f32 %v4455, %v1183
        %v4473 = vadd.f32 %v4456, %v1184
        %v4474 = vadd.f32 %v4457, %v1185
        %v4475 = vadd.f32 %v4458, %v1186
        %v4476 = vadd.f32 %v4459, %v1187
        %v4477 = vadd.f32 %v4460, %v1188
        %v4478 = vadd.f32 %v4461, %v1189
        %v4479 = vadd.f32 %v4462, %v1190
        %v4480 = vadd.f32 %v4463, %v1191
        %v4481 = vadd.f32 %v4464, %v1192
        %v4482 = vadd.f32 %v4465, %v1193
        %v4483 = vadd.f32 %v4466, %v1194
        %v4484 = vadd.f32 %v4467, %v1195
        %v4485 = vadd.f32 %v4468, %v1196
        %v4486 = vld [vmem:[%s33] sm:$0x1]
        %v4487 = vld [vmem:[%s35] sm:$0x1]
        %v4488 = vsel %vm1204, %v4469, 0.0
        %4489 = vadd.xlane.f32.xlu0 %v4488
        %v4490 = vpop.xlane.xlu0 %4489
        %v4491 = vmul.f32 %v4490, %v1211
        %v4492 = vsub.f32 %v4469, %v4491
        %v4493 = vmul.f32 %v4492, %v4492
        %v4494 = vsel %vm1204, %v4493, 0.0
        %4495 = vadd.xlane.f32.xlu0 %v4494
        %v4496 = vpop.xlane.xlu0 %4495
        %v4497 = vmul.f32 %v4496, %v1211
        %v4498 = vadd.f32 %v4497, 1e-05
        %v4499 = vrsqrt.pop %v4498
        %v4500 = vmul.f32 %v4492, %v4499
        %v4502 = vlaneseq
        %v4503 = vshrl.u32 %v4502, 7
        %v4504 = vsub.s32 0, %v4503
        %v4505 = vrot.slane %v4486, %v4504
        %v4507 = vmul.f32 %v4500, %v4505
        %v4509 = vlaneseq
        %v4510 = vshrl.u32 %v4509, 7
        %v4511 = vsub.s32 0, %v4510
        %v4512 = vrot.slane %v4487, %v4511
        %v4514 = vadd.f32 %v4507, %v4512
        %v4515 = vpack.c.bf16 %v4514, %v4514
        %v4516 = vld [vmem:[%s37] sm:$0xf]
        %v4517 = vld [vmem:[%s37 + $0x4] sm:$0xf]
        %v4518 = vld [vmem:[%s37 + $0x8] sm:$0xf]
        %v4519 = vld [vmem:[%s37 + $0xc] sm:$0xf]
        %v4520 = vld [vmem:[#allocation20] sm:$0x1]
        %v4522 = vlaneseq
        %v4523 = vshrl.u32 %v4522, 7
        %v4524 = vsub.s32 0, %v4523
        %v4525 = vrot.slane %v4520, %v4524
        %v4531 = vunpack.c.l.b16 %v4516
        %v4532 = vunpack.c.l.b16 %v4517
        %v4533 = vunpack.c.l.b16 %v4518
        %v4534 = vunpack.c.l.b16 %v4519
        %v4535 = vpack.c.b16 %v4532, %v4531
        %v4536 = vpack.c.b16 %v4534, %v4533
        %v4540 = vsel %vm1204, %v4515, 0
        %4542 = vmatprep.subr.bf16.mxu0 0
        %4543 = vmatpush1.bf16.msra.mxu0 %v4535
        %4544 = vmatprep.subr.bf16.mxu0 0
        %4545 = vmatpush1.bf16.msra.mxu0 %v4536
        %4546 = vmatprep.subr.bf16.mxu0 0
        %4547 = vmatpush1.bf16.msra.mxu0 0
        %4548 = vmatprep.subr.bf16.mxu0 0
        %4549 = vmatpush1.bf16.msra.mxu0 0
        %4550 = vmatprep.subr.bf16.mxu0 0
        %4551 = vmatpush1.bf16.msra.mxu0 0
        %4552 = vmatprep.subr.bf16.mxu0 0
        %4553 = vmatpush1.bf16.msra.mxu0 0
        %4554 = vmatprep.subr.bf16.mxu0 0
        %4555 = vmatpush1.bf16.msra.mxu0 0
        %4556 = vmatprep.subr.bf16.mxu0 0
        %4557 = vmatpush1.bf16.msra.mxu0 0
        %4558 = vmatprep.subr.bf16.mxu0 0
        %4559 = vmatpush1.bf16.msra.mxu0 0
        %4560 = vmatprep.subr.bf16.mxu0 0
        %4561 = vmatpush1.bf16.msra.mxu0 0
        %4562 = vmatprep.subr.bf16.mxu0 0
        %4563 = vmatpush1.bf16.msra.mxu0 0
        %4564 = vmatprep.subr.bf16.mxu0 0
        %4565 = vmatpush1.bf16.msra.mxu0 0
        %4566 = vmatprep.subr.bf16.mxu0 0
        %4567 = vmatpush1.bf16.msra.mxu0 0
        %4568 = vmatprep.subr.bf16.mxu0 0
        %4569 = vmatpush1.bf16.msra.mxu0 0
        %4570 = vmatprep.subr.bf16.mxu0 0
        %4571 = vmatpush1.bf16.msra.mxu0 0
        %4572 = vmatprep.subr.bf16.mxu0 0
        %4573 = vmatpush1.bf16.msra.mxu0 0
        %4574 = vmatprep.mubr.bf16.mxu0 0
        %4575 = vmatmul.mubr.bf16.gmra.mrb[0].mxu0 %v4540
        %v4576 = vpop.f32.mrb[0].mxu0
        %v4577 = vadd.f32 %v4525, %v4576
        %v4578 = vpop.f32.mrb[0].mxu0
        %v4579 = vpop.f32.mrb[0].mxu0
        %v4580 = vpop.f32.mrb[0].mxu0
        %4581 = vdwg.mxu0
        %vm4582 = vcmp.ge.f32.partialorder %v4577, 0.0
        %v4583 = vmul.f32 %v4577, 0.01
        %v4584 = vsel %vm4582, %v4577, %v4583
        %v4585 = vpack.c.bf16 %v4584, %v4584
        %v4586 = vld [vmem:[%s41] sm:$0xf]
        %v4587 = vld [vmem:[%s41 + $0x4] sm:$0xf]
        %v4588 = vld [vmem:[%s41 + $0x8] sm:$0xf]
        %v4589 = vld [vmem:[%s41 + $0xc] sm:$0xf]
        %v4590 = vld [vmem:[#allocation22] sm:$0x1]
        %v4592 = vlaneseq
        %v4593 = vshrl.u32 %v4592, 7
        %v4594 = vsub.s32 0, %v4593
        %v4595 = vrot.slane %v4590, %v4594
        %v4601 = vunpack.c.l.b16 %v4586
        %v4602 = vunpack.c.l.b16 %v4587
        %v4603 = vunpack.c.l.b16 %v4588
        %v4604 = vunpack.c.l.b16 %v4589
        %v4605 = vpack.c.b16 %v4602, %v4601
        %v4606 = vpack.c.b16 %v4604, %v4603
        %v4610 = vsel %vm1204, %v4585, 0
        %4612 = vmatprep.subr.bf16.mxu0 0
        %4613 = vmatpush1.bf16.msra.mxu0 %v4605
        %4614 = vmatprep.subr.bf16.mxu0 0
        %4615 = vmatpush1.bf16.msra.mxu0 %v4606
        %4616 = vmatprep.subr.bf16.mxu0 0
        %4617 = vmatpush1.bf16.msra.mxu0 0
        %4618 = vmatprep.subr.bf16.mxu0 0
        %4619 = vmatpush1.bf16.msra.mxu0 0
        %4620 = vmatprep.subr.bf16.mxu0 0
        %4621 = vmatpush1.bf16.msra.mxu0 0
        %4622 = vmatprep.subr.bf16.mxu0 0
        %4623 = vmatpush1.bf16.msra.mxu0 0
        %4624 = vmatprep.subr.bf16.mxu0 0
        %4625 = vmatpush1.bf16.msra.mxu0 0
        %4626 = vmatprep.subr.bf16.mxu0 0
        %4627 = vmatpush1.bf16.msra.mxu0 0
        %4628 = vmatprep.subr.bf16.mxu0 0
        %4629 = vmatpush1.bf16.msra.mxu0 0
        %4630 = vmatprep.subr.bf16.mxu0 0
        %4631 = vmatpush1.bf16.msra.mxu0 0
        %4632 = vmatprep.subr.bf16.mxu0 0
        %4633 = vmatpush1.bf16.msra.mxu0 0
        %4634 = vmatprep.subr.bf16.mxu0 0
        %4635 = vmatpush1.bf16.msra.mxu0 0
        %4636 = vmatprep.subr.bf16.mxu0 0
        %4637 = vmatpush1.bf16.msra.mxu0 0
        %4638 = vmatprep.subr.bf16.mxu0 0
        %4639 = vmatpush1.bf16.msra.mxu0 0
        %4640 = vmatprep.subr.bf16.mxu0 0
        %4641 = vmatpush1.bf16.msra.mxu0 0
        %4642 = vmatprep.subr.bf16.mxu0 0
        %4643 = vmatpush1.bf16.msra.mxu0 0
        %4644 = vmatprep.mubr.bf16.mxu0 0
        %4645 = vmatmul.mubr.bf16.gmra.mrb[0].mxu0 %v4610
        %v4646 = vpop.f32.mrb[0].mxu0
        %v4647 = vadd.f32 %v4595, %v4646
        %v4648 = vpop.f32.mrb[0].mxu0
        %v4649 = vpop.f32.mrb[0].mxu0
        %v4650 = vpop.f32.mrb[0].mxu0
        %4651 = vdwg.mxu0
        %vm4652 = vcmp.ge.f32.partialorder %v4647, 0.0
        %v4653 = vmul.f32 %v4647, 0.01
        %v4654 = vsel %vm4652, %v4647, %v4653
        %v4655 = vadd.f32 %v4654, %v4469
        %4656 = vst.msk [vmem:[%s1168] sm:$0xff] %vm1204, %v4655
        %v4657 = vld [vmem:[#allocation23] sm:$0x1]
        %v4658 = vld [vmem:[#allocation25] sm:$0x1]
        %v4659 = vsel %vm1265, %v4470, 0.0
        %4660 = vadd.xlane.f32.xlu0 %v4659
        %v4661 = vpop.xlane.xlu0 %4660
        %v4662 = vsel %vm1265, %v4471, 0.0
        %4663 = vadd.xlane.f32.xlu0 %v4662
        %v4664 = vpop.xlane.xlu0 %4663
        %v4665 = vsel %vm1265, %v4472, 0.0
        %4666 = vadd.xlane.f32.xlu0 %v4665
        %v4667 = vpop.xlane.xlu0 %4666
        %v4668 = vsel %vm1265, %v4473, 0.0
        %4669 = vadd.xlane.f32.xlu0 %v4668
        %v4670 = vpop.xlane.xlu0 %4669
        %v4671 = vsel %vm1265, %v4474, 0.0
        %4672 = vadd.xlane.f32.xlu0 %v4671
        %v4673 = vpop.xlane.xlu0 %4672
        %v4674 = vsel %vm1265, %v4475, 0.0
        %4675 = vadd.xlane.f32.xlu0 %v4674
        %v4676 = vpop.xlane.xlu0 %4675
        %v4677 = vsel %vm1265, %v4476, 0.0
        %4678 = vadd.xlane.f32.xlu0 %v4677
        %v4679 = vpop.xlane.xlu0 %4678
        %v4680 = vsel %vm1265, %v4477, 0.0
        %4681 = vadd.xlane.f32.xlu0 %v4680
        %v4682 = vpop.xlane.xlu0 %4681
        %v4683 = vsel %vm1265, %v4478, 0.0
        %4684 = vadd.xlane.f32.xlu0 %v4683
        %v4685 = vpop.xlane.xlu0 %4684
        %v4686 = vsel %vm1265, %v4479, 0.0
        %4687 = vadd.xlane.f32.xlu0 %v4686
        %v4688 = vpop.xlane.xlu0 %4687
        %v4689 = vsel %vm1265, %v4480, 0.0
        %4690 = vadd.xlane.f32.xlu0 %v4689
        %v4691 = vpop.xlane.xlu0 %4690
        %v4692 = vsel %vm1265, %v4481, 0.0
        %4693 = vadd.xlane.f32.xlu0 %v4692
        %v4694 = vpop.xlane.xlu0 %4693
        %v4695 = vsel %vm1265, %v4482, 0.0
        %4696 = vadd.xlane.f32.xlu0 %v4695
        %v4697 = vpop.xlane.xlu0 %4696
        %v4698 = vsel %vm1265, %v4483, 0.0
        %4699 = vadd.xlane.f32.xlu0 %v4698
        %v4700 = vpop.xlane.xlu0 %4699
        %v4701 = vsel %vm1265, %v4484, 0.0
        %4702 = vadd.xlane.f32.xlu0 %v4701
        %v4703 = vpop.xlane.xlu0 %4702
        %v4704 = vsel %vm1265, %v4485, 0.0
        %4705 = vadd.xlane.f32.xlu0 %v4704
        %v4706 = vpop.xlane.xlu0 %4705
        %v4707 = vmul.f32 %v4661, %v1314
        %v4708 = vmul.f32 %v4664, %v1314
        %v4709 = vmul.f32 %v4667, %v1314
        %v4710 = vmul.f32 %v4670, %v1314
        %v4711 = vmul.f32 %v4673, %v1314
        %v4712 = vmul.f32 %v4676, %v1314
        %v4713 = vmul.f32 %v4679, %v1314
        %v4714 = vmul.f32 %v4682, %v1314
        %v4715 = vmul.f32 %v4685, %v1314
        %v4716 = vmul.f32 %v4688, %v1314
        %v4717 = vmul.f32 %v4691, %v1314
        %v4718 = vmul.f32 %v4694, %v1314
        %v4719 = vmul.f32 %v4697, %v1314
        %v4720 = vmul.f32 %v4700, %v1314
        %v4721 = vmul.f32 %v4703, %v1314
        %v4722 = vmul.f32 %v4706, %v1314
        %v4723 = vsub.f32 %v4470, %v4707
        %v4724 = vsub.f32 %v4471, %v4708
        %v4725 = vsub.f32 %v4472, %v4709
        %v4726 = vsub.f32 %v4473, %v4710
        %v4727 = vsub.f32 %v4474, %v4711
        %v4728 = vsub.f32 %v4475, %v4712
        %v4729 = vsub.f32 %v4476, %v4713
        %v4730 = vsub.f32 %v4477, %v4714
        %v4731 = vsub.f32 %v4478, %v4715
        %v4732 = vsub.f32 %v4479, %v4716
        %v4733 = vsub.f32 %v4480, %v4717
        %v4734 = vsub.f32 %v4481, %v4718
        %v4735 = vsub.f32 %v4482, %v4719
        %v4736 = vsub.f32 %v4483, %v4720
        %v4737 = vsub.f32 %v4484, %v4721
        %v4738 = vsub.f32 %v4485, %v4722
        %v4739 = vmul.f32 %v4723, %v4723
        %v4740 = vmul.f32 %v4724, %v4724
        %v4741 = vmul.f32 %v4725, %v4725
        %v4742 = vmul.f32 %v4726, %v4726
        %v4743 = vmul.f32 %v4727, %v4727
        %v4744 = vmul.f32 %v4728, %v4728
        %v4745 = vmul.f32 %v4729, %v4729
        %v4746 = vmul.f32 %v4730, %v4730
        %v4747 = vmul.f32 %v4731, %v4731
        %v4748 = vmul.f32 %v4732, %v4732
        %v4749 = vmul.f32 %v4733, %v4733
        %v4750 = vmul.f32 %v4734, %v4734
        %v4751 = vmul.f32 %v4735, %v4735
        %v4752 = vmul.f32 %v4736, %v4736
        %v4753 = vmul.f32 %v4737, %v4737
        %v4754 = vmul.f32 %v4738, %v4738
        %v4755 = vsel %vm1265, %v4739, 0.0
        %4756 = vadd.xlane.f32.xlu0 %v4755
        %v4757 = vpop.xlane.xlu0 %4756
        %v4758 = vsel %vm1265, %v4740, 0.0
        %4759 = vadd.xlane.f32.xlu0 %v4758
        %v4760 = vpop.xlane.xlu0 %4759
        %v4761 = vsel %vm1265, %v4741, 0.0
        %4762 = vadd.xlane.f32.xlu0 %v4761
        %v4763 = vpop.xlane.xlu0 %4762
        %v4764 = vsel %vm1265, %v4742, 0.0
        %4765 = vadd.xlane.f32.xlu0 %v4764
        %v4766 = vpop.xlane.xlu0 %4765
        %v4767 = vsel %vm1265, %v4743, 0.0
        %4768 = vadd.xlane.f32.xlu0 %v4767
        %v4769 = vpop.xlane.xlu0 %4768
        %v4770 = vsel %vm1265, %v4744, 0.0
        %4771 = vadd.xlane.f32.xlu0 %v4770
        %v4772 = vpop.xlane.xlu0 %4771
        %v4773 = vsel %vm1265, %v4745, 0.0
        %4774 = vadd.xlane.f32.xlu0 %v4773
        %v4775 = vpop.xlane.xlu0 %4774
        %v4776 = vsel %vm1265, %v4746, 0.0
        %4777 = vadd.xlane.f32.xlu0 %v4776
        %v4778 = vpop.xlane.xlu0 %4777
        %v4779 = vsel %vm1265, %v4747, 0.0
        %4780 = vadd.xlane.f32.xlu0 %v4779
        %v4781 = vpop.xlane.xlu0 %4780
        %v4782 = vsel %vm1265, %v4748, 0.0
        %4783 = vadd.xlane.f32.xlu0 %v4782
        %v4784 = vpop.xlane.xlu0 %4783
        %v4785 = vsel %vm1265, %v4749, 0.0
        %4786 = vadd.xlane.f32.xlu0 %v4785
        %v4787 = vpop.xlane.xlu0 %4786
        %v4788 = vsel %vm1265, %v4750, 0.0
        %4789 = vadd.xlane.f32.xlu0 %v4788
        %v4790 = vpop.xlane.xlu0 %4789
        %v4791 = vsel %vm1265, %v4751, 0.0
        %4792 = vadd.xlane.f32.xlu0 %v4791
        %v4793 = vpop.xlane.xlu0 %4792
        %v4794 = vsel %vm1265, %v4752, 0.0
        %4795 = vadd.xlane.f32.xlu0 %v4794
        %v4796 = vpop.xlane.xlu0 %4795
        %v4797 = vsel %vm1265, %v4753, 0.0
        %4798 = vadd.xlane.f32.xlu0 %v4797
        %v4799 = vpop.xlane.xlu0 %4798
        %v4800 = vsel %vm1265, %v4754, 0.0
        %4801 = vadd.xlane.f32.xlu0 %v4800
        %v4802 = vpop.xlane.xlu0 %4801
        %v4803 = vmul.f32 %v4757, %v1314
        %v4804 = vmul.f32 %v4760, %v1314
        %v4805 = vmul.f32 %v4763, %v1314
        %v4806 = vmul.f32 %v4766, %v1314
        %v4807 = vmul.f32 %v4769, %v1314
        %v4808 = vmul.f32 %v4772, %v1314
        %v4809 = vmul.f32 %v4775, %v1314
        %v4810 = vmul.f32 %v4778, %v1314
        %v4811 = vmul.f32 %v4781, %v1314
        %v4812 = vmul.f32 %v4784, %v1314
        %v4813 = vmul.f32 %v4787, %v1314
        %v4814 = vmul.f32 %v4790, %v1314
        %v4815 = vmul.f32 %v4793, %v1314
        %v4816 = vmul.f32 %v4796, %v1314
        %v4817 = vmul.f32 %v4799, %v1314
        %v4818 = vmul.f32 %v4802, %v1314
        %v4819 = vadd.f32 %v4803, 1e-05
        %v4820 = vadd.f32 %v4804, 1e-05
        %v4821 = vadd.f32 %v4805, 1e-05
        %v4822 = vadd.f32 %v4806, 1e-05
        %v4823 = vadd.f32 %v4807, 1e-05
        %v4824 = vadd.f32 %v4808, 1e-05
        %v4825 = vadd.f32 %v4809, 1e-05
        %v4826 = vadd.f32 %v4810, 1e-05
        %v4827 = vadd.f32 %v4811, 1e-05
        %v4828 = vadd.f32 %v4812, 1e-05
        %v4829 = vadd.f32 %v4813, 1e-05
        %v4830 = vadd.f32 %v4814, 1e-05
        %v4831 = vadd.f32 %v4815, 1e-05
        %v4832 = vadd.f32 %v4816, 1e-05
        %v4833 = vadd.f32 %v4817, 1e-05
        %v4834 = vadd.f32 %v4818, 1e-05
        %v4835 = vrsqrt.pop %v4819
        %v4836 = vrsqrt.pop %v4820
        %v4837 = vrsqrt.pop %v4821
        %v4838 = vrsqrt.pop %v4822
        %v4839 = vrsqrt.pop %v4823
        %v4840 = vrsqrt.pop %v4824
        %v4841 = vrsqrt.pop %v4825
        %v4842 = vrsqrt.pop %v4826
        %v4843 = vrsqrt.pop %v4827
        %v4844 = vrsqrt.pop %v4828
        %v4845 = vrsqrt.pop %v4829
        %v4846 = vrsqrt.pop %v4830
        %v4847 = vrsqrt.pop %v4831
        %v4848 = vrsqrt.pop %v4832
        %v4849 = vrsqrt.pop %v4833
        %v4850 = vrsqrt.pop %v4834
        %v4851 = vmul.f32 %v4723, %v4835
        %v4852 = vmul.f32 %v4724, %v4836
        %v4853 = vmul.f32 %v4725, %v4837
        %v4854 = vmul.f32 %v4726, %v4838
        %v4855 = vmul.f32 %v4727, %v4839
        %v4856 = vmul.f32 %v4728, %v4840
        %v4857 = vmul.f32 %v4729, %v4841
        %v4858 = vmul.f32 %v4730, %v4842
        %v4859 = vmul.f32 %v4731, %v4843
        %v4860 = vmul.f32 %v4732, %v4844
        %v4861 = vmul.f32 %v4733, %v4845
        %v4862 = vmul.f32 %v4734, %v4846
        %v4863 = vmul.f32 %v4735, %v4847
        %v4864 = vmul.f32 %v4736, %v4848
        %v4865 = vmul.f32 %v4737, %v4849
        %v4866 = vmul.f32 %v4738, %v4850
        %v4868 = vlaneseq
        %v4869 = vshrl.u32 %v4868, 7
        %v4870 = vsub.s32 0, %v4869
        %v4871 = vrot.slane %v4657, %v4870
        %v4873 = vmul.f32 %v4851, %v4871
        %v4874 = vmul.f32 %v4852, %v4871
        %v4875 = vmul.f32 %v4853, %v4871
        %v4876 = vmul.f32 %v4854, %v4871
        %v4877 = vmul.f32 %v4855, %v4871
        %v4878 = vmul.f32 %v4856, %v4871
        %v4879 = vmul.f32 %v4857, %v4871
        %v4880 = vmul.f32 %v4858, %v4871
        %v4881 = vmul.f32 %v4859, %v4871
        %v4882 = vmul.f32 %v4860, %v4871
        %v4883 = vmul.f32 %v4861, %v4871
        %v4884 = vmul.f32 %v4862, %v4871
        %v4885 = vmul.f32 %v4863, %v4871
        %v4886 = vmul.f32 %v4864, %v4871
        %v4887 = vmul.f32 %v4865, %v4871
        %v4888 = vmul.f32 %v4866, %v4871
        %v4890 = vlaneseq
        %v4891 = vshrl.u32 %v4890, 7
        %v4892 = vsub.s32 0, %v4891
        %v4893 = vrot.slane %v4658, %v4892
        %v4895 = vadd.f32 %v4873, %v4893
        %v4896 = vadd.f32 %v4874, %v4893
        %v4897 = vadd.f32 %v4875, %v4893
        %v4898 = vadd.f32 %v4876, %v4893
        %v4899 = vadd.f32 %v4877, %v4893
        %v4900 = vadd.f32 %v4878, %v4893
        %v4901 = vadd.f32 %v4879, %v4893
        %v4902 = vadd.f32 %v4880, %v4893
        %v4903 = vadd.f32 %v4881, %v4893
        %v4904 = vadd.f32 %v4882, %v4893
        %v4905 = vadd.f32 %v4883, %v4893
        %v4906 = vadd.f32 %v4884, %v4893
        %v4907 = vadd.f32 %v4885, %v4893
        %v4908 = vadd.f32 %v4886, %v4893
        %v4909 = vadd.f32 %v4887, %v4893
        %v4910 = vadd.f32 %v4888, %v4893
        %v4911 = vpack.c.bf16 %v4896, %v4895
        %v4912 = vpack.c.bf16 %v4898, %v4897
        %v4913 = vpack.c.bf16 %v4900, %v4899
        %v4914 = vpack.c.bf16 %v4902, %v4901
        %v4915 = vpack.c.bf16 %v4904, %v4903
        %v4916 = vpack.c.bf16 %v4906, %v4905
        %v4917 = vpack.c.bf16 %v4908, %v4907
        %v4918 = vpack.c.bf16 %v4910, %v4909
        %v4919 = vld [vmem:[%s49] sm:$0xf]
        %v4920 = vld [vmem:[%s49 + $0x4] sm:$0xf]
        %v4921 = vld [vmem:[%s51] sm:$0x1]
        %v4923 = vlaneseq
        %v4924 = vshrl.u32 %v4923, 7
        %v4925 = vsub.s32 0, %v4924
        %v4926 = vrot.slane %v4921, %v4925
        %v4930 = vunpack.c.l.b16 %v4919
        %v4931 = vunpack.c.l.b16 %v4920
        %v4932 = vpack.c.b16 %v4931, %v4930
        %v4935 = vsel %vm1265, %v4911, 0
        %v4938 = vsel %vm1265, %v4912, 0
        %v4941 = vsel %vm1265, %v4913, 0
        %v4944 = vsel %vm1265, %v4914, 0
        %v4947 = vsel %vm1265, %v4915, 0
        %v4950 = vsel %vm1265, %v4916, 0
        %v4953 = vsel %vm1265, %v4917, 0
        %v4956 = vsel %vm1265, %v4918, 0
        %4958 = vmatprep.subr.bf16.mxu0 0
        %4959 = vmatpush1.bf16.msra.mxu0 %v4932
        %4960 = vmatprep.subr.bf16.mxu0 0
        %4961 = vmatpush1.bf16.msra.mxu0 0
        %4962 = vmatprep.subr.bf16.mxu0 0
        %4963 = vmatpush1.bf16.msra.mxu0 0
        %4964 = vmatprep.subr.bf16.mxu0 0
        %4965 = vmatpush1.bf16.msra.mxu0 0
        %4966 = vmatprep.subr.bf16.mxu0 0
        %4967 = vmatpush1.bf16.msra.mxu0 0
        %4968 = vmatprep.subr.bf16.mxu0 0
        %4969 = vmatpush1.bf16.msra.mxu0 0
        %4970 = vmatprep.subr.bf16.mxu0 0
        %4971 = vmatpush1.bf16.msra.mxu0 0
        %4972 = vmatprep.subr.bf16.mxu0 0
        %4973 = vmatpush1.bf16.msra.mxu0 0
        %4974 = vmatprep.subr.bf16.mxu0 0
        %4975 = vmatpush1.bf16.msra.mxu0 0
        %4976 = vmatprep.subr.bf16.mxu0 0
        %4977 = vmatpush1.bf16.msra.mxu0 0
        %4978 = vmatprep.subr.bf16.mxu0 0
        %4979 = vmatpush1.bf16.msra.mxu0 0
        %4980 = vmatprep.subr.bf16.mxu0 0
        %4981 = vmatpush1.bf16.msra.mxu0 0
        %4982 = vmatprep.subr.bf16.mxu0 0
        %4983 = vmatpush1.bf16.msra.mxu0 0
        %4984 = vmatprep.subr.bf16.mxu0 0
        %4985 = vmatpush1.bf16.msra.mxu0 0
        %4986 = vmatprep.subr.bf16.mxu0 0
        %4987 = vmatpush1.bf16.msra.mxu0 0
        %4988 = vmatprep.subr.bf16.mxu0 0
        %4989 = vmatpush1.bf16.msra.mxu0 0
        %4990 = vmatprep.mubr.bf16.mxu0 0
        %4991 = vmatmul.mubr.bf16.gmra.mrb[0].mxu0 %v4935
        %v4992 = vpop.f32.mrb[0].mxu0
        %v4993 = vadd.f32 %v4926, %v4992
        %v4994 = vpop.f32.mrb[0].mxu0
        %v4995 = vpop.f32.mrb[0].mxu0
        %v4996 = vadd.f32 %v4926, %v4995
        %v4997 = vpop.f32.mrb[0].mxu0
        %4998 = vmatprep.mubr.bf16.mxu0 0
        %4999 = vmatmul.mubr.bf16.gmra.mrb[0].mxu0 %v4938
        %v5000 = vpop.f32.mrb[0].mxu0
        %v5001 = vadd.f32 %v4926, %v5000
        %v5002 = vpop.f32.mrb[0].mxu0
        %v5003 = vpop.f32.mrb[0].mxu0
        %v5004 = vadd.f32 %v4926, %v5003
        %v5005 = vpop.f32.mrb[0].mxu0
        %5006 = vmatprep.mubr.bf16.mxu0 0
        %5007 = vmatmul.mubr.bf16.gmra.mrb[0].mxu0 %v4941
        %v5008 = vpop.f32.mrb[0].mxu0
        %v5009 = vadd.f32 %v4926, %v5008
        %v5010 = vpop.f32.mrb[0].mxu0
        %v5011 = vpop.f32.mrb[0].mxu0
        %v5012 = vadd.f32 %v4926, %v5011
        %v5013 = vpop.f32.mrb[0].mxu0
        %5014 = vmatprep.mubr.bf16.mxu0 0
        %5015 = vmatmul.mubr.bf16.gmra.mrb[0].mxu0 %v4944
        %v5016 = vpop.f32.mrb[0].mxu0
        %v5017 = vadd.f32 %v4926, %v5016
        %v5018 = vpop.f32.mrb[0].mxu0
        %v5019 = vpop.f32.mrb[0].mxu0
        %v5020 = vadd.f32 %v4926, %v5019
        %v5021 = vpop.f32.mrb[0].mxu0
        %5022 = vmatprep.mubr.bf16.mxu0 0
        %5023 = vmatmul.mubr.bf16.gmra.mrb[0].mxu0 %v4947
        %v5024 = vpop.f32.mrb[0].mxu0
        %v5025 = vadd.f32 %v4926, %v5024
        %v5026 = vpop.f32.mrb[0].mxu0
        %v5027 = vpop.f32.mrb[0].mxu0
        %v5028 = vadd.f32 %v4926, %v5027
        %v5029 = vpop.f32.mrb[0].mxu0
        %5030 = vmatprep.mubr.bf16.mxu0 0
        %5031 = vmatmul.mubr.bf16.gmra.mrb[0].mxu0 %v4950
        %v5032 = vpop.f32.mrb[0].mxu0
        %v5033 = vadd.f32 %v4926, %v5032
        %v5034 = vpop.f32.mrb[0].mxu0
        %v5035 = vpop.f32.mrb[0].mxu0
        %v5036 = vadd.f32 %v4926, %v5035
        %v5037 = vpop.f32.mrb[0].mxu0
        %5038 = vmatprep.mubr.bf16.mxu0 0
        %5039 = vmatmul.mubr.bf16.gmra.mrb[0].mxu0 %v4953
        %v5040 = vpop.f32.mrb[0].mxu0
        %v5041 = vadd.f32 %v4926, %v5040
        %v5042 = vpop.f32.mrb[0].mxu0
        %v5043 = vpop.f32.mrb[0].mxu0
        %v5044 = vadd.f32 %v4926, %v5043
        %v5045 = vpop.f32.mrb[0].mxu0
        %5046 = vmatprep.mubr.bf16.mxu0 0
        %5047 = vmatmul.mubr.bf16.gmra.mrb[0].mxu0 %v4956
        %v5048 = vpop.f32.mrb[0].mxu0
        %v5049 = vadd.f32 %v4926, %v5048
        %v5050 = vpop.f32.mrb[0].mxu0
        %v5051 = vpop.f32.mrb[0].mxu0
        %v5052 = vadd.f32 %v4926, %v5051
        %v5053 = vpop.f32.mrb[0].mxu0
        %5054 = vdwg.mxu0
        %vm5055 = vcmp.ge.f32.partialorder %v4993, 0.0
        %vm5056 = vcmp.ge.f32.partialorder %v4996, 0.0
        %vm5057 = vcmp.ge.f32.partialorder %v5001, 0.0
        %vm5058 = vcmp.ge.f32.partialorder %v5004, 0.0
        %vm5059 = vcmp.ge.f32.partialorder %v5009, 0.0
        %vm5060 = vcmp.ge.f32.partialorder %v5012, 0.0
        %vm5061 = vcmp.ge.f32.partialorder %v5017, 0.0
        %vm5062 = vcmp.ge.f32.partialorder %v5020, 0.0
        %vm5063 = vcmp.ge.f32.partialorder %v5025, 0.0
        %vm5064 = vcmp.ge.f32.partialorder %v5028, 0.0
        %vm5065 = vcmp.ge.f32.partialorder %v5033, 0.0
        %vm5066 = vcmp.ge.f32.partialorder %v5036, 0.0
        %vm5067 = vcmp.ge.f32.partialorder %v5041, 0.0
        %vm5068 = vcmp.ge.f32.partialorder %v5044, 0.0
        %vm5069 = vcmp.ge.f32.partialorder %v5049, 0.0
        %vm5070 = vcmp.ge.f32.partialorder %v5052, 0.0
        %v5071 = vmul.f32 %v4993, 0.01
        %v5072 = vmul.f32 %v4996, 0.01
        %v5073 = vmul.f32 %v5001, 0.01
        %v5074 = vmul.f32 %v5004, 0.01
        %v5075 = vmul.f32 %v5009, 0.01
        %v5076 = vmul.f32 %v5012, 0.01
        %v5077 = vmul.f32 %v5017, 0.01
        %v5078 = vmul.f32 %v5020, 0.01
        %v5079 = vmul.f32 %v5025, 0.01
        %v5080 = vmul.f32 %v5028, 0.01
        %v5081 = vmul.f32 %v5033, 0.01
        %v5082 = vmul.f32 %v5036, 0.01
        %v5083 = vmul.f32 %v5041, 0.01
        %v5084 = vmul.f32 %v5044, 0.01
        %v5085 = vmul.f32 %v5049, 0.01
        %v5086 = vmul.f32 %v5052, 0.01
        %v5087 = vsel %vm5055, %v4993, %v5071
        %v5088 = vsel %vm5056, %v4996, %v5072
        %v5089 = vsel %vm5057, %v5001, %v5073
        %v5090 = vsel %vm5058, %v5004, %v5074
        %v5091 = vsel %vm5059, %v5009, %v5075
        %v5092 = vsel %vm5060, %v5012, %v5076
        %v5093 = vsel %vm5061, %v5017, %v5077
        %v5094 = vsel %vm5062, %v5020, %v5078
        %v5095 = vsel %vm5063, %v5025, %v5079
        %v5096 = vsel %vm5064, %v5028, %v5080
        %v5097 = vsel %vm5065, %v5033, %v5081
        %v5098 = vsel %vm5066, %v5036, %v5082
        %v5099 = vsel %vm5067, %v5041, %v5083
        %v5100 = vsel %vm5068, %v5044, %v5084
        %v5101 = vsel %vm5069, %v5049, %v5085
        %v5102 = vsel %vm5070, %v5052, %v5086
        %v5103 = vpack.c.bf16 %v5088, %v5087
        %v5104 = vpack.c.bf16 %v5090, %v5089
        %v5105 = vpack.c.bf16 %v5092, %v5091
        %v5106 = vpack.c.bf16 %v5094, %v5093
        %v5107 = vpack.c.bf16 %v5096, %v5095
        %v5108 = vpack.c.bf16 %v5098, %v5097
        %v5109 = vpack.c.bf16 %v5100, %v5099
        %v5110 = vpack.c.bf16 %v5102, %v5101
        %v5111 = vld [vmem:[%s53] sm:$0xf]
        %v5112 = vld [vmem:[%s53 + $0x4] sm:$0xf]
        %v5113 = vld [vmem:[%s55] sm:$0x1]
        %v5115 = vlaneseq
        %v5116 = vshrl.u32 %v5115, 7
        %v5117 = vsub.s32 0, %v5116
        %v5118 = vrot.slane %v5113, %v5117
        %v5122 = vunpack.c.l.b16 %v5111
        %v5123 = vunpack.c.l.b16 %v5112
        %v5124 = vpack.c.b16 %v5123, %v5122
        %v5127 = vsel %vm1265, %v5103, 0
        %v5130 = vsel %vm1265, %v5104, 0
        %v5133 = vsel %vm1265, %v5105, 0
        %v5136 = vsel %vm1265, %v5106, 0
        %v5139 = vsel %vm1265, %v5107, 0
        %v5142 = vsel %vm1265, %v5108, 0
        %v5145 = vsel %vm1265, %v5109, 0
        %v5148 = vsel %vm1265, %v5110, 0
        %5150 = vmatprep.subr.bf16.mxu0 0
        %5151 = vmatpush1.bf16.msra.mxu0 %v5124
        %5152 = vmatprep.subr.bf16.mxu0 0
        %5153 = vmatpush1.bf16.msra.mxu0 0
        %5154 = vmatprep.subr.bf16.mxu0 0
        %5155 = vmatpush1.bf16.msra.mxu0 0
        %5156 = vmatprep.subr.bf16.mxu0 0
        %5157 = vmatpush1.bf16.msra.mxu0 0
        %5158 = vmatprep.subr.bf16.mxu0 0
        %5159 = vmatpush1.bf16.msra.mxu0 0
        %5160 = vmatprep.subr.bf16.mxu0 0
        %5161 = vmatpush1.bf16.msra.mxu0 0
        %5162 = vmatprep.subr.bf16.mxu0 0
        %5163 = vmatpush1.bf16.msra.mxu0 0
        %5164 = vmatprep.subr.bf16.mxu0 0
        %5165 = vmatpush1.bf16.msra.mxu0 0
        %5166 = vmatprep.subr.bf16.mxu0 0
        %5167 = vmatpush1.bf16.msra.mxu0 0
        %5168 = vmatprep.subr.bf16.mxu0 0
        %5169 = vmatpush1.bf16.msra.mxu0 0
        %5170 = vmatprep.subr.bf16.mxu0 0
        %5171 = vmatpush1.bf16.msra.mxu0 0
        %5172 = vmatprep.subr.bf16.mxu0 0
        %5173 = vmatpush1.bf16.msra.mxu0 0
        %5174 = vmatprep.subr.bf16.mxu0 0
        %5175 = vmatpush1.bf16.msra.mxu0 0
        %5176 = vmatprep.subr.bf16.mxu0 0
        %5177 = vmatpush1.bf16.msra.mxu0 0
        %5178 = vmatprep.subr.bf16.mxu0 0
        %5179 = vmatpush1.bf16.msra.mxu0 0
        %5180 = vmatprep.subr.bf16.mxu0 0
        %5181 = vmatpush1.bf16.msra.mxu0 0
        %5182 = vmatprep.mubr.bf16.mxu0 0
        %5183 = vmatmul.mubr.bf16.gmra.mrb[0].mxu0 %v5127
        %v5184 = vpop.f32.mrb[0].mxu0
        %v5185 = vadd.f32 %v5118, %v5184
        %v5186 = vpop.f32.mrb[0].mxu0
        %v5187 = vpop.f32.mrb[0].mxu0
        %v5188 = vadd.f32 %v5118, %v5187
        %v5189 = vpop.f32.mrb[0].mxu0
        %5190 = vmatprep.mubr.bf16.mxu0 0
        %5191 = vmatmul.mubr.bf16.gmra.mrb[0].mxu0 %v5130
        %v5192 = vpop.f32.mrb[0].mxu0
        %v5193 = vadd.f32 %v5118, %v5192
        %v5194 = vpop.f32.mrb[0].mxu0
        %v5195 = vpop.f32.mrb[0].mxu0
        %v5196 = vadd.f32 %v5118, %v5195
        %v5197 = vpop.f32.mrb[0].mxu0
        %5198 = vmatprep.mubr.bf16.mxu0 0
        %5199 = vmatmul.mubr.bf16.gmra.mrb[0].mxu0 %v5133
        %v5200 = vpop.f32.mrb[0].mxu0
        %v5201 = vadd.f32 %v5118, %v5200
        %v5202 = vpop.f32.mrb[0].mxu0
        %v5203 = vpop.f32.mrb[0].mxu0
        %v5204 = vadd.f32 %v5118, %v5203
        %v5205 = vpop.f32.mrb[0].mxu0
        %5206 = vmatprep.mubr.bf16.mxu0 0
        %5207 = vmatmul.mubr.bf16.gmra.mrb[0].mxu0 %v5136
        %v5208 = vpop.f32.mrb[0].mxu0
        %v5209 = vadd.f32 %v5118, %v5208
        %v5210 = vpop.f32.mrb[0].mxu0
        %v5211 = vpop.f32.mrb[0].mxu0
        %v5212 = vadd.f32 %v5118, %v5211
        %v5213 = vpop.f32.mrb[0].mxu0
        %5214 = vmatprep.mubr.bf16.mxu0 0
        %5215 = vmatmul.mubr.bf16.gmra.mrb[0].mxu0 %v5139
        %v5216 = vpop.f32.mrb[0].mxu0
        %v5217 = vadd.f32 %v5118, %v5216
        %v5218 = vpop.f32.mrb[0].mxu0
        %v5219 = vpop.f32.mrb[0].mxu0
        %v5220 = vadd.f32 %v5118, %v5219
        %v5221 = vpop.f32.mrb[0].mxu0
        %5222 = vmatprep.mubr.bf16.mxu0 0
        %5223 = vmatmul.mubr.bf16.gmra.mrb[0].mxu0 %v5142
        %v5224 = vpop.f32.mrb[0].mxu0
        %v5225 = vadd.f32 %v5118, %v5224
        %v5226 = vpop.f32.mrb[0].mxu0
        %v5227 = vpop.f32.mrb[0].mxu0
        %v5228 = vadd.f32 %v5118, %v5227
        %v5229 = vpop.f32.mrb[0].mxu0
        %5230 = vmatprep.mubr.bf16.mxu0 0
        %5231 = vmatmul.mubr.bf16.gmra.mrb[0].mxu0 %v5145
        %v5232 = vpop.f32.mrb[0].mxu0
        %v5233 = vadd.f32 %v5118, %v5232
        %v5234 = vpop.f32.mrb[0].mxu0
        %v5235 = vpop.f32.mrb[0].mxu0
        %v5236 = vadd.f32 %v5118, %v5235
        %v5237 = vpop.f32.mrb[0].mxu0
        %5238 = vmatprep.mubr.bf16.mxu0 0
        %5239 = vmatmul.mubr.bf16.gmra.mrb[0].mxu0 %v5148
        %v5240 = vpop.f32.mrb[0].mxu0
        %v5241 = vadd.f32 %v5118, %v5240
        %v5242 = vpop.f32.mrb[0].mxu0
        %v5243 = vpop.f32.mrb[0].mxu0
        %v5244 = vadd.f32 %v5118, %v5243
        %v5245 = vpop.f32.mrb[0].mxu0
        %5246 = vdwg.mxu0
        %vm5247 = vcmp.ge.f32.partialorder %v5185, 0.0
        %vm5248 = vcmp.ge.f32.partialorder %v5188, 0.0
        %vm5249 = vcmp.ge.f32.partialorder %v5193, 0.0
        %vm5250 = vcmp.ge.f32.partialorder %v5196, 0.0
        %vm5251 = vcmp.ge.f32.partialorder %v5201, 0.0
        %vm5252 = vcmp.ge.f32.partialorder %v5204, 0.0
        %vm5253 = vcmp.ge.f32.partialorder %v5209, 0.0
        %vm5254 = vcmp.ge.f32.partialorder %v5212, 0.0
        %vm5255 = vcmp.ge.f32.partialorder %v5217, 0.0
        %vm5256 = vcmp.ge.f32.partialorder %v5220, 0.0
        %vm5257 = vcmp.ge.f32.partialorder %v5225, 0.0
        %vm5258 = vcmp.ge.f32.partialorder %v5228, 0.0
        %vm5259 = vcmp.ge.f32.partialorder %v5233, 0.0
        %vm5260 = vcmp.ge.f32.partialorder %v5236, 0.0
        %vm5261 = vcmp.ge.f32.partialorder %v5241, 0.0
        %vm5262 = vcmp.ge.f32.partialorder %v5244, 0.0
        %v5263 = vmul.f32 %v5185, 0.01
        %v5264 = vmul.f32 %v5188, 0.01
        %v5265 = vmul.f32 %v5193, 0.01
        %v5266 = vmul.f32 %v5196, 0.01
        %v5267 = vmul.f32 %v5201, 0.01
        %v5268 = vmul.f32 %v5204, 0.01
        %v5269 = vmul.f32 %v5209, 0.01
        %v5270 = vmul.f32 %v5212, 0.01
        %v5271 = vmul.f32 %v5217, 0.01
        %v5272 = vmul.f32 %v5220, 0.01
        %v5273 = vmul.f32 %v5225, 0.01
        %v5274 = vmul.f32 %v5228, 0.01
        %v5275 = vmul.f32 %v5233, 0.01
        %v5276 = vmul.f32 %v5236, 0.01
        %v5277 = vmul.f32 %v5241, 0.01
        %v5278 = vmul.f32 %v5244, 0.01
        %v5279 = vsel %vm5247, %v5185, %v5263
        %v5280 = vsel %vm5248, %v5188, %v5264
        %v5281 = vsel %vm5249, %v5193, %v5265
        %v5282 = vsel %vm5250, %v5196, %v5266
        %v5283 = vsel %vm5251, %v5201, %v5267
        %v5284 = vsel %vm5252, %v5204, %v5268
        %v5285 = vsel %vm5253, %v5209, %v5269
        %v5286 = vsel %vm5254, %v5212, %v5270
        %v5287 = vsel %vm5255, %v5217, %v5271
        %v5288 = vsel %vm5256, %v5220, %v5272
        %v5289 = vsel %vm5257, %v5225, %v5273
        %v5290 = vsel %vm5258, %v5228, %v5274
        %v5291 = vsel %vm5259, %v5233, %v5275
        %v5292 = vsel %vm5260, %v5236, %v5276
        %v5293 = vsel %vm5261, %v5241, %v5277
        %v5294 = vsel %vm5262, %v5244, %v5278
        %v5295 = vadd.f32 %v5279, %v4470
        %v5296 = vadd.f32 %v5280, %v4471
        %v5297 = vadd.f32 %v5281, %v4472
        %v5298 = vadd.f32 %v5282, %v4473
        %v5299 = vadd.f32 %v5283, %v4474
        %v5300 = vadd.f32 %v5284, %v4475
        %v5301 = vadd.f32 %v5285, %v4476
        %v5302 = vadd.f32 %v5286, %v4477
        %v5303 = vadd.f32 %v5287, %v4478
        %v5304 = vadd.f32 %v5288, %v4479
        %v5305 = vadd.f32 %v5289, %v4480
        %v5306 = vadd.f32 %v5290, %v4481
        %v5307 = vadd.f32 %v5291, %v4482
        %v5308 = vadd.f32 %v5292, %v4483
        %v5309 = vadd.f32 %v5293, %v4484
        %v5310 = vadd.f32 %v5294, %v4485
        %5311 = vst.msk [vmem:[%s1175] sm:$0xff] %vm1265, %v5295
        %5312 = vst.msk [vmem:[%s1175 + $0x8] sm:$0xff] %vm1265, %v5296
        %5313 = vst.msk [vmem:[%s1175 + $0x10] sm:$0xff] %vm1265, %v5297
        %5314 = vst.msk [vmem:[%s1175 + $0x18] sm:$0xff] %vm1265, %v5298
        %5315 = vst.msk [vmem:[%s1175 + $0x20] sm:$0xff] %vm1265, %v5299
        %5316 = vst.msk [vmem:[%s1175 + $0x28] sm:$0xff] %vm1265, %v5300
        %5317 = vst.msk [vmem:[%s1175 + $0x30] sm:$0xff] %vm1265, %v5301
        %5318 = vst.msk [vmem:[%s1175 + $0x38] sm:$0xff] %vm1265, %v5302
        %5319 = vst.msk [vmem:[%s1175 + $0x40] sm:$0xff] %vm1265, %v5303
        %5320 = vst.msk [vmem:[%s1175 + $0x48] sm:$0xff] %vm1265, %v5304
        %5321 = vst.msk [vmem:[%s1175 + $0x50] sm:$0xff] %vm1265, %v5305
        %5322 = vst.msk [vmem:[%s1175 + $0x58] sm:$0xff] %vm1265, %v5306
        %5323 = vst.msk [vmem:[%s1175 + $0x60] sm:$0xff] %vm1265, %v5307
        %5324 = vst.msk [vmem:[%s1175 + $0x68] sm:$0xff] %vm1265, %v5308
        %5325 = vst.msk [vmem:[%s1175 + $0x70] sm:$0xff] %vm1265, %v5309
        %5326 = vst.msk [vmem:[%s1175 + $0x78] sm:$0xff] %vm1265, %v5310
        %s5327 = sand.u32 %s716, 1
        %s5328 = scalar_lea.sflag [#allocation4], %s5327
        %s5329 = sand.u32 %s716, 1
        %s5330 = smul.addr %s5329, 8
        %s5331 = scalar_lea.vmem [#allocation26], %s5330
        %s5332 = sand.u32 %s744, 1
        %s5333 = scalar_lea.sflag [#allocation28], %s5332
        %s5334 = sand.u32 %s744, 1
        %s5335 = smul.addr %s5334, 128
        %s5336 = scalar_lea.vmem [#allocation27], %s5335
        // Predicated region
        $region193: #{tpu_custom_call.1} parent=131 // pred_check
          %p5337 = pneg %p726
        $region194: #{tpu_custom_call.1} parent=131 // pred_check_branch
          %5339 = sbr.rel (%p5337) target = $region196
        $region195: #{tpu_custom_call.1} parent=131 // pred_region
          %s5341 = ssub.s32 128, 128
          %5342 = vsyncadd %s5328, %s5341
          %s5343 = smul.addr %s93, 2
          %s5344 = sadd.s32 %s94, %s5343
          %s5345 = smul.addr %s5344, 128
          %s5346 = scalar_lea.hbm %s57, %s5345
          %s5348 = sshll.u32 %s5331, 4
          %s5349 = int_to_ptr.vmem [resolvable:$true] %s5348
          %5351 = dma.vmem_to_hbm [thread:$0]  %s5349, 128, %s5346, %s5328
        $region196: #{tpu_custom_call.1} parent=131 // pred_fallthru
          _
        // Predicated region
        $region197: #{tpu_custom_call.1} parent=131 // pred_check
          %p5352 = pneg %p754
        $region198: #{tpu_custom_call.1} parent=131 // pred_check_branch
          %5354 = sbr.rel (%p5352) target = $region200
        $region199: #{tpu_custom_call.1} parent=131 // pred_region
          %s5355 = smul.u32 8, %s94
          %s5357 = ssub.s32 2048, 2048
          %5358 = vsyncadd %s5333, %s5357
          %s5359 = smul.addr %s5355, 2
          %s5360 = smul.addr %s93, 32
          %s5361 = sadd.s32 %s5359, %s5360
          %s5362 = smul.addr %s5361, 128
          %s5363 = scalar_lea.hbm %s59, %s5362
          %s5364 = sshll.u32 %s5336, 4
          %s5365 = int_to_ptr.vmem [resolvable:$true] %s5364
          %5370 = dma.vmem_to_hbm [thread:$0]  %s5365, 2048, %s5363, %s5333, 128, 128, 8
        $region200: #{tpu_custom_call.1} parent=131 // pred_fallthru
          _
      $region132: #{tpu_custom_call.1} parent=5 // pred_fallthru
        _
      %p5371 = scmp.le.s32.totalorder 2, %s84
      // Predicated region
      $region201: #{tpu_custom_call.1} parent=5 // pred_check
        %p5372 = pneg %p5371
      $region202: #{tpu_custom_call.1} parent=5 // pred_check_branch
        %5374 = sbr.rel (%p5372) target = $region204
      $region203: #{tpu_custom_call.1} parent=5 // pred_region
        %s5375 = ssub.s32 %s84, 2
        // Predicated region
        $region205: #{tpu_custom_call.1} parent=203 // pred_check
          %p5376 = pneg %p732
        $region206: #{tpu_custom_call.1} parent=203 // pred_check_branch
          %5378 = sbr.rel (%p5376) target = $region208
        $region207: #{tpu_custom_call.1} parent=203 // pred_region
          %s5379 = sand.u32 %s717, 1
          %s5380 = scalar_lea.sflag [#allocation4], %s5379
          %s5381 = sand.u32 %s717, 1
          %s5382 = smul.addr %s5381, 8
          %s5383 = scalar_lea.vmem [#allocation26], %s5382
          %5384 = dma.done %s5380, 128
        $region208: #{tpu_custom_call.1} parent=203 // pred_fallthru
          _
        // Predicated region
        $region209: #{tpu_custom_call.1} parent=203 // pred_check
          %p5385 = pneg %p760
        $region210: #{tpu_custom_call.1} parent=203 // pred_check_branch
          %5387 = sbr.rel (%p5385) target = $region212
        $region211: #{tpu_custom_call.1} parent=203 // pred_region
          %s5388 = sand.u32 %s745, 1
          %s5389 = scalar_lea.sflag [#allocation28], %s5388
          %s5390 = sand.u32 %s745, 1
          %s5391 = smul.addr %s5390, 128
          %s5392 = scalar_lea.vmem [#allocation27], %s5391
          %5393 = dma.done %s5389, 2048
        $region212: #{tpu_custom_call.1} parent=203 // pred_fallthru
          _
      $region204: #{tpu_custom_call.1} parent=5 // pred_fallthru
        _
    $region6: #{tpu_custom_call.1} parent=1 // loop_footer
      %s88 = sadd.s32 1, %s84
    $region7: #{tpu_custom_call.1} parent=1 // loop_footer_branch
      %83 = sbr.rel target = $region3
    $region8: #{tpu_custom_call.1} parent=1 // loop_exit
      _
    %5394 = vsyncpa [#allocation3], 1
    %s5395 = scalar_lea.sflag [#allocation3], 1
    %5396 = vsyncpa %s5395, 1
    %5397 = vsyncpa [#allocation6], 1
    %s5398 = scalar_lea.sflag [#allocation6], 1
    %5399 = vsyncpa %s5398, 1
    %5400 = vsyncpa [#allocation9], 1
    %5401 = vsyncpa [#allocation12], 1
    %5402 = vsyncpa [#allocation15], 1
    %5403 = vsyncpa [#allocation18], 1
    %5404 = vsyncpa [#allocation21], 1
    %5405 = vsyncpa [#allocation24], 1
    %5406 = vsyncpa [#allocation4], 1
    %s5407 = scalar_lea.sflag [#allocation4], 1
    %5408 = vsyncpa %s5407, 1
    %5409 = vsyncpa [#allocation28], 1
    %s5410 = scalar_lea.sflag [#allocation28], 1
    %5411 = vsyncpa %s5410, 1

</llo_original>
